<compile_context>
chip_gen: v7x
topology: tpu7x:2x2x1
jax: 0.10.0
libtpu: 0.0.40
codegen_flags: <defaults>
</compile_context>

<pallas_src>
import math
import functools
import numpy as np
import jax
import jax.numpy as jnp
from jax.experimental import pallas as pl
from jax.experimental.pallas import tpu as pltpu

KERNEL_SIZES = (3, 7, 15, 31)


# --------------------------------------------------------------------------
# math helpers (shared by the Pallas kernel and the pure-JAX reference)
# --------------------------------------------------------------------------
def _erf(x, recip):
    # Abramowitz & Stegun 7.1.26, |err| < 1.5e-7; only mul/add/exp + one reciprocal.
    a1, a2, a3, a4, a5 = 0.254829592, -0.284496736, 1.421413741, -1.453152027, 1.061405429
    p = 0.3275911
    ax = jnp.abs(x)
    t = recip(1.0 + p * ax)
    poly = ((((a5 * t + a4) * t + a3) * t + a2) * t + a1) * t
    y = 1.0 - poly * jnp.exp(-ax * ax)
    return jnp.where(x >= 0, y, -y)


def _gelu(x, recip=None):
    # exact (erf-based) GELU, matching torch.nn.functional.gelu default
    if recip is None:
        recip = lambda v: 1.0 / v
    return 0.5 * x * (1.0 + _erf(x * (1.0 / math.sqrt(2.0)), recip))


def _approx_recip(v):
    return pl.reciprocal(v, approx=True)


def _layer_norm(x, g, b, eps=1e-5):
    mu = jnp.mean(x, axis=-1, keepdims=True)
    var = jnp.mean((x - mu) ** 2, axis=-1, keepdims=True)
    return (x - mu) * jax.lax.rsqrt(var + eps) * g + b


def _dot_nt(a, b):
    """a @ b.T without materializing the transpose: (M, K) x (N, K) -> (M, N)."""
    return jax.lax.dot_general(a, b, (((1,), (1,)), ((), ())),
                               preferred_element_type=jnp.float32)


# --------------------------------------------------------------------------
# fused Pallas kernel: embed + all encoder layers + regression head (one grid step)
# --------------------------------------------------------------------------
def rr_fused_kernel(patches_ref, wemb_ref, pos_ref, bemb_ref,
                    hm_ref, bmask_ref, onesblk_ref,
                    wqkv_ref, bqkv_ref, wo_ref, w1_ref, b1_ref, w2_ref, lvec_ref,
                    wr1_ref, br1_ref, wr2t_ref, br2_ref,
                    out_ref, *, batch, seq, hidden, num_heads, num_layers):
    B, T, H = batch, seq, hidden
    bf16 = jnp.bfloat16
    f32 = jnp.float32

    # ---- embedding: folded conv-bank + BN as one im2col matmul, + positional enc ----
    feat = jnp.dot(patches_ref[...], wemb_ref[...], preferred_element_type=f32)
    pos = jnp.concatenate([pos_ref[...]] * B, axis=0)                  # (B*T, H)
    x = feat + pos + bemb_ref[...]

    # ---- attention constants (hoisted out of the layer loop) ----
    hm = hm_ref[...]                       # (heads*B*T, H)  per-head lane mask, bf16
    bmask = bmask_ref[...]                 # (B*T, heads*B*T) same-batch 0/1 mask, f32
    ones_blk = onesblk_ref[...]            # (heads*B*T, heads*B*T) block-diag ones, f32
    addmask = (bmask - 1.0) * 1e9          # 0 for same batch, -1e9 across batches

    for i in range(num_layers):            # static unroll; all weights VMEM-resident
        lv = lvec_ref[i]                   # (6, H): ln1 g/b, bo, ln2 g/b, b2

        # -- self-attention (pre-LN); batch flattened into the matmul M dimension --
        h16 = _layer_norm(x, lv[0:1], lv[1:2]).astype(bf16)
        qkv = jnp.dot(h16, wqkv_ref[i], preferred_element_type=f32) + bqkv_ref[i]
        q16 = qkv[:, :H].astype(bf16)              # 1/sqrt(hd) folded into the Q slice
        k16 = qkv[:, H:2 * H].astype(bf16)
        v16 = qkv[:, 2 * H:].astype(bf16)

        # lane-blocked K / V: one T-row block per (head, batch), head lanes masked
        km = jnp.concatenate([k16] * num_heads, axis=0) * hm           # (heads*B*T, H)
        vm = jnp.concatenate([v16] * num_heads, axis=0) * hm

        s = _dot_nt(q16, km) + addmask             # (B*T, heads*B*T); cross-batch -> -1e9
        e = jnp.exp(s - jnp.max(s, axis=-1, keepdims=True))
        # per-T-block softmax sums broadcast back to every column of the block (f32)
        denom = jnp.dot(e, ones_blk, preferred_element_type=f32)
        prob = (e * bmask) * pl.reciprocal(denom + 1e-30, approx=True)
        ctx = jnp.dot(prob.astype(bf16), vm, preferred_element_type=f32)   # (B*T, H)
        x = x + jnp.dot(ctx.astype(bf16), wo_ref[i], preferred_element_type=f32) + lv[2:3]

        # -- feed-forward (pre-LN) with exact-erf GELU --
        h2 = _layer_norm(x, lv[3:4], lv[4:5]).astype(bf16)
        f = jnp.dot(h2, w1_ref[i], preferred_element_type=f32) + b1_ref[i]
        f = _gelu(f, _approx_recip)
        x = x + jnp.dot(f.astype(bf16), w2_ref[i], preferred_element_type=f32) + lv[5:6]

    # ---- mean over time (f32) + regression head ----
    xm = jnp.concatenate(
        [jnp.mean(x[b * T:(b + 1) * T], axis=0, keepdims=True) for b in range(B)], axis=0)
    r = jnp.dot(xm.astype(bf16), wr1_ref[...], preferred_element_type=f32) + br1_ref[...]
    r = _gelu(r, _approx_recip)
    out_ref[...] = jnp.sum(r * wr2t_ref[...], axis=-1, keepdims=True) + br2_ref[...]


# --------------------------------------------------------------------------
# glue: im2col patches, parameter setup, wrapper
# --------------------------------------------------------------------------
def build_patches(xs, T, Kpad):
    # xs: (B, T) raw signal -> (B, T, Kpad) im2col patches for all conv kernels
    cols = []
    for k in KERNEL_SIZES:
        p = k // 2
        xp = jnp.pad(xs, ((0, 0), (p, p)))
        idx = np.arange(T)[:, None] + np.arange(k)[None, :]   # (T, k)
        cols.append(xp[:, idx])                               # (B, T, k)
    P = jnp.concatenate(cols, axis=-1)
    pad = Kpad - P.shape[-1]
    if pad:
        P = jnp.pad(P, ((0, 0), (0, 0), (0, pad)))
    return P


def init_params(key, T, H, num_layers, num_heads):
    keys = iter(jax.random.split(key, 20 + 16 * num_layers))

    def nrm(shape, std):
        return jax.random.normal(next(keys), shape, jnp.float32) * std

    Hq = H // 4
    hd = H // num_heads

    # Conv1d bank -> one im2col matmul weight; eval-mode BatchNorm1d folded in.
    conv_w = [nrm((Hq, k), 0.3 / math.sqrt(k)) for k in KERNEL_SIZES]   # (out_ch, k)
    conv_b = [nrm((Hq,), 0.02) for _ in KERNEL_SIZES]
    bn_gamma = 1.0 + nrm((H,), 0.1)
    bn_beta = nrm((H,), 0.1)
    bn_mean = np.zeros((H,), np.float32)
    bn_var = np.ones((H,), np.float32)
    eps = 1e-5

    Ksum = sum(KERNEL_SIZES)
    Kpad = int(math.ceil(Ksum / 8) * 8)
    Wc = np.zeros((Kpad, H), np.float32)
    bc = np.zeros((H,), np.float32)
    off = 0
    for g, k in enumerate(KERNEL_SIZES):
        Wc[off:off + k, g * Hq:(g + 1) * Hq] = np.asarray(conv_w[g]).T
        bc[g * Hq:(g + 1) * Hq] = np.asarray(conv_b[g])
        off += k
    s = np.asarray(bn_gamma) / np.sqrt(bn_var + eps)
    w_embed = jnp.asarray(Wc * s[None, :]).astype(jnp.bfloat16)
    b_embed = jnp.asarray(((bc - bn_mean) * s + np.asarray(bn_beta))[None, :])

    # sinusoidal positional encoding (same formula as the PyTorch module)
    position = np.arange(T, dtype=np.float32)[:, None]
    div_term = np.exp(np.arange(0, H, 2, dtype=np.float32) * (-math.log(10000.0) / H))
    pe = np.zeros((T, H), np.float32)
    pe[:, 0::2] = np.sin(position * div_term)
    pe[:, 1::2] = np.cos(position * div_term)

    scale = 1.0 / math.sqrt(hd)   # attention scale folded into the Q slice of wqkv/bqkv
    wqkv, bqkv, wo, w1, b1, w2, lvec = [], [], [], [], [], [], []
    for _ in range(num_layers):
        ln1g, ln1b = 1.0 + nrm((H,), 0.05), nrm((H,), 0.05)
        wq, wk, wv = nrm((H, H), 0.05) * scale, nrm((H, H), 0.05), nrm((H, H), 0.05)
        bq, bk, bv = nrm((H,), 0.02) * scale, nrm((H,), 0.02), nrm((H,), 0.02)
        wo_i, bo_i = nrm((H, H), 0.05), nrm((H,), 0.02)
        ln2g, ln2b = 1.0 + nrm((H,), 0.05), nrm((H,), 0.05)
        w1_i, b1_i = nrm((H, 4 * H), 0.05), nrm((4 * H,), 0.02)
        w2_i, b2_i = nrm((4 * H, H), 0.05), nrm((H,), 0.02)
        wqkv.append(jnp.concatenate([wq, wk, wv], axis=1))          # (H, 3H)
        bqkv.append(jnp.concatenate([bq, bk, bv])[None, :])         # (1, 3H)
        wo.append(wo_i)
        w1.append(w1_i)
        b1.append(b1_i[None, :])                                    # (1, 4H)
        w2.append(w2_i)
        lvec.append(jnp.stack([ln1g, ln1b, bo_i, ln2g, ln2b, b2_i], axis=0))   # (6, H)

    stk = lambda xs, dt=jnp.float32: jnp.stack(xs).astype(dt)
    return dict(
        w_embed=w_embed, b_embed=b_embed, pos=jnp.asarray(pe),
        wqkv=stk(wqkv, jnp.bfloat16), bqkv=stk(bqkv),
        wo=stk(wo, jnp.bfloat16),
        w1=stk(w1, jnp.bfloat16), b1=stk(b1), w2=stk(w2, jnp.bfloat16),
        lvec=stk(lvec),
        wr1=nrm((H, H // 2), 0.1).astype(jnp.bfloat16), br1=nrm((1, H // 2), 0.02),
        wr2t=nrm((1, H // 2), 0.1), br2=nrm((1, 1), 0.02),
    )


def rr_transformer_forward(x, params, num_heads):
    # x: (B, 1, T) float32   ->   (B,) float32
    # TODO(synk): dropout is identity and BatchNorm uses running stats (inference
    # semantics); training-mode stochastic dropout / batch statistics not implemented.
    B, _, T = x.shape
    Kpad, H = params["w_embed"].shape
    L = params["wqkv"].shape[0]
    BT = B * T
    W = num_heads * BT          # blocked attention score width (= 128 at the test config)
    hd = H // num_heads

    xs = x[:, 0, :]
    patches = build_patches(xs, T, Kpad).reshape(BT, Kpad).astype(jnp.bfloat16)

    # per-head lane mask for the blocked K/V: row h*BT+j selects head h's H/heads lanes
    hm = np.zeros((W, H), np.float32)
    for h in range(num_heads):
        hm[h * BT:(h + 1) * BT, h * hd:(h + 1) * hd] = 1.0
    hm = jnp.asarray(hm, jnp.bfloat16)

    # query row r=(b,t) may attend to score column c=(h,b',t') iff b == b'
    rowb = np.repeat(np.arange(B), T)                         # (BT,)
    colb = np.tile(np.repeat(np.arange(B), T), num_heads)     # (W,)
    bmask = jnp.asarray((rowb[:, None] == colb[None, :]).astype(np.float32))

    # block-diagonal ones: broadcasts each T-wide softmax block's sum to its own columns
    cblk = np.arange(W) // T
    ones_blk = jnp.asarray((cblk[:, None] == cblk[None, :]).astype(np.float32))

    def const_spec(shape):
        nd = len(shape)
        return pl.BlockSpec(shape, lambda i, _n=nd: (0,) * _n)

    grid_spec = pltpu.PrefetchScalarGridSpec(
        num_scalar_prefetch=0,
        grid=(1,),                      # single step: all weights resident, layers unrolled
        in_specs=[
            const_spec((BT, Kpad)), const_spec((Kpad, H)),            # patches, conv+BN weight
            const_spec((T, H)), const_spec((1, H)),                   # pos enc, folded bias
            const_spec((W, H)), const_spec((BT, W)), const_spec((W, W)),
            const_spec((L, H, 3 * H)), const_spec((L, 1, 3 * H)),     # fused QKV
            const_spec((L, H, H)),                                    # wo
            const_spec((L, H, 4 * H)), const_spec((L, 1, 4 * H)),     # w1, b1
            const_spec((L, 4 * H, H)),                                # w2
            const_spec((L, 6, H)),                                    # packed per-layer vectors
            const_spec((H, H // 2)), const_spec((1, H // 2)),         # head linear 1
            const_spec((1, H // 2)), const_spec((1, 1)),              # head linear 2
        ],
        out_specs=pl.BlockSpec((B, 1), lambda i: (0, 0)),
    )

    out = pl.pallas_call(
        functools.partial(rr_fused_kernel, batch=B, seq=T, hidden=H,
                          num_heads=num_heads, num_layers=L),
        out_shape=jax.ShapeDtypeStruct((B, 1), jnp.float32),
        grid_spec=grid_spec,
        compiler_params=pltpu.CompilerParams(
            dimension_semantics=("arbitrary",)),
    )(patches, params["w_embed"], params["pos"], params["b_embed"],
      hm, bmask, ones_blk,
      params["wqkv"], params["bqkv"], params["wo"],
      params["w1"], params["b1"], params["w2"], params["lvec"],
      params["wr1"], params["br1"], params["wr2t"], params["br2"])
    return out[:, 0]


# --------------------------------------------------------------------------
# pure-JAX reference (same math on the same bf16-valued weights, f32 compute)
# --------------------------------------------------------------------------
def reference_forward(x, params, num_heads):
    B, _, T = x.shape
    w_embed = params["w_embed"].astype(jnp.float32)
    Kpad, H = w_embed.shape
    hd = H // num_heads
    f32 = lambda a: a.astype(jnp.float32)

    xs = x[:, 0, :]
    P = build_patches(xs, T, Kpad)
    h = jnp.einsum("btk,kh->bth", P, w_embed) + params["b_embed"] + params["pos"]
    L = params["wqkv"].shape[0]
    for i in range(L):
        lv = params["lvec"][i]
        hn = _layer_norm(h, lv[0], lv[1])
        qkv = hn @ f32(params["wqkv"][i]) + params["bqkv"][i]       # scale folded in Q
        q, k, v = qkv[..., :H], qkv[..., H:2 * H], qkv[..., 2 * H:]
        split = lambda a: a.reshape(B, T, num_heads, hd).transpose(0, 2, 1, 3)
        qh, kh, vh = split(q), split(k), split(v)
        s = jnp.einsum("bhtd,bhsd->bhts", qh, kh)
        p = jax.nn.softmax(s, axis=-1)
        ao = jnp.einsum("bhts,bhsd->bhtd", p, vh).transpose(0, 2, 1, 3).reshape(B, T, H)
        h = h + ao @ f32(params["wo"][i]) + lv[2]
        h2 = _layer_norm(h, lv[3], lv[4])
        f = _gelu(h2 @ f32(params["w1"][i]) + params["b1"][i]) @ f32(params["w2"][i]) + lv[5]
        h = h + f
    hm_ = jnp.mean(h, axis=1)
    r = _gelu(hm_ @ f32(params["wr1"]) + params["br1"])
    return jnp.sum(r * params["wr2t"], axis=-1) + params["br2"][0, 0]


# --------------------------------------------------------------------------
if __name__ == "__main__":
    B, T, H = 2, 16, 32           # input_size=16, hidden_size=32
    NUM_LAYERS, NUM_HEADS = 2, 4  # small but structurally faithful

    key = jax.random.PRNGKey(0)
    kx, kp = jax.random.split(key)
    x = jax.random.normal(kx, (B, 1, T), jnp.float32)
    params = init_params(kp, T, H, NUM_LAYERS, NUM_HEADS)

    fwd = jax.jit(functools.partial(rr_transformer_forward, num_heads=NUM_HEADS))
    out = jax.block_until_ready(fwd(x, params))

    ref = jax.block_until_ready(reference_forward(x, params, NUM_HEADS))

    assert out.shape == (B,), out.shape
    assert np.all(np.isfinite(np.asarray(out)))
    np.testing.assert_allclose(np.asarray(out), np.asarray(ref), rtol=2e-2, atol=2e-2)
    print("KERNEL_OK")
</pallas_src>

<mosaic_0001>
module attributes {stable_mosaic.version = 11 : i64} {
  func.func @rr_fused_kernel(%arg0: i32, %arg1: memref<32x56xbf16, #tpu.memory_space<vmem>>, %arg2: memref<56x32xbf16, #tpu.memory_space<vmem>>, %arg3: memref<16x32xf32, #tpu.memory_space<vmem>>, %arg4: memref<1x32xf32, #tpu.memory_space<vmem>>, %arg5: memref<128x32xbf16, #tpu.memory_space<vmem>>, %arg6: memref<32x128xf32, #tpu.memory_space<vmem>>, %arg7: memref<128x128xf32, #tpu.memory_space<vmem>>, %arg8: memref<2x32x96xbf16, #tpu.memory_space<vmem>>, %arg9: memref<2x1x96xf32, #tpu.memory_space<vmem>>, %arg10: memref<2x32x32xbf16, #tpu.memory_space<vmem>>, %arg11: memref<2x32x128xbf16, #tpu.memory_space<vmem>>, %arg12: memref<2x1x128xf32, #tpu.memory_space<vmem>>, %arg13: memref<2x128x32xbf16, #tpu.memory_space<vmem>>, %arg14: memref<2x6x32xf32, #tpu.memory_space<vmem>>, %arg15: memref<32x16xbf16, #tpu.memory_space<vmem>>, %arg16: memref<1x16xf32, #tpu.memory_space<vmem>>, %arg17: memref<1x16xf32, #tpu.memory_space<vmem>>, %arg18: memref<1x1xf32, #tpu.memory_space<vmem>>, %arg19: memref<2x1xf32, #tpu.memory_space<vmem>>) attributes {dimension_semantics = [#tpu.dimension_semantics<arbitrary>], iteration_bounds = array<i64: 1>, scalar_prefetch = 0 : i64, scratch_operands = 0 : i64, tpu.core_type = #tpu.core_type<tc>, window_params = [{pipeline_mode = #tpu.pipeline_mode<synchronous>, transform_indices = @transform_0, window_bounds = array<i64: 32, 56>}, {pipeline_mode = #tpu.pipeline_mode<synchronous>, transform_indices = @transform_1, window_bounds = array<i64: 56, 32>}, {pipeline_mode = #tpu.pipeline_mode<synchronous>, transform_indices = @transform_2, window_bounds = array<i64: 16, 32>}, {pipeline_mode = #tpu.pipeline_mode<synchronous>, transform_indices = @transform_3, window_bounds = array<i64: 1, 32>}, {pipeline_mode = #tpu.pipeline_mode<synchronous>, transform_indices = @transform_4, window_bounds = array<i64: 128, 32>}, {pipeline_mode = #tpu.pipeline_mode<synchronous>, transform_indices = @transform_5, window_bounds = array<i64: 32, 128>}, {pipeline_mode = #tpu.pipeline_mode<synchronous>, transform_indices = @transform_6, window_bounds = array<i64: 128, 128>}, {pipeline_mode = #tpu.pipeline_mode<synchronous>, transform_indices = @transform_7, window_bounds = array<i64: 2, 32, 96>}, {pipeline_mode = #tpu.pipeline_mode<synchronous>, transform_indices = @transform_8, window_bounds = array<i64: 2, 1, 96>}, {pipeline_mode = #tpu.pipeline_mode<synchronous>, transform_indices = @transform_9, window_bounds = array<i64: 2, 32, 32>}, {pipeline_mode = #tpu.pipeline_mode<synchronous>, transform_indices = @transform_10, window_bounds = array<i64: 2, 32, 128>}, {pipeline_mode = #tpu.pipeline_mode<synchronous>, transform_indices = @transform_11, window_bounds = array<i64: 2, 1, 128>}, {pipeline_mode = #tpu.pipeline_mode<synchronous>, transform_indices = @transform_12, window_bounds = array<i64: 2, 128, 32>}, {pipeline_mode = #tpu.pipeline_mode<synchronous>, transform_indices = @transform_13, window_bounds = array<i64: 2, 6, 32>}, {pipeline_mode = #tpu.pipeline_mode<synchronous>, transform_indices = @transform_14, window_bounds = array<i64: 32, 16>}, {pipeline_mode = #tpu.pipeline_mode<synchronous>, transform_indices = @transform_15, window_bounds = array<i64: 1, 16>}, {pipeline_mode = #tpu.pipeline_mode<synchronous>, transform_indices = @transform_16, window_bounds = array<i64: 1, 16>}, {pipeline_mode = #tpu.pipeline_mode<synchronous>, transform_indices = @transform_17, window_bounds = array<i64: 1, 1>}, {pipeline_mode = #tpu.pipeline_mode<synchronous>, transform_indices = @transform_18, window_bounds = array<i64: 2, 1>}]} {
    %c0 = arith.constant 0 : index
    %c0_0 = arith.constant 0 : index
    %0 = vector.load %arg1[%c0, %c0_0] : memref<32x56xbf16, #tpu.memory_space<vmem>>, vector<32x56xbf16>
    %c0_1 = arith.constant 0 : index
    %c0_2 = arith.constant 0 : index
    %1 = vector.load %arg2[%c0_1, %c0_2] : memref<56x32xbf16, #tpu.memory_space<vmem>>, vector<56x32xbf16>
    %cst = arith.constant dense<0.000000e+00> : vector<32x32xf32>
    %2 = tpu.matmul %0, %1, %cst {dimension_numbers = #tpu.dot_dimension_numbers<[1], [0], [0], [1], [0, 0, 1, 1], [], []>} : vector<32x56xbf16>, vector<56x32xbf16>, vector<32x32xf32> -> vector<32x32xf32>
    %c0_3 = arith.constant 0 : index
    %c0_4 = arith.constant 0 : index
    %3 = vector.load %arg3[%c0_3, %c0_4] : memref<16x32xf32, #tpu.memory_space<vmem>>, vector<16x32xf32>
    %4 = tpu.concatenate %3, %3 in 0 : vector<16x32xf32>, vector<16x32xf32> -> vector<32x32xf32>
    %5 = arith.addf %2, %4 : vector<32x32xf32>
    %c0_5 = arith.constant 0 : index
    %c0_6 = arith.constant 0 : index
    %6 = vector.load %arg4[%c0_5, %c0_6] : memref<1x32xf32, #tpu.memory_space<vmem>>, vector<1x32xf32>
    %7 = vector.broadcast %6 : vector<1x32xf32> to vector<32x32xf32>
    %8 = arith.addf %5, %7 : vector<32x32xf32>
    %c0_7 = arith.constant 0 : index
    %c0_8 = arith.constant 0 : index
    %9 = vector.load %arg5[%c0_7, %c0_8] : memref<128x32xbf16, #tpu.memory_space<vmem>>, vector<128x32xbf16>
    %c0_9 = arith.constant 0 : index
    %c0_10 = arith.constant 0 : index
    %10 = vector.load %arg6[%c0_9, %c0_10] : memref<32x128xf32, #tpu.memory_space<vmem>>, vector<32x128xf32>
    %c0_11 = arith.constant 0 : index
    %c0_12 = arith.constant 0 : index
    %11 = vector.load %arg7[%c0_11, %c0_12] : memref<128x128xf32, #tpu.memory_space<vmem>>, vector<128x128xf32>
    %cst_13 = arith.constant 1.000000e+00 : f32
    %12 = vector.broadcast %cst_13 : f32 to vector<32x128xf32>
    %13 = arith.subf %10, %12 : vector<32x128xf32>
    %cst_14 = arith.constant 1.000000e+09 : f32
    %14 = vector.broadcast %cst_14 : f32 to vector<32x128xf32>
    %15 = arith.mulf %13, %14 : vector<32x128xf32>
    %c0_15 = arith.constant 0 : index
    %c0_16 = arith.constant 0 : index
    %c0_17 = arith.constant 0 : index
    %16 = vector.load %arg14[%c0_15, %c0_16, %c0_17] : memref<2x6x32xf32, #tpu.memory_space<vmem>>, vector<1x6x32xf32>
    %17 = vector.shape_cast %16 : vector<1x6x32xf32> to vector<6x32xf32>
    %18 = vector.extract_strided_slice %17 {offsets = [0, 0], sizes = [1, 32], strides = [1, 1]} : vector<6x32xf32> to vector<1x32xf32>
    %19 = vector.extract_strided_slice %17 {offsets = [1, 0], sizes = [1, 32], strides = [1, 1]} : vector<6x32xf32> to vector<1x32xf32>
    %cst_18 = arith.constant dense<0.000000e+00> : vector<32xf32>
    %20 = vector.multi_reduction <add>, %8, %cst_18 [1] : vector<32x32xf32> to vector<32xf32>
    %21 = vector.shape_cast %20 : vector<32xf32> to vector<32x1xf32>
    %cst_19 = arith.constant 3.200000e+01 : f32
    %22 = vector.broadcast %cst_19 : f32 to vector<32x1xf32>
    %23 = arith.divf %21, %22 : vector<32x1xf32>
    %24 = vector.broadcast %23 : vector<32x1xf32> to vector<32x32xf32>
    %25 = arith.subf %8, %24 : vector<32x32xf32>
    %26 = arith.mulf %25, %25 : vector<32x32xf32>
    %cst_20 = arith.constant dense<0.000000e+00> : vector<32xf32>
    %27 = vector.multi_reduction <add>, %26, %cst_20 [1] : vector<32x32xf32> to vector<32xf32>
    %28 = vector.shape_cast %27 : vector<32xf32> to vector<32x1xf32>
    %cst_21 = arith.constant 3.200000e+01 : f32
    %29 = vector.broadcast %cst_21 : f32 to vector<32x1xf32>
    %30 = arith.divf %28, %29 : vector<32x1xf32>
    %31 = vector.broadcast %23 : vector<32x1xf32> to vector<32x32xf32>
    %32 = arith.subf %8, %31 : vector<32x32xf32>
    %cst_22 = arith.constant 9.99999974E-6 : f32
    %33 = vector.broadcast %cst_22 : f32 to vector<32x1xf32>
    %34 = arith.addf %30, %33 : vector<32x1xf32>
    %35 = math.rsqrt %34 : vector<32x1xf32>
    %36 = vector.broadcast %35 : vector<32x1xf32> to vector<32x32xf32>
    %37 = arith.mulf %32, %36 : vector<32x32xf32>
    %38 = vector.broadcast %18 : vector<1x32xf32> to vector<32x32xf32>
    %39 = arith.mulf %37, %38 : vector<32x32xf32>
    %40 = vector.broadcast %19 : vector<1x32xf32> to vector<32x32xf32>
    %41 = arith.addf %39, %40 : vector<32x32xf32>
    %42 = arith.truncf %41 : vector<32x32xf32> to vector<32x32xbf16>
    %c0_23 = arith.constant 0 : index
    %c0_24 = arith.constant 0 : index
    %c0_25 = arith.constant 0 : index
    %43 = vector.load %arg8[%c0_23, %c0_24, %c0_25] : memref<2x32x96xbf16, #tpu.memory_space<vmem>>, vector<1x32x96xbf16>
    %44 = vector.shape_cast %43 : vector<1x32x96xbf16> to vector<32x96xbf16>
    %cst_26 = arith.constant dense<0.000000e+00> : vector<32x96xf32>
    %45 = tpu.matmul %42, %44, %cst_26 {dimension_numbers = #tpu.dot_dimension_numbers<[1], [0], [0], [1], [0, 0, 1, 1], [], []>} : vector<32x32xbf16>, vector<32x96xbf16>, vector<32x96xf32> -> vector<32x96xf32>
    %c0_27 = arith.constant 0 : index
    %c0_28 = arith.constant 0 : index
    %c0_29 = arith.constant 0 : index
    %46 = vector.load %arg9[%c0_27, %c0_28, %c0_29] : memref<2x1x96xf32, #tpu.memory_space<vmem>>, vector<1x1x96xf32>
    %47 = vector.shape_cast %46 : vector<1x1x96xf32> to vector<1x96xf32>
    %48 = vector.broadcast %47 : vector<1x96xf32> to vector<32x96xf32>
    %49 = arith.addf %45, %48 : vector<32x96xf32>
    %50 = vector.extract_strided_slice %49 {offsets = [0, 0], sizes = [32, 32], strides = [1, 1]} : vector<32x96xf32> to vector<32x32xf32>
    %51 = arith.truncf %50 : vector<32x32xf32> to vector<32x32xbf16>
    %52 = vector.extract_strided_slice %49 {offsets = [0, 32], sizes = [32, 32], strides = [1, 1]} : vector<32x96xf32> to vector<32x32xf32>
    %53 = arith.truncf %52 : vector<32x32xf32> to vector<32x32xbf16>
    %54 = vector.extract_strided_slice %49 {offsets = [0, 64], sizes = [32, 32], strides = [1, 1]} : vector<32x96xf32> to vector<32x32xf32>
    %55 = arith.truncf %54 : vector<32x32xf32> to vector<32x32xbf16>
    %56 = tpu.concatenate %53, %53, %53, %53 in 0 : vector<32x32xbf16>, vector<32x32xbf16>, vector<32x32xbf16>, vector<32x32xbf16> -> vector<128x32xbf16>
    %57 = arith.mulf %56, %9 : vector<128x32xbf16>
    %58 = tpu.concatenate %55, %55, %55, %55 in 0 : vector<32x32xbf16>, vector<32x32xbf16>, vector<32x32xbf16>, vector<32x32xbf16> -> vector<128x32xbf16>
    %59 = arith.mulf %58, %9 : vector<128x32xbf16>
    %cst_30 = arith.constant dense<0.000000e+00> : vector<32x128xf32>
    %60 = tpu.matmul %51, %57, %cst_30 {dimension_numbers = #tpu.dot_dimension_numbers<[1], [1], [0], [0], [0, 0, 1, 0], [], []>} : vector<32x32xbf16>, vector<128x32xbf16>, vector<32x128xf32> -> vector<32x128xf32>
    %61 = arith.addf %60, %15 : vector<32x128xf32>
    %cst_31 = arith.constant dense<0xFF800000> : vector<32xf32>
    %62 = vector.multi_reduction <maximumf>, %61, %cst_31 [1] : vector<32x128xf32> to vector<32xf32>
    %63 = vector.shape_cast %62 : vector<32xf32> to vector<32x1xf32>
    %64 = vector.broadcast %63 : vector<32x1xf32> to vector<32x128xf32>
    %65 = arith.subf %61, %64 : vector<32x128xf32>
    %66 = math.exp %65 : vector<32x128xf32>
    %cst_32 = arith.constant dense<0.000000e+00> : vector<32x128xf32>
    %67 = tpu.matmul %66, %11, %cst_32 {dimension_numbers = #tpu.dot_dimension_numbers<[1], [0], [0], [1], [0, 0, 1, 1], [], []>} : vector<32x128xf32>, vector<128x128xf32>, vector<32x128xf32> -> vector<32x128xf32>
    %68 = arith.mulf %66, %10 : vector<32x128xf32>
    %cst_33 = arith.constant 1.000000e-30 : f32
    %69 = vector.broadcast %cst_33 : f32 to vector<32x128xf32>
    %70 = arith.addf %67, %69 : vector<32x128xf32>
    %71 = tpu.reciprocal %70 {approx = true} : vector<32x128xf32> -> vector<32x128xf32>
    %72 = arith.mulf %68, %71 : vector<32x128xf32>
    %73 = arith.truncf %72 : vector<32x128xf32> to vector<32x128xbf16>
    %cst_34 = arith.constant dense<0.000000e+00> : vector<32x32xf32>
    %74 = tpu.matmul %73, %59, %cst_34 {dimension_numbers = #tpu.dot_dimension_numbers<[1], [0], [0], [1], [0, 0, 1, 1], [], []>} : vector<32x128xbf16>, vector<128x32xbf16>, vector<32x32xf32> -> vector<32x32xf32>
    %75 = arith.truncf %74 : vector<32x32xf32> to vector<32x32xbf16>
    %c0_35 = arith.constant 0 : index
    %c0_36 = arith.constant 0 : index
    %c0_37 = arith.constant 0 : index
    %76 = vector.load %arg10[%c0_35, %c0_36, %c0_37] : memref<2x32x32xbf16, #tpu.memory_space<vmem>>, vector<1x32x32xbf16>
    %77 = vector.shape_cast %76 : vector<1x32x32xbf16> to vector<32x32xbf16>
    %cst_38 = arith.constant dense<0.000000e+00> : vector<32x32xf32>
    %78 = tpu.matmul %75, %77, %cst_38 {dimension_numbers = #tpu.dot_dimension_numbers<[1], [0], [0], [1], [0, 0, 1, 1], [], []>} : vector<32x32xbf16>, vector<32x32xbf16>, vector<32x32xf32> -> vector<32x32xf32>
    %79 = arith.addf %8, %78 : vector<32x32xf32>
    %80 = vector.extract_strided_slice %17 {offsets = [2, 0], sizes = [1, 32], strides = [1, 1]} : vector<6x32xf32> to vector<1x32xf32>
    %81 = vector.broadcast %80 : vector<1x32xf32> to vector<32x32xf32>
    %82 = arith.addf %79, %81 : vector<32x32xf32>
    %83 = vector.extract_strided_slice %17 {offsets = [3, 0], sizes = [1, 32], strides = [1, 1]} : vector<6x32xf32> to vector<1x32xf32>
    %84 = vector.extract_strided_slice %17 {offsets = [4, 0], sizes = [1, 32], strides = [1, 1]} : vector<6x32xf32> to vector<1x32xf32>
    %cst_39 = arith.constant dense<0.000000e+00> : vector<32xf32>
    %85 = vector.multi_reduction <add>, %82, %cst_39 [1] : vector<32x32xf32> to vector<32xf32>
    %86 = vector.shape_cast %85 : vector<32xf32> to vector<32x1xf32>
    %cst_40 = arith.constant 3.200000e+01 : f32
    %87 = vector.broadcast %cst_40 : f32 to vector<32x1xf32>
    %88 = arith.divf %86, %87 : vector<32x1xf32>
    %89 = vector.broadcast %88 : vector<32x1xf32> to vector<32x32xf32>
    %90 = arith.subf %82, %89 : vector<32x32xf32>
    %91 = arith.mulf %90, %90 : vector<32x32xf32>
    %cst_41 = arith.constant dense<0.000000e+00> : vector<32xf32>
    %92 = vector.multi_reduction <add>, %91, %cst_41 [1] : vector<32x32xf32> to vector<32xf32>
    %93 = vector.shape_cast %92 : vector<32xf32> to vector<32x1xf32>
    %cst_42 = arith.constant 3.200000e+01 : f32
    %94 = vector.broadcast %cst_42 : f32 to vector<32x1xf32>
    %95 = arith.divf %93, %94 : vector<32x1xf32>
    %96 = vector.broadcast %88 : vector<32x1xf32> to vector<32x32xf32>
    %97 = arith.subf %82, %96 : vector<32x32xf32>
    %cst_43 = arith.constant 9.99999974E-6 : f32
    %98 = vector.broadcast %cst_43 : f32 to vector<32x1xf32>
    %99 = arith.addf %95, %98 : vector<32x1xf32>
    %100 = math.rsqrt %99 : vector<32x1xf32>
    %101 = vector.broadcast %100 : vector<32x1xf32> to vector<32x32xf32>
    %102 = arith.mulf %97, %101 : vector<32x32xf32>
    %103 = vector.broadcast %83 : vector<1x32xf32> to vector<32x32xf32>
    %104 = arith.mulf %102, %103 : vector<32x32xf32>
    %105 = vector.broadcast %84 : vector<1x32xf32> to vector<32x32xf32>
    %106 = arith.addf %104, %105 : vector<32x32xf32>
    %107 = arith.truncf %106 : vector<32x32xf32> to vector<32x32xbf16>
    %c0_44 = arith.constant 0 : index
    %c0_45 = arith.constant 0 : index
    %c0_46 = arith.constant 0 : index
    %108 = vector.load %arg11[%c0_44, %c0_45, %c0_46] : memref<2x32x128xbf16, #tpu.memory_space<vmem>>, vector<1x32x128xbf16>
    %109 = vector.shape_cast %108 : vector<1x32x128xbf16> to vector<32x128xbf16>
    %cst_47 = arith.constant dense<0.000000e+00> : vector<32x128xf32>
    %110 = tpu.matmul %107, %109, %cst_47 {dimension_numbers = #tpu.dot_dimension_numbers<[1], [0], [0], [1], [0, 0, 1, 1], [], []>} : vector<32x32xbf16>, vector<32x128xbf16>, vector<32x128xf32> -> vector<32x128xf32>
    %c0_48 = arith.constant 0 : index
    %c0_49 = arith.constant 0 : index
    %c0_50 = arith.constant 0 : index
    %111 = vector.load %arg12[%c0_48, %c0_49, %c0_50] : memref<2x1x128xf32, #tpu.memory_space<vmem>>, vector<1x1x128xf32>
    %112 = vector.shape_cast %111 : vector<1x1x128xf32> to vector<1x128xf32>
    %113 = vector.broadcast %112 : vector<1x128xf32> to vector<32x128xf32>
    %114 = arith.addf %110, %113 : vector<32x128xf32>
    %cst_51 = arith.constant 5.000000e-01 : f32
    %115 = vector.broadcast %cst_51 : f32 to vector<32x128xf32>
    %116 = arith.mulf %115, %114 : vector<32x128xf32>
    %cst_52 = arith.constant 0.707106769 : f32
    %117 = vector.broadcast %cst_52 : f32 to vector<32x128xf32>
    %118 = arith.mulf %114, %117 : vector<32x128xf32>
    %119 = math.absf %118 : vector<32x128xf32>
    %cst_53 = arith.constant 0.327591091 : f32
    %120 = vector.broadcast %cst_53 : f32 to vector<32x128xf32>
    %121 = arith.mulf %120, %119 : vector<32x128xf32>
    %cst_54 = arith.constant 1.000000e+00 : f32
    %122 = vector.broadcast %cst_54 : f32 to vector<32x128xf32>
    %123 = arith.addf %122, %121 : vector<32x128xf32>
    %124 = tpu.reciprocal %123 {approx = true} : vector<32x128xf32> -> vector<32x128xf32>
    %cst_55 = arith.constant 1.06140542 : f32
    %125 = vector.broadcast %cst_55 : f32 to vector<32x128xf32>
    %126 = arith.mulf %125, %124 : vector<32x128xf32>
    %cst_56 = arith.constant -1.45315206 : f32
    %127 = vector.broadcast %cst_56 : f32 to vector<32x128xf32>
    %128 = arith.addf %126, %127 : vector<32x128xf32>
    %129 = arith.mulf %128, %124 : vector<32x128xf32>
    %cst_57 = arith.constant 1.42141378 : f32
    %130 = vector.broadcast %cst_57 : f32 to vector<32x128xf32>
    %131 = arith.addf %129, %130 : vector<32x128xf32>
    %132 = arith.mulf %131, %124 : vector<32x128xf32>
    %cst_58 = arith.constant -0.284496725 : f32
    %133 = vector.broadcast %cst_58 : f32 to vector<32x128xf32>
    %134 = arith.addf %132, %133 : vector<32x128xf32>
    %135 = arith.mulf %134, %124 : vector<32x128xf32>
    %cst_59 = arith.constant 0.254829586 : f32
    %136 = vector.broadcast %cst_59 : f32 to vector<32x128xf32>
    %137 = arith.addf %135, %136 : vector<32x128xf32>
    %138 = arith.mulf %137, %124 : vector<32x128xf32>
    %cst_60 = arith.constant 0.000000e+00 : f32
    %139 = vector.broadcast %cst_60 : f32 to vector<32x128xf32>
    %140 = arith.subf %139, %119 : vector<32x128xf32>
    %141 = arith.mulf %140, %119 : vector<32x128xf32>
    %142 = math.exp %141 : vector<32x128xf32>
    %143 = arith.mulf %138, %142 : vector<32x128xf32>
    %cst_61 = arith.constant 1.000000e+00 : f32
    %144 = vector.broadcast %cst_61 : f32 to vector<32x128xf32>
    %145 = arith.subf %144, %143 : vector<32x128xf32>
    %cst_62 = arith.constant 0.000000e+00 : f32
    %146 = vector.broadcast %cst_62 : f32 to vector<32x128xf32>
    %147 = arith.cmpf oge, %118, %146 : vector<32x128xf32>
    %cst_63 = arith.constant 0.000000e+00 : f32
    %148 = vector.broadcast %cst_63 : f32 to vector<32x128xf32>
    %149 = arith.subf %148, %145 : vector<32x128xf32>
    %150 = arith.select %147, %145, %149 : vector<32x128xi1>, vector<32x128xf32>
    %cst_64 = arith.constant 1.000000e+00 : f32
    %151 = vector.broadcast %cst_64 : f32 to vector<32x128xf32>
    %152 = arith.addf %151, %150 : vector<32x128xf32>
    %153 = arith.mulf %116, %152 : vector<32x128xf32>
    %154 = arith.truncf %153 : vector<32x128xf32> to vector<32x128xbf16>
    %c0_65 = arith.constant 0 : index
    %c0_66 = arith.constant 0 : index
    %c0_67 = arith.constant 0 : index
    %155 = vector.load %arg13[%c0_65, %c0_66, %c0_67] : memref<2x128x32xbf16, #tpu.memory_space<vmem>>, vector<1x128x32xbf16>
    %156 = vector.shape_cast %155 : vector<1x128x32xbf16> to vector<128x32xbf16>
    %cst_68 = arith.constant dense<0.000000e+00> : vector<32x32xf32>
    %157 = tpu.matmul %154, %156, %cst_68 {dimension_numbers = #tpu.dot_dimension_numbers<[1], [0], [0], [1], [0, 0, 1, 1], [], []>} : vector<32x128xbf16>, vector<128x32xbf16>, vector<32x32xf32> -> vector<32x32xf32>
    %158 = arith.addf %82, %157 : vector<32x32xf32>
    %159 = vector.extract_strided_slice %17 {offsets = [5, 0], sizes = [1, 32], strides = [1, 1]} : vector<6x32xf32> to vector<1x32xf32>
    %160 = vector.broadcast %159 : vector<1x32xf32> to vector<32x32xf32>
    %161 = arith.addf %158, %160 : vector<32x32xf32>
    %c1 = arith.constant 1 : index
    %c0_69 = arith.constant 0 : index
    %c0_70 = arith.constant 0 : index
    %162 = vector.load %arg14[%c1, %c0_69, %c0_70] : memref<2x6x32xf32, #tpu.memory_space<vmem>>, vector<1x6x32xf32>
    %163 = vector.shape_cast %162 : vector<1x6x32xf32> to vector<6x32xf32>
    %164 = vector.extract_strided_slice %163 {offsets = [0, 0], sizes = [1, 32], strides = [1, 1]} : vector<6x32xf32> to vector<1x32xf32>
    %165 = vector.extract_strided_slice %163 {offsets = [1, 0], sizes = [1, 32], strides = [1, 1]} : vector<6x32xf32> to vector<1x32xf32>
    %cst_71 = arith.constant dense<0.000000e+00> : vector<32xf32>
    %166 = vector.multi_reduction <add>, %161, %cst_71 [1] : vector<32x32xf32> to vector<32xf32>
    %167 = vector.shape_cast %166 : vector<32xf32> to vector<32x1xf32>
    %cst_72 = arith.constant 3.200000e+01 : f32
    %168 = vector.broadcast %cst_72 : f32 to vector<32x1xf32>
    %169 = arith.divf %167, %168 : vector<32x1xf32>
    %170 = vector.broadcast %169 : vector<32x1xf32> to vector<32x32xf32>
    %171 = arith.subf %161, %170 : vector<32x32xf32>
    %172 = arith.mulf %171, %171 : vector<32x32xf32>
    %cst_73 = arith.constant dense<0.000000e+00> : vector<32xf32>
    %173 = vector.multi_reduction <add>, %172, %cst_73 [1] : vector<32x32xf32> to vector<32xf32>
    %174 = vector.shape_cast %173 : vector<32xf32> to vector<32x1xf32>
    %cst_74 = arith.constant 3.200000e+01 : f32
    %175 = vector.broadcast %cst_74 : f32 to vector<32x1xf32>
    %176 = arith.divf %174, %175 : vector<32x1xf32>
    %177 = vector.broadcast %169 : vector<32x1xf32> to vector<32x32xf32>
    %178 = arith.subf %161, %177 : vector<32x32xf32>
    %cst_75 = arith.constant 9.99999974E-6 : f32
    %179 = vector.broadcast %cst_75 : f32 to vector<32x1xf32>
    %180 = arith.addf %176, %179 : vector<32x1xf32>
    %181 = math.rsqrt %180 : vector<32x1xf32>
    %182 = vector.broadcast %181 : vector<32x1xf32> to vector<32x32xf32>
    %183 = arith.mulf %178, %182 : vector<32x32xf32>
    %184 = vector.broadcast %164 : vector<1x32xf32> to vector<32x32xf32>
    %185 = arith.mulf %183, %184 : vector<32x32xf32>
    %186 = vector.broadcast %165 : vector<1x32xf32> to vector<32x32xf32>
    %187 = arith.addf %185, %186 : vector<32x32xf32>
    %188 = arith.truncf %187 : vector<32x32xf32> to vector<32x32xbf16>
    %c1_76 = arith.constant 1 : index
    %c0_77 = arith.constant 0 : index
    %c0_78 = arith.constant 0 : index
    %189 = vector.load %arg8[%c1_76, %c0_77, %c0_78] : memref<2x32x96xbf16, #tpu.memory_space<vmem>>, vector<1x32x96xbf16>
    %190 = vector.shape_cast %189 : vector<1x32x96xbf16> to vector<32x96xbf16>
    %cst_79 = arith.constant dense<0.000000e+00> : vector<32x96xf32>
    %191 = tpu.matmul %188, %190, %cst_79 {dimension_numbers = #tpu.dot_dimension_numbers<[1], [0], [0], [1], [0, 0, 1, 1], [], []>} : vector<32x32xbf16>, vector<32x96xbf16>, vector<32x96xf32> -> vector<32x96xf32>
    %c1_80 = arith.constant 1 : index
    %c0_81 = arith.constant 0 : index
    %c0_82 = arith.constant 0 : index
    %192 = vector.load %arg9[%c1_80, %c0_81, %c0_82] : memref<2x1x96xf32, #tpu.memory_space<vmem>>, vector<1x1x96xf32>
    %193 = vector.shape_cast %192 : vector<1x1x96xf32> to vector<1x96xf32>
    %194 = vector.broadcast %193 : vector<1x96xf32> to vector<32x96xf32>
    %195 = arith.addf %191, %194 : vector<32x96xf32>
    %196 = vector.extract_strided_slice %195 {offsets = [0, 0], sizes = [32, 32], strides = [1, 1]} : vector<32x96xf32> to vector<32x32xf32>
    %197 = arith.truncf %196 : vector<32x32xf32> to vector<32x32xbf16>
    %198 = vector.extract_strided_slice %195 {offsets = [0, 32], sizes = [32, 32], strides = [1, 1]} : vector<32x96xf32> to vector<32x32xf32>
    %199 = arith.truncf %198 : vector<32x32xf32> to vector<32x32xbf16>
    %200 = vector.extract_strided_slice %195 {offsets = [0, 64], sizes = [32, 32], strides = [1, 1]} : vector<32x96xf32> to vector<32x32xf32>
    %201 = arith.truncf %200 : vector<32x32xf32> to vector<32x32xbf16>
    %202 = tpu.concatenate %199, %199, %199, %199 in 0 : vector<32x32xbf16>, vector<32x32xbf16>, vector<32x32xbf16>, vector<32x32xbf16> -> vector<128x32xbf16>
    %203 = arith.mulf %202, %9 : vector<128x32xbf16>
    %204 = tpu.concatenate %201, %201, %201, %201 in 0 : vector<32x32xbf16>, vector<32x32xbf16>, vector<32x32xbf16>, vector<32x32xbf16> -> vector<128x32xbf16>
    %205 = arith.mulf %204, %9 : vector<128x32xbf16>
    %cst_83 = arith.constant dense<0.000000e+00> : vector<32x128xf32>
    %206 = tpu.matmul %197, %203, %cst_83 {dimension_numbers = #tpu.dot_dimension_numbers<[1], [1], [0], [0], [0, 0, 1, 0], [], []>} : vector<32x32xbf16>, vector<128x32xbf16>, vector<32x128xf32> -> vector<32x128xf32>
    %207 = arith.addf %206, %15 : vector<32x128xf32>
    %cst_84 = arith.constant dense<0xFF800000> : vector<32xf32>
    %208 = vector.multi_reduction <maximumf>, %207, %cst_84 [1] : vector<32x128xf32> to vector<32xf32>
    %209 = vector.shape_cast %208 : vector<32xf32> to vector<32x1xf32>
    %210 = vector.broadcast %209 : vector<32x1xf32> to vector<32x128xf32>
    %211 = arith.subf %207, %210 : vector<32x128xf32>
    %212 = math.exp %211 : vector<32x128xf32>
    %cst_85 = arith.constant dense<0.000000e+00> : vector<32x128xf32>
    %213 = tpu.matmul %212, %11, %cst_85 {dimension_numbers = #tpu.dot_dimension_numbers<[1], [0], [0], [1], [0, 0, 1, 1], [], []>} : vector<32x128xf32>, vector<128x128xf32>, vector<32x128xf32> -> vector<32x128xf32>
    %214 = arith.mulf %212, %10 : vector<32x128xf32>
    %cst_86 = arith.constant 1.000000e-30 : f32
    %215 = vector.broadcast %cst_86 : f32 to vector<32x128xf32>
    %216 = arith.addf %213, %215 : vector<32x128xf32>
    %217 = tpu.reciprocal %216 {approx = true} : vector<32x128xf32> -> vector<32x128xf32>
    %218 = arith.mulf %214, %217 : vector<32x128xf32>
    %219 = arith.truncf %218 : vector<32x128xf32> to vector<32x128xbf16>
    %cst_87 = arith.constant dense<0.000000e+00> : vector<32x32xf32>
    %220 = tpu.matmul %219, %205, %cst_87 {dimension_numbers = #tpu.dot_dimension_numbers<[1], [0], [0], [1], [0, 0, 1, 1], [], []>} : vector<32x128xbf16>, vector<128x32xbf16>, vector<32x32xf32> -> vector<32x32xf32>
    %221 = arith.truncf %220 : vector<32x32xf32> to vector<32x32xbf16>
    %c1_88 = arith.constant 1 : index
    %c0_89 = arith.constant 0 : index
    %c0_90 = arith.constant 0 : index
    %222 = vector.load %arg10[%c1_88, %c0_89, %c0_90] : memref<2x32x32xbf16, #tpu.memory_space<vmem>>, vector<1x32x32xbf16>
    %223 = vector.shape_cast %222 : vector<1x32x32xbf16> to vector<32x32xbf16>
    %cst_91 = arith.constant dense<0.000000e+00> : vector<32x32xf32>
    %224 = tpu.matmul %221, %223, %cst_91 {dimension_numbers = #tpu.dot_dimension_numbers<[1], [0], [0], [1], [0, 0, 1, 1], [], []>} : vector<32x32xbf16>, vector<32x32xbf16>, vector<32x32xf32> -> vector<32x32xf32>
    %225 = arith.addf %161, %224 : vector<32x32xf32>
    %226 = vector.extract_strided_slice %163 {offsets = [2, 0], sizes = [1, 32], strides = [1, 1]} : vector<6x32xf32> to vector<1x32xf32>
    %227 = vector.broadcast %226 : vector<1x32xf32> to vector<32x32xf32>
    %228 = arith.addf %225, %227 : vector<32x32xf32>
    %229 = vector.extract_strided_slice %163 {offsets = [3, 0], sizes = [1, 32], strides = [1, 1]} : vector<6x32xf32> to vector<1x32xf32>
    %230 = vector.extract_strided_slice %163 {offsets = [4, 0], sizes = [1, 32], strides = [1, 1]} : vector<6x32xf32> to vector<1x32xf32>
    %cst_92 = arith.constant dense<0.000000e+00> : vector<32xf32>
    %231 = vector.multi_reduction <add>, %228, %cst_92 [1] : vector<32x32xf32> to vector<32xf32>
    %232 = vector.shape_cast %231 : vector<32xf32> to vector<32x1xf32>
    %cst_93 = arith.constant 3.200000e+01 : f32
    %233 = vector.broadcast %cst_93 : f32 to vector<32x1xf32>
    %234 = arith.divf %232, %233 : vector<32x1xf32>
    %235 = vector.broadcast %234 : vector<32x1xf32> to vector<32x32xf32>
    %236 = arith.subf %228, %235 : vector<32x32xf32>
    %237 = arith.mulf %236, %236 : vector<32x32xf32>
    %cst_94 = arith.constant dense<0.000000e+00> : vector<32xf32>
    %238 = vector.multi_reduction <add>, %237, %cst_94 [1] : vector<32x32xf32> to vector<32xf32>
    %239 = vector.shape_cast %238 : vector<32xf32> to vector<32x1xf32>
    %cst_95 = arith.constant 3.200000e+01 : f32
    %240 = vector.broadcast %cst_95 : f32 to vector<32x1xf32>
    %241 = arith.divf %239, %240 : vector<32x1xf32>
    %242 = vector.broadcast %234 : vector<32x1xf32> to vector<32x32xf32>
    %243 = arith.subf %228, %242 : vector<32x32xf32>
    %cst_96 = arith.constant 9.99999974E-6 : f32
    %244 = vector.broadcast %cst_96 : f32 to vector<32x1xf32>
    %245 = arith.addf %241, %244 : vector<32x1xf32>
    %246 = math.rsqrt %245 : vector<32x1xf32>
    %247 = vector.broadcast %246 : vector<32x1xf32> to vector<32x32xf32>
    %248 = arith.mulf %243, %247 : vector<32x32xf32>
    %249 = vector.broadcast %229 : vector<1x32xf32> to vector<32x32xf32>
    %250 = arith.mulf %248, %249 : vector<32x32xf32>
    %251 = vector.broadcast %230 : vector<1x32xf32> to vector<32x32xf32>
    %252 = arith.addf %250, %251 : vector<32x32xf32>
    %253 = arith.truncf %252 : vector<32x32xf32> to vector<32x32xbf16>
    %c1_97 = arith.constant 1 : index
    %c0_98 = arith.constant 0 : index
    %c0_99 = arith.constant 0 : index
    %254 = vector.load %arg11[%c1_97, %c0_98, %c0_99] : memref<2x32x128xbf16, #tpu.memory_space<vmem>>, vector<1x32x128xbf16>
    %255 = vector.shape_cast %254 : vector<1x32x128xbf16> to vector<32x128xbf16>
    %cst_100 = arith.constant dense<0.000000e+00> : vector<32x128xf32>
    %256 = tpu.matmul %253, %255, %cst_100 {dimension_numbers = #tpu.dot_dimension_numbers<[1], [0], [0], [1], [0, 0, 1, 1], [], []>} : vector<32x32xbf16>, vector<32x128xbf16>, vector<32x128xf32> -> vector<32x128xf32>
    %c1_101 = arith.constant 1 : index
    %c0_102 = arith.constant 0 : index
    %c0_103 = arith.constant 0 : index
    %257 = vector.load %arg12[%c1_101, %c0_102, %c0_103] : memref<2x1x128xf32, #tpu.memory_space<vmem>>, vector<1x1x128xf32>
    %258 = vector.shape_cast %257 : vector<1x1x128xf32> to vector<1x128xf32>
    %259 = vector.broadcast %258 : vector<1x128xf32> to vector<32x128xf32>
    %260 = arith.addf %256, %259 : vector<32x128xf32>
    %cst_104 = arith.constant 5.000000e-01 : f32
    %261 = vector.broadcast %cst_104 : f32 to vector<32x128xf32>
    %262 = arith.mulf %261, %260 : vector<32x128xf32>
    %cst_105 = arith.constant 0.707106769 : f32
    %263 = vector.broadcast %cst_105 : f32 to vector<32x128xf32>
    %264 = arith.mulf %260, %263 : vector<32x128xf32>
    %265 = math.absf %264 : vector<32x128xf32>
    %cst_106 = arith.constant 0.327591091 : f32
    %266 = vector.broadcast %cst_106 : f32 to vector<32x128xf32>
    %267 = arith.mulf %266, %265 : vector<32x128xf32>
    %cst_107 = arith.constant 1.000000e+00 : f32
    %268 = vector.broadcast %cst_107 : f32 to vector<32x128xf32>
    %269 = arith.addf %268, %267 : vector<32x128xf32>
    %270 = tpu.reciprocal %269 {approx = true} : vector<32x128xf32> -> vector<32x128xf32>
    %cst_108 = arith.constant 1.06140542 : f32
    %271 = vector.broadcast %cst_108 : f32 to vector<32x128xf32>
    %272 = arith.mulf %271, %270 : vector<32x128xf32>
    %cst_109 = arith.constant -1.45315206 : f32
    %273 = vector.broadcast %cst_109 : f32 to vector<32x128xf32>
    %274 = arith.addf %272, %273 : vector<32x128xf32>
    %275 = arith.mulf %274, %270 : vector<32x128xf32>
    %cst_110 = arith.constant 1.42141378 : f32
    %276 = vector.broadcast %cst_110 : f32 to vector<32x128xf32>
    %277 = arith.addf %275, %276 : vector<32x128xf32>
    %278 = arith.mulf %277, %270 : vector<32x128xf32>
    %cst_111 = arith.constant -0.284496725 : f32
    %279 = vector.broadcast %cst_111 : f32 to vector<32x128xf32>
    %280 = arith.addf %278, %279 : vector<32x128xf32>
    %281 = arith.mulf %280, %270 : vector<32x128xf32>
    %cst_112 = arith.constant 0.254829586 : f32
    %282 = vector.broadcast %cst_112 : f32 to vector<32x128xf32>
    %283 = arith.addf %281, %282 : vector<32x128xf32>
    %284 = arith.mulf %283, %270 : vector<32x128xf32>
    %cst_113 = arith.constant 0.000000e+00 : f32
    %285 = vector.broadcast %cst_113 : f32 to vector<32x128xf32>
    %286 = arith.subf %285, %265 : vector<32x128xf32>
    %287 = arith.mulf %286, %265 : vector<32x128xf32>
    %288 = math.exp %287 : vector<32x128xf32>
    %289 = arith.mulf %284, %288 : vector<32x128xf32>
    %cst_114 = arith.constant 1.000000e+00 : f32
    %290 = vector.broadcast %cst_114 : f32 to vector<32x128xf32>
    %291 = arith.subf %290, %289 : vector<32x128xf32>
    %cst_115 = arith.constant 0.000000e+00 : f32
    %292 = vector.broadcast %cst_115 : f32 to vector<32x128xf32>
    %293 = arith.cmpf oge, %264, %292 : vector<32x128xf32>
    %cst_116 = arith.constant 0.000000e+00 : f32
    %294 = vector.broadcast %cst_116 : f32 to vector<32x128xf32>
    %295 = arith.subf %294, %291 : vector<32x128xf32>
    %296 = arith.select %293, %291, %295 : vector<32x128xi1>, vector<32x128xf32>
    %cst_117 = arith.constant 1.000000e+00 : f32
    %297 = vector.broadcast %cst_117 : f32 to vector<32x128xf32>
    %298 = arith.addf %297, %296 : vector<32x128xf32>
    %299 = arith.mulf %262, %298 : vector<32x128xf32>
    %300 = arith.truncf %299 : vector<32x128xf32> to vector<32x128xbf16>
    %c1_118 = arith.constant 1 : index
    %c0_119 = arith.constant 0 : index
    %c0_120 = arith.constant 0 : index
    %301 = vector.load %arg13[%c1_118, %c0_119, %c0_120] : memref<2x128x32xbf16, #tpu.memory_space<vmem>>, vector<1x128x32xbf16>
    %302 = vector.shape_cast %301 : vector<1x128x32xbf16> to vector<128x32xbf16>
    %cst_121 = arith.constant dense<0.000000e+00> : vector<32x32xf32>
    %303 = tpu.matmul %300, %302, %cst_121 {dimension_numbers = #tpu.dot_dimension_numbers<[1], [0], [0], [1], [0, 0, 1, 1], [], []>} : vector<32x128xbf16>, vector<128x32xbf16>, vector<32x32xf32> -> vector<32x32xf32>
    %304 = arith.addf %228, %303 : vector<32x32xf32>
    %305 = vector.extract_strided_slice %163 {offsets = [5, 0], sizes = [1, 32], strides = [1, 1]} : vector<6x32xf32> to vector<1x32xf32>
    %306 = vector.broadcast %305 : vector<1x32xf32> to vector<32x32xf32>
    %307 = arith.addf %304, %306 : vector<32x32xf32>
    %308 = vector.extract_strided_slice %307 {offsets = [0, 0], sizes = [16, 32], strides = [1, 1]} : vector<32x32xf32> to vector<16x32xf32>
    %cst_122 = arith.constant dense<0.000000e+00> : vector<32xf32>
    %309 = vector.multi_reduction <add>, %308, %cst_122 [0] : vector<16x32xf32> to vector<32xf32>
    %310 = vector.shape_cast %309 : vector<32xf32> to vector<1x32xf32>
    %cst_123 = arith.constant 1.600000e+01 : f32
    %311 = vector.broadcast %cst_123 : f32 to vector<1x32xf32>
    %312 = arith.divf %310, %311 : vector<1x32xf32>
    %313 = vector.extract_strided_slice %307 {offsets = [16, 0], sizes = [16, 32], strides = [1, 1]} : vector<32x32xf32> to vector<16x32xf32>
    %cst_124 = arith.constant dense<0.000000e+00> : vector<32xf32>
    %314 = vector.multi_reduction <add>, %313, %cst_124 [0] : vector<16x32xf32> to vector<32xf32>
    %315 = vector.shape_cast %314 : vector<32xf32> to vector<1x32xf32>
    %cst_125 = arith.constant 1.600000e+01 : f32
    %316 = vector.broadcast %cst_125 : f32 to vector<1x32xf32>
    %317 = arith.divf %315, %316 : vector<1x32xf32>
    %318 = tpu.concatenate %312, %317 in 0 : vector<1x32xf32>, vector<1x32xf32> -> vector<2x32xf32>
    %319 = arith.truncf %318 : vector<2x32xf32> to vector<2x32xbf16>
    %c0_126 = arith.constant 0 : index
    %c0_127 = arith.constant 0 : index
    %320 = vector.load %arg15[%c0_126, %c0_127] : memref<32x16xbf16, #tpu.memory_space<vmem>>, vector<32x16xbf16>
    %cst_128 = arith.constant dense<0.000000e+00> : vector<2x16xf32>
    %321 = tpu.matmul %319, %320, %cst_128 {dimension_numbers = #tpu.dot_dimension_numbers<[1], [0], [0], [1], [0, 0, 1, 1], [], []>} : vector<2x32xbf16>, vector<32x16xbf16>, vector<2x16xf32> -> vector<2x16xf32>
    %c0_129 = arith.constant 0 : index
    %c0_130 = arith.constant 0 : index
    %322 = vector.load %arg16[%c0_129, %c0_130] : memref<1x16xf32, #tpu.memory_space<vmem>>, vector<1x16xf32>
    %323 = vector.broadcast %322 : vector<1x16xf32> to vector<2x16xf32>
    %324 = arith.addf %321, %323 : vector<2x16xf32>
    %cst_131 = arith.constant 5.000000e-01 : f32
    %325 = vector.broadcast %cst_131 : f32 to vector<2x16xf32>
    %326 = arith.mulf %325, %324 : vector<2x16xf32>
    %cst_132 = arith.constant 0.707106769 : f32
    %327 = vector.broadcast %cst_132 : f32 to vector<2x16xf32>
    %328 = arith.mulf %324, %327 : vector<2x16xf32>
    %329 = math.absf %328 : vector<2x16xf32>
    %cst_133 = arith.constant 0.327591091 : f32
    %330 = vector.broadcast %cst_133 : f32 to vector<2x16xf32>
    %331 = arith.mulf %330, %329 : vector<2x16xf32>
    %cst_134 = arith.constant 1.000000e+00 : f32
    %332 = vector.broadcast %cst_134 : f32 to vector<2x16xf32>
    %333 = arith.addf %332, %331 : vector<2x16xf32>
    %334 = tpu.reciprocal %333 {approx = true} : vector<2x16xf32> -> vector<2x16xf32>
    %cst_135 = arith.constant 1.06140542 : f32
    %335 = vector.broadcast %cst_135 : f32 to vector<2x16xf32>
    %336 = arith.mulf %335, %334 : vector<2x16xf32>
    %cst_136 = arith.constant -1.45315206 : f32
    %337 = vector.broadcast %cst_136 : f32 to vector<2x16xf32>
    %338 = arith.addf %336, %337 : vector<2x16xf32>
    %339 = arith.mulf %338, %334 : vector<2x16xf32>
    %cst_137 = arith.constant 1.42141378 : f32
    %340 = vector.broadcast %cst_137 : f32 to vector<2x16xf32>
    %341 = arith.addf %339, %340 : vector<2x16xf32>
    %342 = arith.mulf %341, %334 : vector<2x16xf32>
    %cst_138 = arith.constant -0.284496725 : f32
    %343 = vector.broadcast %cst_138 : f32 to vector<2x16xf32>
    %344 = arith.addf %342, %343 : vector<2x16xf32>
    %345 = arith.mulf %344, %334 : vector<2x16xf32>
    %cst_139 = arith.constant 0.254829586 : f32
    %346 = vector.broadcast %cst_139 : f32 to vector<2x16xf32>
    %347 = arith.addf %345, %346 : vector<2x16xf32>
    %348 = arith.mulf %347, %334 : vector<2x16xf32>
    %cst_140 = arith.constant 0.000000e+00 : f32
    %349 = vector.broadcast %cst_140 : f32 to vector<2x16xf32>
    %350 = arith.subf %349, %329 : vector<2x16xf32>
    %351 = arith.mulf %350, %329 : vector<2x16xf32>
    %352 = math.exp %351 : vector<2x16xf32>
    %353 = arith.mulf %348, %352 : vector<2x16xf32>
    %cst_141 = arith.constant 1.000000e+00 : f32
    %354 = vector.broadcast %cst_141 : f32 to vector<2x16xf32>
    %355 = arith.subf %354, %353 : vector<2x16xf32>
    %cst_142 = arith.constant 0.000000e+00 : f32
    %356 = vector.broadcast %cst_142 : f32 to vector<2x16xf32>
    %357 = arith.cmpf oge, %328, %356 : vector<2x16xf32>
    %cst_143 = arith.constant 0.000000e+00 : f32
    %358 = vector.broadcast %cst_143 : f32 to vector<2x16xf32>
    %359 = arith.subf %358, %355 : vector<2x16xf32>
    %360 = arith.select %357, %355, %359 : vector<2x16xi1>, vector<2x16xf32>
    %cst_144 = arith.constant 1.000000e+00 : f32
    %361 = vector.broadcast %cst_144 : f32 to vector<2x16xf32>
    %362 = arith.addf %361, %360 : vector<2x16xf32>
    %363 = arith.mulf %326, %362 : vector<2x16xf32>
    %c0_145 = arith.constant 0 : index
    %c0_146 = arith.constant 0 : index
    %364 = vector.load %arg17[%c0_145, %c0_146] : memref<1x16xf32, #tpu.memory_space<vmem>>, vector<1x16xf32>
    %365 = vector.broadcast %364 : vector<1x16xf32> to vector<2x16xf32>
    %366 = arith.mulf %363, %365 : vector<2x16xf32>
    %cst_147 = arith.constant dense<0.000000e+00> : vector<2xf32>
    %367 = vector.multi_reduction <add>, %366, %cst_147 [1] : vector<2x16xf32> to vector<2xf32>
    %368 = vector.shape_cast %367 : vector<2xf32> to vector<2x1xf32>
    %c0_148 = arith.constant 0 : index
    %c0_149 = arith.constant 0 : index
    %369 = vector.load %arg18[%c0_148, %c0_149] : memref<1x1xf32, #tpu.memory_space<vmem>>, vector<1x1xf32>
    %370 = vector.broadcast %369 : vector<1x1xf32> to vector<2x1xf32>
    %371 = arith.addf %368, %370 : vector<2x1xf32>
    %c0_150 = arith.constant 0 : index
    %c0_151 = arith.constant 0 : index
    %372 = vector.load %arg19[%c0_150, %c0_151] : memref<2x1xf32, #tpu.memory_space<vmem>>, vector<2x1xf32>
    tpu.vector_store %arg19[%c0_150, %c0_151], %371 {strides = array<i32>} : memref<2x1xf32, #tpu.memory_space<vmem>>, vector<2x1xf32>,
    return
  }
  func.func @transform_0(%arg0: i32) -> (i32, i32) {
    %c0_i32 = arith.constant 0 : i32
    %c0_i32_0 = arith.constant 0 : i32
    %c0_i32_1 = arith.constant 0 : i32
    return %c0_i32, %c0_i32_0 : i32, i32
  }
  func.func @transform_1(%arg0: i32) -> (i32, i32) {
    %c0_i32 = arith.constant 0 : i32
    %c0_i32_0 = arith.constant 0 : i32
    %c0_i32_1 = arith.constant 0 : i32
    return %c0_i32, %c0_i32_0 : i32, i32
  }
  func.func @transform_2(%arg0: i32) -> (i32, i32) {
    %c0_i32 = arith.constant 0 : i32
    %c0_i32_0 = arith.constant 0 : i32
    %c0_i32_1 = arith.constant 0 : i32
    return %c0_i32, %c0_i32_0 : i32, i32
  }
  func.func @transform_3(%arg0: i32) -> (i32, i32) {
    %c0_i32 = arith.constant 0 : i32
    %c0_i32_0 = arith.constant 0 : i32
    %c0_i32_1 = arith.constant 0 : i32
    return %c0_i32, %c0_i32_0 : i32, i32
  }
  func.func @transform_4(%arg0: i32) -> (i32, i32) {
    %c0_i32 = arith.constant 0 : i32
    %c0_i32_0 = arith.constant 0 : i32
    %c0_i32_1 = arith.constant 0 : i32
    return %c0_i32, %c0_i32_0 : i32, i32
  }
  func.func @transform_5(%arg0: i32) -> (i32, i32) {
    %c0_i32 = arith.constant 0 : i32
    %c0_i32_0 = arith.constant 0 : i32
    %c0_i32_1 = arith.constant 0 : i32
    return %c0_i32, %c0_i32_0 : i32, i32
  }
  func.func @transform_6(%arg0: i32) -> (i32, i32) {
    %c0_i32 = arith.constant 0 : i32
    %c0_i32_0 = arith.constant 0 : i32
    %c0_i32_1 = arith.constant 0 : i32
    return %c0_i32, %c0_i32_0 : i32, i32
  }
  func.func @transform_7(%arg0: i32) -> (i32, i32, i32) {
    %c0_i32 = arith.constant 0 : i32
    %c0_i32_0 = arith.constant 0 : i32
    %c0_i32_1 = arith.constant 0 : i32
    %c0_i32_2 = arith.constant 0 : i32
    return %c0_i32, %c0_i32_0, %c0_i32_1 : i32, i32, i32
  }
  func.func @transform_8(%arg0: i32) -> (i32, i32, i32) {
    %c0_i32 = arith.constant 0 : i32
    %c0_i32_0 = arith.constant 0 : i32
    %c0_i32_1 = arith.constant 0 : i32
    %c0_i32_2 = arith.constant 0 : i32
    return %c0_i32, %c0_i32_0, %c0_i32_1 : i32, i32, i32
  }
  func.func @transform_9(%arg0: i32) -> (i32, i32, i32) {
    %c0_i32 = arith.constant 0 : i32
    %c0_i32_0 = arith.constant 0 : i32
    %c0_i32_1 = arith.constant 0 : i32
    %c0_i32_2 = arith.constant 0 : i32
    return %c0_i32, %c0_i32_0, %c0_i32_1 : i32, i32, i32
  }
  func.func @transform_10(%arg0: i32) -> (i32, i32, i32) {
    %c0_i32 = arith.constant 0 : i32
    %c0_i32_0 = arith.constant 0 : i32
    %c0_i32_1 = arith.constant 0 : i32
    %c0_i32_2 = arith.constant 0 : i32
    return %c0_i32, %c0_i32_0, %c0_i32_1 : i32, i32, i32
  }
  func.func @transform_11(%arg0: i32) -> (i32, i32, i32) {
    %c0_i32 = arith.constant 0 : i32
    %c0_i32_0 = arith.constant 0 : i32
    %c0_i32_1 = arith.constant 0 : i32
    %c0_i32_2 = arith.constant 0 : i32
    return %c0_i32, %c0_i32_0, %c0_i32_1 : i32, i32, i32
  }
  func.func @transform_12(%arg0: i32) -> (i32, i32, i32) {
    %c0_i32 = arith.constant 0 : i32
    %c0_i32_0 = arith.constant 0 : i32
    %c0_i32_1 = arith.constant 0 : i32
    %c0_i32_2 = arith.constant 0 : i32
    return %c0_i32, %c0_i32_0, %c0_i32_1 : i32, i32, i32
  }
  func.func @transform_13(%arg0: i32) -> (i32, i32, i32) {
    %c0_i32 = arith.constant 0 : i32
    %c0_i32_0 = arith.constant 0 : i32
    %c0_i32_1 = arith.constant 0 : i32
    %c0_i32_2 = arith.constant 0 : i32
    return %c0_i32, %c0_i32_0, %c0_i32_1 : i32, i32, i32
  }
  func.func @transform_14(%arg0: i32) -> (i32, i32) {
    %c0_i32 = arith.constant 0 : i32
    %c0_i32_0 = arith.constant 0 : i32
    %c0_i32_1 = arith.constant 0 : i32
    return %c0_i32, %c0_i32_0 : i32, i32
  }
  func.func @transform_15(%arg0: i32) -> (i32, i32) {
    %c0_i32 = arith.constant 0 : i32
    %c0_i32_0 = arith.constant 0 : i32
    %c0_i32_1 = arith.constant 0 : i32
    return %c0_i32, %c0_i32_0 : i32, i32
  }
  func.func @transform_16(%arg0: i32) -> (i32, i32) {
    %c0_i32 = arith.constant 0 : i32
    %c0_i32_0 = arith.constant 0 : i32
    %c0_i32_1 = arith.constant 0 : i32
    return %c0_i32, %c0_i32_0 : i32, i32
  }
  func.func @transform_17(%arg0: i32) -> (i32, i32) {
    %c0_i32 = arith.constant 0 : i32
    %c0_i32_0 = arith.constant 0 : i32
    %c0_i32_1 = arith.constant 0 : i32
    return %c0_i32, %c0_i32_0 : i32, i32
  }
  func.func @transform_18(%arg0: i32) -> (i32, i32) {
    %c0_i32 = arith.constant 0 : i32
    %c0_i32_0 = arith.constant 0 : i32
    %c0_i32_1 = arith.constant 0 : i32
    return %c0_i32, %c0_i32_0 : i32, i32
  }
}

</mosaic_0001>

<llo_original>
// kernel: rr_transformer_forward.1
$region0: #{rr_transformer_forward.1}
  #allocation0 [shape = 'u32[]', space=smem, size = 0x4, offset = 0x4, fixed_abs, tag = 'smem constant byte address 0x4 - core index']
  #allocation1 [shape = 'u32[144,128]{1,0:T(1,128)}', space=vmem, size = 0x12000, scoped, tag = 'internal scratch']
  #allocation2 [shape = 'f32[1,1]{1,0:T(1,128)S(1)}', space=vmem, size = 0x200, scoped, tag = 'scoped memory for rr_transformer_forward.1']
  %s0 = inlined_call_operand.vmem [shape: bf16[32,56], index: 0, kind: input, shape index: {}]
  %s1 = inlined_call_operand.vmem [shape: bf16[56,32], index: 1, kind: input, shape index: {}]
  %s2 = inlined_call_operand.vmem [shape: f32[16,32], index: 2, kind: input, shape index: {}]
  %s3 = inlined_call_operand.vmem [shape: f32[1,32], index: 3, kind: input, shape index: {}]
  %s4 = inlined_call_operand.vmem [shape: bf16[128,32], index: 4, kind: input, shape index: {}]
  %s5 = inlined_call_operand.vmem [shape: f32[32,128], index: 5, kind: input, shape index: {}]
  %s6 = inlined_call_operand.vmem [shape: f32[128,128], index: 6, kind: input, shape index: {}]
  %s7 = inlined_call_operand.vmem [shape: bf16[2,32,96], index: 7, kind: input, shape index: {}]
  %s8 = inlined_call_operand.vmem [shape: f32[2,1,96], index: 8, kind: input, shape index: {}]
  %s9 = inlined_call_operand.vmem [shape: bf16[2,32,32], index: 9, kind: input, shape index: {}]
  %s10 = inlined_call_operand.vmem [shape: bf16[2,32,128], index: 10, kind: input, shape index: {}]
  %s11 = inlined_call_operand.vmem [shape: f32[2,1,128], index: 11, kind: input, shape index: {}]
  %s12 = inlined_call_operand.vmem [shape: bf16[2,128,32], index: 12, kind: input, shape index: {}]
  %s13 = inlined_call_operand.vmem [shape: f32[2,6,32], index: 13, kind: input, shape index: {}]
  %s14 = inlined_call_operand.vmem [shape: bf16[32,16], index: 14, kind: input, shape index: {}]
  %s15 = inlined_call_operand.vmem [shape: f32[1,16], index: 15, kind: input, shape index: {}]
  %s16 = inlined_call_operand.vmem [shape: f32[1,16], index: 16, kind: input, shape index: {}]
  %s17 = inlined_call_operand.<no memory space> [shape: f32[1,1], index: 17, kind: input, shape index: {}]
  %s18 = inlined_call_operand.vmem [shape: f32[2,1], index: 18, kind: output, shape index: {}]
  %s19 = sld [smem:[#allocation0]]
  $region82: #{rr_transformer_forward.1} parent=0
    _
  %s21 = ssub.s32 1, %s19
  %s22 = scalar_select 0, %s21, %s19
  %v23 = vstv %s17
  %24 = vst [vmem:[#allocation2] sm:$0x1] %v23
  // Predicated region
  $region2: #{rr_transformer_forward.1} parent=0 // pred_check
    _
  $region3: #{rr_transformer_forward.1} parent=0 // pred_check_branch
    %26 = sbr.rel (0) target = $region5
  $region4: #{rr_transformer_forward.1} parent=0 // pred_region
    _
  $region5: #{rr_transformer_forward.1} parent=0 // pred_fallthru
    _
  // Predicated region
  $region6: #{rr_transformer_forward.1} parent=0 // pred_check
    _
  $region7: #{rr_transformer_forward.1} parent=0 // pred_check_branch
    %28 = sbr.rel (0) target = $region9
  $region8: #{rr_transformer_forward.1} parent=0 // pred_region
    _
  $region9: #{rr_transformer_forward.1} parent=0 // pred_fallthru
    _
  // Predicated region
  $region10: #{rr_transformer_forward.1} parent=0 // pred_check
    _
  $region11: #{rr_transformer_forward.1} parent=0 // pred_check_branch
    %30 = sbr.rel (0) target = $region13
  $region12: #{rr_transformer_forward.1} parent=0 // pred_region
    _
  $region13: #{rr_transformer_forward.1} parent=0 // pred_fallthru
    _
  // Predicated region
  $region14: #{rr_transformer_forward.1} parent=0 // pred_check
    _
  $region15: #{rr_transformer_forward.1} parent=0 // pred_check_branch
    %32 = sbr.rel (0) target = $region17
  $region16: #{rr_transformer_forward.1} parent=0 // pred_region
    _
  $region17: #{rr_transformer_forward.1} parent=0 // pred_fallthru
    _
  // Predicated region
  $region18: #{rr_transformer_forward.1} parent=0 // pred_check
    _
  $region19: #{rr_transformer_forward.1} parent=0 // pred_check_branch
    %34 = sbr.rel (0) target = $region21
  $region20: #{rr_transformer_forward.1} parent=0 // pred_region
    _
  $region21: #{rr_transformer_forward.1} parent=0 // pred_fallthru
    _
  // Predicated region
  $region22: #{rr_transformer_forward.1} parent=0 // pred_check
    _
  $region23: #{rr_transformer_forward.1} parent=0 // pred_check_branch
    %36 = sbr.rel (0) target = $region25
  $region24: #{rr_transformer_forward.1} parent=0 // pred_region
    _
  $region25: #{rr_transformer_forward.1} parent=0 // pred_fallthru
    _
  // Predicated region
  $region26: #{rr_transformer_forward.1} parent=0 // pred_check
    _
  $region27: #{rr_transformer_forward.1} parent=0 // pred_check_branch
    %38 = sbr.rel (0) target = $region29
  $region28: #{rr_transformer_forward.1} parent=0 // pred_region
    _
  $region29: #{rr_transformer_forward.1} parent=0 // pred_fallthru
    _
  // Predicated region
  $region30: #{rr_transformer_forward.1} parent=0 // pred_check
    _
  $region31: #{rr_transformer_forward.1} parent=0 // pred_check_branch
    %40 = sbr.rel (0) target = $region33
  $region32: #{rr_transformer_forward.1} parent=0 // pred_region
    _
  $region33: #{rr_transformer_forward.1} parent=0 // pred_fallthru
    _
  // Predicated region
  $region34: #{rr_transformer_forward.1} parent=0 // pred_check
    _
  $region35: #{rr_transformer_forward.1} parent=0 // pred_check_branch
    %42 = sbr.rel (0) target = $region37
  $region36: #{rr_transformer_forward.1} parent=0 // pred_region
    _
  $region37: #{rr_transformer_forward.1} parent=0 // pred_fallthru
    _
  // Predicated region
  $region38: #{rr_transformer_forward.1} parent=0 // pred_check
    _
  $region39: #{rr_transformer_forward.1} parent=0 // pred_check_branch
    %44 = sbr.rel (0) target = $region41
  $region40: #{rr_transformer_forward.1} parent=0 // pred_region
    _
  $region41: #{rr_transformer_forward.1} parent=0 // pred_fallthru
    _
  // Predicated region
  $region42: #{rr_transformer_forward.1} parent=0 // pred_check
    _
  $region43: #{rr_transformer_forward.1} parent=0 // pred_check_branch
    %46 = sbr.rel (0) target = $region45
  $region44: #{rr_transformer_forward.1} parent=0 // pred_region
    _
  $region45: #{rr_transformer_forward.1} parent=0 // pred_fallthru
    _
  // Predicated region
  $region46: #{rr_transformer_forward.1} parent=0 // pred_check
    _
  $region47: #{rr_transformer_forward.1} parent=0 // pred_check_branch
    %48 = sbr.rel (0) target = $region49
  $region48: #{rr_transformer_forward.1} parent=0 // pred_region
    _
  $region49: #{rr_transformer_forward.1} parent=0 // pred_fallthru
    _
  // Predicated region
  $region50: #{rr_transformer_forward.1} parent=0 // pred_check
    _
  $region51: #{rr_transformer_forward.1} parent=0 // pred_check_branch
    %50 = sbr.rel (0) target = $region53
  $region52: #{rr_transformer_forward.1} parent=0 // pred_region
    _
  $region53: #{rr_transformer_forward.1} parent=0 // pred_fallthru
    _
  // Predicated region
  $region54: #{rr_transformer_forward.1} parent=0 // pred_check
    _
  $region55: #{rr_transformer_forward.1} parent=0 // pred_check_branch
    %52 = sbr.rel (0) target = $region57
  $region56: #{rr_transformer_forward.1} parent=0 // pred_region
    _
  $region57: #{rr_transformer_forward.1} parent=0 // pred_fallthru
    _
  // Predicated region
  $region58: #{rr_transformer_forward.1} parent=0 // pred_check
    _
  $region59: #{rr_transformer_forward.1} parent=0 // pred_check_branch
    %54 = sbr.rel (0) target = $region61
  $region60: #{rr_transformer_forward.1} parent=0 // pred_region
    _
  $region61: #{rr_transformer_forward.1} parent=0 // pred_fallthru
    _
  // Predicated region
  $region62: #{rr_transformer_forward.1} parent=0 // pred_check
    _
  $region63: #{rr_transformer_forward.1} parent=0 // pred_check_branch
    %56 = sbr.rel (0) target = $region65
  $region64: #{rr_transformer_forward.1} parent=0 // pred_region
    _
  $region65: #{rr_transformer_forward.1} parent=0 // pred_fallthru
    _
  // Predicated region
  $region66: #{rr_transformer_forward.1} parent=0 // pred_check
    _
  $region67: #{rr_transformer_forward.1} parent=0 // pred_check_branch
    %58 = sbr.rel (0) target = $region69
  $region68: #{rr_transformer_forward.1} parent=0 // pred_region
    _
  $region69: #{rr_transformer_forward.1} parent=0 // pred_fallthru
    _
  // Predicated region
  $region70: #{rr_transformer_forward.1} parent=0 // pred_check
    _
  $region71: #{rr_transformer_forward.1} parent=0 // pred_check_branch
    %60 = sbr.rel (0) target = $region73
  $region72: #{rr_transformer_forward.1} parent=0 // pred_region
    _
  $region73: #{rr_transformer_forward.1} parent=0 // pred_fallthru
    _
  %v62 = vld [vmem:[%s0] sm:$0xf]
  %v63 = vld [vmem:[%s0 + $0x4] sm:$0xf]
  %v64 = vld [vmem:[%s0 + $0x8] sm:$0xf]
  %v65 = vld [vmem:[%s0 + $0xc] sm:$0xf]
  %v66 = vld [vmem:[%s1] sm:$0xf]
  %v67 = vld [vmem:[%s1 + $0x4] sm:$0xf]
  %v68 = vld [vmem:[%s1 + $0x8] sm:$0xf]
  %v69 = vld [vmem:[%s1 + $0xc] sm:$0xf]
  %v70 = vld [vmem:[%s1 + $0x10] sm:$0xf]
  %v71 = vld [vmem:[%s1 + $0x14] sm:$0xf]
  %v72 = vld [vmem:[%s1 + $0x18] sm:$0xf]
  %v73 = vld [vmem:[%s2] sm:$0xff]
  %v74 = vld [vmem:[%s2 + $0x8] sm:$0xff]
  %v79 = vunpack.c.l.b16 %v62
  %v80 = vunpack.c.l.b16 %v63
  %v81 = vunpack.c.l.b16 %v64
  %v82 = vunpack.c.l.b16 %v65
  %v83 = vpack.c.b16 %v80, %v79
  %v84 = vpack.c.b16 %v82, %v81
  %v92 = vunpack.c.l.b16 %v66
  %v93 = vunpack.c.l.b16 %v67
  %v94 = vunpack.c.l.b16 %v68
  %v95 = vunpack.c.l.b16 %v69
  %v96 = vunpack.c.l.b16 %v70
  %v97 = vunpack.c.l.b16 %v71
  %v98 = vunpack.c.l.b16 %v72
  %v99 = vpack.c.b16 %v93, %v92
  %v100 = vpack.c.b16 %v95, %v94
  %v101 = vpack.c.b16 %v97, %v96
  %v102 = vpack.c.b16 %v98, %v98
  %vm106 = vcmask 457728
  %v108 = vsel %vm106, %v83, 0
  %v111 = vsel %vm106, %v84, 0
  %vm113 = vcmask 1043456
  %v115 = vsel %vm113, %v102, 0
  %117 = vmatprep.subr.bf16.mxu0 0
  %118 = vmatpush1.bf16.msra.mxu0 %v99
  %119 = vmatprep.subr.bf16.mxu0 0
  %120 = vmatpush1.bf16.msra.mxu0 %v100
  %121 = vmatprep.subr.bf16.mxu0 0
  %122 = vmatpush1.bf16.msra.mxu0 %v101
  %123 = vmatprep.subr.bf16.mxu0 0
  %124 = vmatpush1.bf16.msra.mxu0 %v115
  %125 = vmatprep.subr.bf16.mxu0 0
  %126 = vmatpush1.bf16.msra.mxu0 0
  %127 = vmatprep.subr.bf16.mxu0 0
  %128 = vmatpush1.bf16.msra.mxu0 0
  %129 = vmatprep.subr.bf16.mxu0 0
  %130 = vmatpush1.bf16.msra.mxu0 0
  %131 = vmatprep.subr.bf16.mxu0 0
  %132 = vmatpush1.bf16.msra.mxu0 0
  %133 = vmatprep.subr.bf16.mxu0 0
  %134 = vmatpush1.bf16.msra.mxu0 0
  %135 = vmatprep.subr.bf16.mxu0 0
  %136 = vmatpush1.bf16.msra.mxu0 0
  %137 = vmatprep.subr.bf16.mxu0 0
  %138 = vmatpush1.bf16.msra.mxu0 0
  %139 = vmatprep.subr.bf16.mxu0 0
  %140 = vmatpush1.bf16.msra.mxu0 0
  %141 = vmatprep.subr.bf16.mxu0 0
  %142 = vmatpush1.bf16.msra.mxu0 0
  %143 = vmatprep.subr.bf16.mxu0 0
  %144 = vmatpush1.bf16.msra.mxu0 0
  %145 = vmatprep.subr.bf16.mxu0 0
  %146 = vmatpush1.bf16.msra.mxu0 0
  %147 = vmatprep.subr.bf16.mxu0 0
  %148 = vmatpush1.bf16.msra.mxu0 0
  %149 = vmatprep.mubr.bf16.mxu0 0
  %150 = vmatmul.mubr.bf16.gmra.mrb[0].mxu0 %v108
  %v151 = vpop.f32.mrb[0].mxu0
  %v152 = vadd.f32 %v73, %v151
  %v153 = vpop.f32.mrb[0].mxu0
  %v154 = vpop.f32.mrb[0].mxu0
  %v155 = vadd.f32 %v74, %v154
  %v156 = vpop.f32.mrb[0].mxu0
  %157 = vmatprep.mubr.bf16.mxu0 0
  %158 = vmatmul.mubr.bf16.gmra.mrb[0].mxu0 %v111
  %v159 = vpop.f32.mrb[0].mxu0
  %v160 = vadd.f32 %v73, %v159
  %v161 = vpop.f32.mrb[0].mxu0
  %v162 = vpop.f32.mrb[0].mxu0
  %v163 = vadd.f32 %v74, %v162
  %v164 = vpop.f32.mrb[0].mxu0
  %165 = vdwg.mxu0
  %v166 = vld [vmem:[%s3] sm:$0x1]
  %v168 = vlaneseq
  %v169 = vshrl.u32 %v168, 7
  %v170 = vsub.s32 0, %v169
  %v171 = vrot.slane %v166, %v170
  %v173 = vadd.f32 %v152, %v171
  %v174 = vadd.f32 %v155, %v171
  %v175 = vadd.f32 %v160, %v171
  %v176 = vadd.f32 %v163, %v171
  %v177 = vld [vmem:[%s4] sm:$0xf]
  %v178 = vld [vmem:[%s4 + $0x4] sm:$0xf]
  %v179 = vld [vmem:[%s4 + $0x8] sm:$0xf]
  %v180 = vld [vmem:[%s4 + $0xc] sm:$0xf]
  %v181 = vld [vmem:[%s4 + $0x10] sm:$0xf]
  %v182 = vld [vmem:[%s4 + $0x14] sm:$0xf]
  %v183 = vld [vmem:[%s4 + $0x18] sm:$0xf]
  %v184 = vld [vmem:[%s4 + $0x1c] sm:$0xf]
  %v185 = vld [vmem:[%s4 + $0x20] sm:$0xf]
  %v186 = vld [vmem:[%s4 + $0x24] sm:$0xf]
  %v187 = vld [vmem:[%s4 + $0x28] sm:$0xf]
  %v188 = vld [vmem:[%s4 + $0x2c] sm:$0xf]
  %v189 = vld [vmem:[%s4 + $0x30] sm:$0xf]
  %v190 = vld [vmem:[%s4 + $0x34] sm:$0xf]
  %v191 = vld [vmem:[%s4 + $0x38] sm:$0xf]
  %v192 = vld [vmem:[%s4 + $0x3c] sm:$0xf]
  %v193 = vld [vmem:[%s5] sm:$0xff]
  %v194 = vld [vmem:[%s5 + $0x8] sm:$0xff]
  %v195 = vld [vmem:[%s5 + $0x10] sm:$0xff]
  %v196 = vld [vmem:[%s5 + $0x18] sm:$0xff]
  %v197 = vld [vmem:[%s6] sm:$0xff]
  %v198 = vld [vmem:[%s6 + $0x8] sm:$0xff]
  %v199 = vld [vmem:[%s6 + $0x10] sm:$0xff]
  %v200 = vld [vmem:[%s6 + $0x18] sm:$0xff]
  %v201 = vld [vmem:[%s6 + $0x20] sm:$0xff]
  %v202 = vld [vmem:[%s6 + $0x28] sm:$0xff]
  %v203 = vld [vmem:[%s6 + $0x30] sm:$0xff]
  %v204 = vld [vmem:[%s6 + $0x38] sm:$0xff]
  %v205 = vld [vmem:[%s6 + $0x40] sm:$0xff]
  %v206 = vld [vmem:[%s6 + $0x48] sm:$0xff]
  %v207 = vld [vmem:[%s6 + $0x50] sm:$0xff]
  %v208 = vld [vmem:[%s6 + $0x58] sm:$0xff]
  %v209 = vld [vmem:[%s6 + $0x60] sm:$0xff]
  %v210 = vld [vmem:[%s6 + $0x68] sm:$0xff]
  %v211 = vld [vmem:[%s6 + $0x70] sm:$0xff]
  %v212 = vld [vmem:[%s6 + $0x78] sm:$0xff]
  %v213 = vsub.f32 %v193, 1.0
  %v214 = vsub.f32 %v194, 1.0
  %v215 = vsub.f32 %v195, 1.0
  %v216 = vsub.f32 %v196, 1.0
  %v217 = vmul.f32 %v213, 1e+09
  %v218 = vmul.f32 %v214, 1e+09
  %v219 = vmul.f32 %v215, 1e+09
  %v220 = vmul.f32 %v216, 1e+09
  %v221 = vld [vmem:[%s13] sm:$0x3f]
  %vm222 = vcmask 261120
  %v223 = vsel %vm222, %v173, 0.0
  %224 = vadd.xlane.f32.xlu0 %v223
  %v225 = vpop.xlane.xlu0 %224
  %v226 = vsel %vm222, %v174, 0.0
  %227 = vadd.xlane.f32.xlu0 %v226
  %v228 = vpop.xlane.xlu0 %227
  %v229 = vsel %vm222, %v175, 0.0
  %230 = vadd.xlane.f32.xlu0 %v229
  %v231 = vpop.xlane.xlu0 %230
  %v232 = vsel %vm222, %v176, 0.0
  %233 = vadd.xlane.f32.xlu0 %v232
  %v234 = vpop.xlane.xlu0 %233
  %v235 = vrcp.pop 32.0
  %v236 = vmul.f32 %v225, %v235
  %v237 = vmul.f32 %v228, %v235
  %v238 = vmul.f32 %v231, %v235
  %v239 = vmul.f32 %v234, %v235
  %v240 = vsub.f32 %v173, %v236
  %v241 = vsub.f32 %v174, %v237
  %v242 = vsub.f32 %v175, %v238
  %v243 = vsub.f32 %v176, %v239
  %v244 = vmul.f32 %v240, %v240
  %v245 = vmul.f32 %v241, %v241
  %v246 = vmul.f32 %v242, %v242
  %v247 = vmul.f32 %v243, %v243
  %v248 = vsel %vm222, %v244, 0.0
  %249 = vadd.xlane.f32.xlu0 %v248
  %v250 = vpop.xlane.xlu0 %249
  %v251 = vsel %vm222, %v245, 0.0
  %252 = vadd.xlane.f32.xlu0 %v251
  %v253 = vpop.xlane.xlu0 %252
  %v254 = vsel %vm222, %v246, 0.0
  %255 = vadd.xlane.f32.xlu0 %v254
  %v256 = vpop.xlane.xlu0 %255
  %v257 = vsel %vm222, %v247, 0.0
  %258 = vadd.xlane.f32.xlu0 %v257
  %v259 = vpop.xlane.xlu0 %258
  %v260 = vmul.f32 %v250, %v235
  %v261 = vmul.f32 %v253, %v235
  %v262 = vmul.f32 %v256, %v235
  %v263 = vmul.f32 %v259, %v235
  %v264 = vadd.f32 %v260, 1e-05
  %v265 = vadd.f32 %v261, 1e-05
  %v266 = vadd.f32 %v262, 1e-05
  %v267 = vadd.f32 %v263, 1e-05
  %v268 = vrsqrt.pop %v264
  %v269 = vrsqrt.pop %v265
  %v270 = vrsqrt.pop %v266
  %v271 = vrsqrt.pop %v267
  %v272 = vmul.f32 %v240, %v268
  %v273 = vmul.f32 %v241, %v269
  %v274 = vmul.f32 %v242, %v270
  %v275 = vmul.f32 %v243, %v271
  %v276 = vlaneseq
  %v277 = vshrl.u32 %v276, 7
  %v278 = vsub.s32 0, %v277
  %v279 = vrot.slane %v221, %v278
  %v280 = vmul.f32 %v272, %v279
  %v281 = vmul.f32 %v273, %v279
  %v282 = vmul.f32 %v274, %v279
  %v283 = vmul.f32 %v275, %v279
  %v284 = vlaneseq
  %v285 = vshrl.u32 %v284, 7
  %v286 = vsub.s32 1, %v285
  %v287 = vrot.slane %v221, %v286
  %v288 = vadd.f32 %v280, %v287
  %v289 = vadd.f32 %v281, %v287
  %v290 = vadd.f32 %v282, %v287
  %v291 = vadd.f32 %v283, %v287
  %v292 = vpack.c.bf16 %v289, %v288
  %v293 = vpack.c.bf16 %v291, %v290
  %v294 = vld [vmem:[%s7] sm:$0xf]
  %v295 = vld [vmem:[%s7 + $0x4] sm:$0xf]
  %v296 = vld [vmem:[%s7 + $0x8] sm:$0xf]
  %v297 = vld [vmem:[%s7 + $0xc] sm:$0xf]
  %v298 = vld [vmem:[%s8] sm:$0x1]
  %v300 = vlaneseq
  %v301 = vshrl.u32 %v300, 7
  %v302 = vsub.s32 0, %v301
  %v303 = vrot.slane %v298, %v302
  %v309 = vunpack.c.l.b16 %v294
  %v310 = vunpack.c.l.b16 %v295
  %v311 = vunpack.c.l.b16 %v296
  %v312 = vunpack.c.l.b16 %v297
  %v313 = vpack.c.b16 %v310, %v309
  %v314 = vpack.c.b16 %v312, %v311
  %v318 = vsel %vm222, %v292, 0
  %v321 = vsel %vm222, %v293, 0
  %323 = vmatprep.subr.bf16.mxu0 0
  %324 = vmatpush1.bf16.msra.mxu0 %v313
  %325 = vmatprep.subr.bf16.mxu0 0
  %326 = vmatpush1.bf16.msra.mxu0 %v314
  %327 = vmatprep.subr.bf16.mxu0 0
  %328 = vmatpush1.bf16.msra.mxu0 0
  %329 = vmatprep.subr.bf16.mxu0 0
  %330 = vmatpush1.bf16.msra.mxu0 0
  %331 = vmatprep.subr.bf16.mxu0 0
  %332 = vmatpush1.bf16.msra.mxu0 0
  %333 = vmatprep.subr.bf16.mxu0 0
  %334 = vmatpush1.bf16.msra.mxu0 0
  %335 = vmatprep.subr.bf16.mxu0 0
  %336 = vmatpush1.bf16.msra.mxu0 0
  %337 = vmatprep.subr.bf16.mxu0 0
  %338 = vmatpush1.bf16.msra.mxu0 0
  %339 = vmatprep.subr.bf16.mxu0 0
  %340 = vmatpush1.bf16.msra.mxu0 0
  %341 = vmatprep.subr.bf16.mxu0 0
  %342 = vmatpush1.bf16.msra.mxu0 0
  %343 = vmatprep.subr.bf16.mxu0 0
  %344 = vmatpush1.bf16.msra.mxu0 0
  %345 = vmatprep.subr.bf16.mxu0 0
  %346 = vmatpush1.bf16.msra.mxu0 0
  %347 = vmatprep.subr.bf16.mxu0 0
  %348 = vmatpush1.bf16.msra.mxu0 0
  %349 = vmatprep.subr.bf16.mxu0 0
  %350 = vmatpush1.bf16.msra.mxu0 0
  %351 = vmatprep.subr.bf16.mxu0 0
  %352 = vmatpush1.bf16.msra.mxu0 0
  %353 = vmatprep.subr.bf16.mxu0 0
  %354 = vmatpush1.bf16.msra.mxu0 0
  %355 = vmatprep.mubr.bf16.mxu0 0
  %356 = vmatmul.mubr.bf16.gmra.mrb[0].mxu0 %v318
  %v357 = vpop.f32.mrb[0].mxu0
  %v358 = vadd.f32 %v303, %v357
  %v359 = vpop.f32.mrb[0].mxu0
  %v360 = vpop.f32.mrb[0].mxu0
  %v361 = vadd.f32 %v303, %v360
  %v362 = vpop.f32.mrb[0].mxu0
  %363 = vmatprep.mubr.bf16.mxu0 0
  %364 = vmatmul.mubr.bf16.gmra.mrb[0].mxu0 %v321
  %v365 = vpop.f32.mrb[0].mxu0
  %v366 = vadd.f32 %v303, %v365
  %v367 = vpop.f32.mrb[0].mxu0
  %v368 = vpop.f32.mrb[0].mxu0
  %v369 = vadd.f32 %v303, %v368
  %v370 = vpop.f32.mrb[0].mxu0
  %371 = vdwg.mxu0
  %v372 = vpack.c.bf16 %v361, %v358
  %v373 = vpack.c.bf16 %v369, %v366
  %v390 = vunpack.c.l.b16 %v177
  %v391 = vunpack.c.l.b16 %v178
  %v392 = vunpack.c.l.b16 %v179
  %v393 = vunpack.c.l.b16 %v180
  %v394 = vunpack.c.l.b16 %v181
  %v395 = vunpack.c.l.b16 %v182
  %v396 = vunpack.c.l.b16 %v183
  %v397 = vunpack.c.l.b16 %v184
  %v398 = vunpack.c.l.b16 %v185
  %v399 = vunpack.c.l.b16 %v186
  %v400 = vunpack.c.l.b16 %v187
  %v401 = vunpack.c.l.b16 %v188
  %v402 = vunpack.c.l.b16 %v189
  %v403 = vunpack.c.l.b16 %v190
  %v404 = vunpack.c.l.b16 %v191
  %v405 = vunpack.c.l.b16 %v192
  %v406 = vpack.c.b16 %v391, %v390
  %v407 = vpack.c.b16 %v393, %v392
  %v408 = vpack.c.b16 %v395, %v394
  %v409 = vpack.c.b16 %v397, %v396
  %v410 = vpack.c.b16 %v399, %v398
  %v411 = vpack.c.b16 %v401, %v400
  %v412 = vpack.c.b16 %v403, %v402
  %v413 = vpack.c.b16 %v405, %v404
  %414 = vrot.lane.b32.xlu0 %v406, 32
  %v415 = vpop.permute.xlu0 %414
  %416 = vrot.lane.b32.xlu0 %v407, 32
  %v417 = vpop.permute.xlu0 %416
  %418 = vrot.lane.b32.xlu0 %v408, 32
  %v419 = vpop.permute.xlu0 %418
  %420 = vrot.lane.b32.xlu0 %v409, 32
  %v421 = vpop.permute.xlu0 %420
  %422 = vrot.lane.b32.xlu0 %v410, 32
  %v423 = vpop.permute.xlu0 %422
  %424 = vrot.lane.b32.xlu0 %v411, 32
  %v425 = vpop.permute.xlu0 %424
  %426 = vrot.lane.b32.xlu0 %v412, 32
  %v427 = vpop.permute.xlu0 %426
  %428 = vrot.lane.b32.xlu0 %v413, 32
  %v429 = vpop.permute.xlu0 %428
  %v438 = vmul.bf16 %v372, %v415
  %v439 = vmul.bf16 %v373, %v417
  %v440 = vmul.bf16 %v372, %v419
  %v441 = vmul.bf16 %v373, %v421
  %v442 = vmul.bf16 %v372, %v423
  %v443 = vmul.bf16 %v373, %v425
  %v444 = vmul.bf16 %v372, %v427
  %v445 = vmul.bf16 %v373, %v429
  %446 = vrot.lane.b32.xlu0 %v406, 64
  %v447 = vpop.permute.xlu0 %446
  %448 = vrot.lane.b32.xlu0 %v407, 64
  %v449 = vpop.permute.xlu0 %448
  %450 = vrot.lane.b32.xlu0 %v408, 64
  %v451 = vpop.permute.xlu0 %450
  %452 = vrot.lane.b32.xlu0 %v409, 64
  %v453 = vpop.permute.xlu0 %452
  %454 = vrot.lane.b32.xlu0 %v410, 64
  %v455 = vpop.permute.xlu0 %454
  %456 = vrot.lane.b32.xlu0 %v411, 64
  %v457 = vpop.permute.xlu0 %456
  %458 = vrot.lane.b32.xlu0 %v412, 64
  %v459 = vpop.permute.xlu0 %458
  %460 = vrot.lane.b32.xlu0 %v413, 64
  %v461 = vpop.permute.xlu0 %460
  %v470 = vmul.bf16 %v372, %v447
  %v471 = vmul.bf16 %v373, %v449
  %v472 = vmul.bf16 %v372, %v451
  %v473 = vmul.bf16 %v373, %v453
  %v474 = vmul.bf16 %v372, %v455
  %v475 = vmul.bf16 %v373, %v457
  %v476 = vmul.bf16 %v372, %v459
  %v477 = vmul.bf16 %v373, %v461
  %486 = vrot.lane.b32.xlu0 %v438, 96
  %v487 = vpop.permute.xlu0 %486
  %488 = vrot.lane.b32.xlu0 %v439, 96
  %v489 = vpop.permute.xlu0 %488
  %490 = vrot.lane.b32.xlu0 %v440, 96
  %v491 = vpop.permute.xlu0 %490
  %492 = vrot.lane.b32.xlu0 %v441, 96
  %v493 = vpop.permute.xlu0 %492
  %494 = vrot.lane.b32.xlu0 %v442, 96
  %v495 = vpop.permute.xlu0 %494
  %496 = vrot.lane.b32.xlu0 %v443, 96
  %v497 = vpop.permute.xlu0 %496
  %498 = vrot.lane.b32.xlu0 %v444, 96
  %v499 = vpop.permute.xlu0 %498
  %500 = vrot.lane.b32.xlu0 %v445, 96
  %v501 = vpop.permute.xlu0 %500
  %v503 = vsel %vm222, %v372, 0
  %v506 = vsel %vm222, %v373, 0
  %v509 = vsel %vm222, %v487, 0
  %v512 = vsel %vm222, %v489, 0
  %v515 = vsel %vm222, %v491, 0
  %v518 = vsel %vm222, %v493, 0
  %v521 = vsel %vm222, %v495, 0
  %v524 = vsel %vm222, %v497, 0
  %v527 = vsel %vm222, %v499, 0
  %v530 = vsel %vm222, %v501, 0
  %532 = vmatprep.subr.bf16.mxu0 0
  %533 = vmatpush1.bf16.xpose.msra.mxu0 %v509
  %534 = vmatprep.subr.bf16.mxu0 0
  %535 = vmatpush1.bf16.xpose.msra.mxu0 %v512
  %536 = vmatprep.subr.bf16.mxu0 0
  %537 = vmatpush1.bf16.xpose.msra.mxu0 %v515
  %538 = vmatprep.subr.bf16.mxu0 0
  %539 = vmatpush1.bf16.xpose.msra.mxu0 %v518
  %540 = vmatprep.subr.bf16.mxu0 0
  %541 = vmatpush1.bf16.xpose.msra.mxu0 %v521
  %542 = vmatprep.subr.bf16.mxu0 0
  %543 = vmatpush1.bf16.xpose.msra.mxu0 %v524
  %544 = vmatprep.subr.bf16.mxu0 0
  %545 = vmatpush1.bf16.xpose.msra.mxu0 %v527
  %546 = vmatprep.subr.bf16.mxu0 0
  %547 = vmatpush1.bf16.xpose.msra.mxu0 %v530
  %548 = vmatprep.subr.bf16.mxu0 0
  %549 = vmatpush1.bf16.xpose.msra.mxu0 0
  %550 = vmatprep.subr.bf16.mxu0 0
  %551 = vmatpush1.bf16.xpose.msra.mxu0 0
  %552 = vmatprep.subr.bf16.mxu0 0
  %553 = vmatpush1.bf16.xpose.msra.mxu0 0
  %554 = vmatprep.subr.bf16.mxu0 0
  %555 = vmatpush1.bf16.xpose.msra.mxu0 0
  %556 = vmatprep.subr.bf16.mxu0 0
  %557 = vmatpush1.bf16.xpose.msra.mxu0 0
  %558 = vmatprep.subr.bf16.mxu0 0
  %559 = vmatpush1.bf16.xpose.msra.mxu0 0
  %560 = vmatprep.subr.bf16.mxu0 0
  %561 = vmatpush1.bf16.xpose.msra.mxu0 0
  %562 = vmatprep.subr.bf16.mxu0 0
  %563 = vmatpush1.bf16.xpose.msra.mxu0 0
  %564 = vmatprep.mubr.bf16.mxu0 0
  %565 = vmatmul.mubr.bf16.gmra.mrb[0].mxu0 %v503
  %v566 = vpop.f32.mrb[0].mxu0
  %v567 = vadd.f32 %v217, %v566
  %v568 = vpop.f32.mrb[0].mxu0
  %v569 = vpop.f32.mrb[0].mxu0
  %v570 = vadd.f32 %v218, %v569
  %v571 = vpop.f32.mrb[0].mxu0
  %572 = vmatprep.mubr.bf16.mxu0 0
  %573 = vmatmul.mubr.bf16.gmra.mrb[0].mxu0 %v506
  %v574 = vpop.f32.mrb[0].mxu0
  %v575 = vadd.f32 %v219, %v574
  %v576 = vpop.f32.mrb[0].mxu0
  %v577 = vpop.f32.mrb[0].mxu0
  %v578 = vadd.f32 %v220, %v577
  %v579 = vpop.f32.mrb[0].mxu0
  %580 = vdwg.mxu0
  %581 = vmax.xlane.f32.xlu0 %v567
  %v582 = vpop.xlane.xlu0 %581
  %583 = vmax.xlane.f32.xlu0 %v570
  %v584 = vpop.xlane.xlu0 %583
  %585 = vmax.xlane.f32.xlu0 %v575
  %v586 = vpop.xlane.xlu0 %585
  %587 = vmax.xlane.f32.xlu0 %v578
  %v588 = vpop.xlane.xlu0 %587
  %v589 = vsub.f32 %v567, %v582
  %v590 = vsub.f32 %v570, %v584
  %v591 = vsub.f32 %v575, %v586
  %v592 = vsub.f32 %v578, %v588
  %v593 = vmul.f32 %v589, 1.442695
  %v594 = vpow.pop %v593
  %v595 = vmul.f32 %v590, 1.442695
  %v596 = vpow.pop %v595
  %v597 = vmul.f32 %v591, 1.442695
  %v598 = vpow.pop %v597
  %v599 = vmul.f32 %v592, 1.442695
  %v600 = vpow.pop %v599
  %v601 = vmul.f32 %v594, %v193
  %v602 = vmul.f32 %v596, %v194
  %v603 = vmul.f32 %v598, %v195
  %v604 = vmul.f32 %v600, %v196
  %605 = vmatprep.subr.mxu0 0.0
  %606 = vmatpush1.msra.mxu0 %v197
  %607 = vmatprep.subr.mxu0 0.0
  %608 = vmatpush1.msra.mxu0 %v198
  %609 = vmatprep.subr.mxu0 0.0
  %610 = vmatpush1.msra.mxu0 %v199
  %611 = vmatprep.subr.mxu0 0.0
  %612 = vmatpush1.msra.mxu0 %v200
  %613 = vmatprep.subr.mxu0 0.0
  %614 = vmatpush1.msra.mxu0 %v201
  %615 = vmatprep.subr.mxu0 0.0
  %616 = vmatpush1.msra.mxu0 %v202
  %617 = vmatprep.subr.mxu0 0.0
  %618 = vmatpush1.msra.mxu0 %v203
  %619 = vmatprep.subr.mxu0 0.0
  %620 = vmatpush1.msra.mxu0 %v204
  %621 = vmatprep.subr.mxu0 0.0
  %622 = vmatpush1.msra.mxu0 %v205
  %623 = vmatprep.subr.mxu0 0.0
  %624 = vmatpush1.msra.mxu0 %v206
  %625 = vmatprep.subr.mxu0 0.0
  %626 = vmatpush1.msra.mxu0 %v207
  %627 = vmatprep.subr.mxu0 0.0
  %628 = vmatpush1.msra.mxu0 %v208
  %629 = vmatprep.subr.mxu0 0.0
  %630 = vmatpush1.msra.mxu0 %v209
  %631 = vmatprep.subr.mxu0 0.0
  %632 = vmatpush1.msra.mxu0 %v210
  %633 = vmatprep.subr.mxu0 0.0
  %634 = vmatpush1.msra.mxu0 %v211
  %635 = vmatprep.subr.mxu0 0.0
  %636 = vmatpush1.msra.mxu0 %v212
  %637 = vmatprep.subr.mxu0 0.0
  %638 = vmatpush1.msra.mxu0 0.0
  %639 = vmatprep.subr.mxu0 0.0
  %640 = vmatpush1.msra.mxu0 0.0
  %641 = vmatprep.subr.mxu0 0.0
  %642 = vmatpush1.msra.mxu0 0.0
  %643 = vmatprep.subr.mxu0 0.0
  %644 = vmatpush1.msra.mxu0 0.0
  %645 = vmatprep.subr.mxu0 0.0
  %646 = vmatpush1.msra.mxu0 0.0
  %647 = vmatprep.subr.mxu0 0.0
  %648 = vmatpush1.msra.mxu0 0.0
  %649 = vmatprep.subr.mxu0 0.0
  %650 = vmatpush1.msra.mxu0 0.0
  %651 = vmatprep.subr.mxu0 0.0
  %652 = vmatpush1.msra.mxu0 0.0
  %653 = vmatprep.subr.mxu0 0.0
  %654 = vmatpush1.msra.mxu0 0.0
  %655 = vmatprep.subr.mxu0 0.0
  %656 = vmatpush1.msra.mxu0 0.0
  %657 = vmatprep.subr.mxu0 0.0
  %658 = vmatpush1.msra.mxu0 0.0
  %659 = vmatprep.subr.mxu0 0.0
  %660 = vmatpush1.msra.mxu0 0.0
  %661 = vmatprep.subr.mxu0 0.0
  %662 = vmatpush1.msra.mxu0 0.0
  %663 = vmatprep.subr.mxu0 0.0
  %664 = vmatpush1.msra.mxu0 0.0
  %665 = vmatprep.subr.mxu0 0.0
  %666 = vmatpush1.msra.mxu0 0.0
  %667 = vmatprep.subr.mxu0 0.0
  %668 = vmatpush1.msra.mxu0 0.0
  %669 = vmatprep.mubr.f32.mxu0 0.0
  %670 = vmatmul.mubr.f32.gmra.mrb[0].mxu0 %v594
  %v671 = vpop.f32.mrb[0].mxu0
  %v672 = vadd.f32 1e-30, %v671
  %v673 = vpop.f32.mrb[0].mxu0
  %674 = vmatprep.mubr.f32.mxu0 0.0
  %675 = vmatmul.mubr.f32.gmra.mrb[0].mxu0 %v596
  %v676 = vpop.f32.mrb[0].mxu0
  %v677 = vadd.f32 1e-30, %v676
  %v678 = vpop.f32.mrb[0].mxu0
  %679 = vmatprep.mubr.f32.mxu0 0.0
  %680 = vmatmul.mubr.f32.gmra.mrb[0].mxu0 %v598
  %v681 = vpop.f32.mrb[0].mxu0
  %v682 = vadd.f32 1e-30, %v681
  %v683 = vpop.f32.mrb[0].mxu0
  %684 = vmatprep.mubr.f32.mxu0 0.0
  %685 = vmatmul.mubr.f32.gmra.mrb[0].mxu0 %v600
  %v686 = vpop.f32.mrb[0].mxu0
  %v687 = vadd.f32 1e-30, %v686
  %v688 = vpop.f32.mrb[0].mxu0
  %689 = vdwg.mxu0
  %v690 = vrcp.pop %v672
  %v691 = vrcp.pop %v677
  %v692 = vrcp.pop %v682
  %v693 = vrcp.pop %v687
  %v694 = vmul.f32 %v601, %v690
  %v695 = vmul.f32 %v602, %v691
  %v696 = vmul.f32 %v603, %v692
  %v697 = vmul.f32 %v604, %v693
  %v698 = vpack.c.bf16 %v695, %v694
  %v699 = vpack.c.bf16 %v697, %v696
  %708 = vrot.lane.b32.xlu0 %v470, 64
  %v709 = vpop.permute.xlu0 %708
  %710 = vrot.lane.b32.xlu0 %v471, 64
  %v711 = vpop.permute.xlu0 %710
  %712 = vrot.lane.b32.xlu0 %v472, 64
  %v713 = vpop.permute.xlu0 %712
  %714 = vrot.lane.b32.xlu0 %v473, 64
  %v715 = vpop.permute.xlu0 %714
  %716 = vrot.lane.b32.xlu0 %v474, 64
  %v717 = vpop.permute.xlu0 %716
  %718 = vrot.lane.b32.xlu0 %v475, 64
  %v719 = vpop.permute.xlu0 %718
  %720 = vrot.lane.b32.xlu0 %v476, 64
  %v721 = vpop.permute.xlu0 %720
  %722 = vrot.lane.b32.xlu0 %v477, 64
  %v723 = vpop.permute.xlu0 %722
  %732 = vmatprep.subr.bf16.mxu0 0
  %733 = vmatpush1.bf16.msra.mxu0 %v709
  %734 = vmatprep.subr.bf16.mxu0 0
  %735 = vmatpush1.bf16.msra.mxu0 %v711
  %736 = vmatprep.subr.bf16.mxu0 0
  %737 = vmatpush1.bf16.msra.mxu0 %v713
  %738 = vmatprep.subr.bf16.mxu0 0
  %739 = vmatpush1.bf16.msra.mxu0 %v715
  %740 = vmatprep.subr.bf16.mxu0 0
  %741 = vmatpush1.bf16.msra.mxu0 %v717
  %742 = vmatprep.subr.bf16.mxu0 0
  %743 = vmatpush1.bf16.msra.mxu0 %v719
  %744 = vmatprep.subr.bf16.mxu0 0
  %745 = vmatpush1.bf16.msra.mxu0 %v721
  %746 = vmatprep.subr.bf16.mxu0 0
  %747 = vmatpush1.bf16.msra.mxu0 %v723
  %748 = vmatprep.subr.bf16.mxu0 0
  %749 = vmatpush1.bf16.msra.mxu0 0
  %750 = vmatprep.subr.bf16.mxu0 0
  %751 = vmatpush1.bf16.msra.mxu0 0
  %752 = vmatprep.subr.bf16.mxu0 0
  %753 = vmatpush1.bf16.msra.mxu0 0
  %754 = vmatprep.subr.bf16.mxu0 0
  %755 = vmatpush1.bf16.msra.mxu0 0
  %756 = vmatprep.subr.bf16.mxu0 0
  %757 = vmatpush1.bf16.msra.mxu0 0
  %758 = vmatprep.subr.bf16.mxu0 0
  %759 = vmatpush1.bf16.msra.mxu0 0
  %760 = vmatprep.subr.bf16.mxu0 0
  %761 = vmatpush1.bf16.msra.mxu0 0
  %762 = vmatprep.subr.bf16.mxu0 0
  %763 = vmatpush1.bf16.msra.mxu0 0
  %764 = vmatprep.mubr.bf16.mxu0 0
  %765 = vmatmul.mubr.bf16.gmra.mrb[0].mxu0 %v698
  %v766 = vpop.f32.mrb[0].mxu0
  %v767 = vadd.f32 0.0, %v766
  %v768 = vpop.f32.mrb[0].mxu0
  %v769 = vpop.f32.mrb[0].mxu0
  %v770 = vadd.f32 0.0, %v769
  %v771 = vpop.f32.mrb[0].mxu0
  %772 = vmatprep.mubr.bf16.mxu0 0
  %773 = vmatmul.mubr.bf16.gmra.mrb[0].mxu0 %v699
  %v774 = vpop.f32.mrb[0].mxu0
  %v775 = vadd.f32 0.0, %v774
  %v776 = vpop.f32.mrb[0].mxu0
  %v777 = vpop.f32.mrb[0].mxu0
  %v778 = vadd.f32 0.0, %v777
  %v779 = vpop.f32.mrb[0].mxu0
  %780 = vdwg.mxu0
  %v781 = vpack.c.bf16 %v770, %v767
  %v782 = vpack.c.bf16 %v778, %v775
  %v783 = vld [vmem:[%s9] sm:$0xf]
  %v784 = vld [vmem:[%s9 + $0x4] sm:$0xf]
  %v785 = vld [vmem:[%s9 + $0x8] sm:$0xf]
  %v786 = vld [vmem:[%s9 + $0xc] sm:$0xf]
  %v791 = vunpack.c.l.b16 %v783
  %v792 = vunpack.c.l.b16 %v784
  %v793 = vunpack.c.l.b16 %v785
  %v794 = vunpack.c.l.b16 %v786
  %v795 = vpack.c.b16 %v792, %v791
  %v796 = vpack.c.b16 %v794, %v793
  %v800 = vsel %vm222, %v781, 0
  %v803 = vsel %vm222, %v782, 0
  %805 = vmatprep.subr.bf16.mxu0 0
  %806 = vmatpush1.bf16.msra.mxu0 %v795
  %807 = vmatprep.subr.bf16.mxu0 0
  %808 = vmatpush1.bf16.msra.mxu0 %v796
  %809 = vmatprep.subr.bf16.mxu0 0
  %810 = vmatpush1.bf16.msra.mxu0 0
  %811 = vmatprep.subr.bf16.mxu0 0
  %812 = vmatpush1.bf16.msra.mxu0 0
  %813 = vmatprep.subr.bf16.mxu0 0
  %814 = vmatpush1.bf16.msra.mxu0 0
  %815 = vmatprep.subr.bf16.mxu0 0
  %816 = vmatpush1.bf16.msra.mxu0 0
  %817 = vmatprep.subr.bf16.mxu0 0
  %818 = vmatpush1.bf16.msra.mxu0 0
  %819 = vmatprep.subr.bf16.mxu0 0
  %820 = vmatpush1.bf16.msra.mxu0 0
  %821 = vmatprep.subr.bf16.mxu0 0
  %822 = vmatpush1.bf16.msra.mxu0 0
  %823 = vmatprep.subr.bf16.mxu0 0
  %824 = vmatpush1.bf16.msra.mxu0 0
  %825 = vmatprep.subr.bf16.mxu0 0
  %826 = vmatpush1.bf16.msra.mxu0 0
  %827 = vmatprep.subr.bf16.mxu0 0
  %828 = vmatpush1.bf16.msra.mxu0 0
  %829 = vmatprep.subr.bf16.mxu0 0
  %830 = vmatpush1.bf16.msra.mxu0 0
  %831 = vmatprep.subr.bf16.mxu0 0
  %832 = vmatpush1.bf16.msra.mxu0 0
  %833 = vmatprep.subr.bf16.mxu0 0
  %834 = vmatpush1.bf16.msra.mxu0 0
  %835 = vmatprep.subr.bf16.mxu0 0
  %836 = vmatpush1.bf16.msra.mxu0 0
  %837 = vmatprep.mubr.bf16.mxu0 0
  %838 = vmatmul.mubr.bf16.gmra.mrb[0].mxu0 %v800
  %v839 = vpop.f32.mrb[0].mxu0
  %v840 = vadd.f32 0.0, %v839
  %v841 = vpop.f32.mrb[0].mxu0
  %v842 = vpop.f32.mrb[0].mxu0
  %v843 = vadd.f32 0.0, %v842
  %v844 = vpop.f32.mrb[0].mxu0
  %845 = vmatprep.mubr.bf16.mxu0 0
  %846 = vmatmul.mubr.bf16.gmra.mrb[0].mxu0 %v803
  %v847 = vpop.f32.mrb[0].mxu0
  %v848 = vadd.f32 0.0, %v847
  %v849 = vpop.f32.mrb[0].mxu0
  %v850 = vpop.f32.mrb[0].mxu0
  %v851 = vadd.f32 0.0, %v850
  %v852 = vpop.f32.mrb[0].mxu0
  %853 = vdwg.mxu0
  %v854 = vadd.f32 %v173, %v840
  %v855 = vadd.f32 %v174, %v843
  %v856 = vadd.f32 %v175, %v848
  %v857 = vadd.f32 %v176, %v851
  %v858 = vlaneseq
  %v859 = vshrl.u32 %v858, 7
  %v860 = vsub.s32 2, %v859
  %v861 = vrot.slane %v221, %v860
  %v862 = vadd.f32 %v854, %v861
  %v863 = vadd.f32 %v855, %v861
  %v864 = vadd.f32 %v856, %v861
  %v865 = vadd.f32 %v857, %v861
  %v866 = vsel %vm222, %v862, 0.0
  %867 = vadd.xlane.f32.xlu0 %v866
  %v868 = vpop.xlane.xlu0 %867
  %v869 = vsel %vm222, %v863, 0.0
  %870 = vadd.xlane.f32.xlu0 %v869
  %v871 = vpop.xlane.xlu0 %870
  %v872 = vsel %vm222, %v864, 0.0
  %873 = vadd.xlane.f32.xlu0 %v872
  %v874 = vpop.xlane.xlu0 %873
  %v875 = vsel %vm222, %v865, 0.0
  %876 = vadd.xlane.f32.xlu0 %v875
  %v877 = vpop.xlane.xlu0 %876
  %v878 = vmul.f32 %v868, %v235
  %v879 = vmul.f32 %v871, %v235
  %v880 = vmul.f32 %v874, %v235
  %v881 = vmul.f32 %v877, %v235
  %v882 = vsub.f32 %v862, %v878
  %v883 = vsub.f32 %v863, %v879
  %v884 = vsub.f32 %v864, %v880
  %v885 = vsub.f32 %v865, %v881
  %v886 = vmul.f32 %v882, %v882
  %v887 = vmul.f32 %v883, %v883
  %v888 = vmul.f32 %v884, %v884
  %v889 = vmul.f32 %v885, %v885
  %v890 = vsel %vm222, %v886, 0.0
  %891 = vadd.xlane.f32.xlu0 %v890
  %v892 = vpop.xlane.xlu0 %891
  %v893 = vsel %vm222, %v887, 0.0
  %894 = vadd.xlane.f32.xlu0 %v893
  %v895 = vpop.xlane.xlu0 %894
  %v896 = vsel %vm222, %v888, 0.0
  %897 = vadd.xlane.f32.xlu0 %v896
  %v898 = vpop.xlane.xlu0 %897
  %v899 = vsel %vm222, %v889, 0.0
  %900 = vadd.xlane.f32.xlu0 %v899
  %v901 = vpop.xlane.xlu0 %900
  %v902 = vmul.f32 %v892, %v235
  %v903 = vmul.f32 %v895, %v235
  %v904 = vmul.f32 %v898, %v235
  %v905 = vmul.f32 %v901, %v235
  %v906 = vadd.f32 %v902, 1e-05
  %v907 = vadd.f32 %v903, 1e-05
  %v908 = vadd.f32 %v904, 1e-05
  %v909 = vadd.f32 %v905, 1e-05
  %v910 = vrsqrt.pop %v906
  %v911 = vrsqrt.pop %v907
  %v912 = vrsqrt.pop %v908
  %v913 = vrsqrt.pop %v909
  %v914 = vmul.f32 %v882, %v910
  %v915 = vmul.f32 %v883, %v911
  %v916 = vmul.f32 %v884, %v912
  %v917 = vmul.f32 %v885, %v913
  %v918 = vlaneseq
  %v919 = vshrl.u32 %v918, 7
  %v920 = vsub.s32 3, %v919
  %v921 = vrot.slane %v221, %v920
  %v922 = vmul.f32 %v914, %v921
  %v923 = vmul.f32 %v915, %v921
  %v924 = vmul.f32 %v916, %v921
  %v925 = vmul.f32 %v917, %v921
  %v926 = vlaneseq
  %v927 = vshrl.u32 %v926, 7
  %v928 = vsub.s32 4, %v927
  %v929 = vrot.slane %v221, %v928
  %v930 = vadd.f32 %v922, %v929
  %v931 = vadd.f32 %v923, %v929
  %v932 = vadd.f32 %v924, %v929
  %v933 = vadd.f32 %v925, %v929
  %v934 = vpack.c.bf16 %v931, %v930
  %v935 = vpack.c.bf16 %v933, %v932
  %v936 = vld [vmem:[%s10] sm:$0xf]
  %v937 = vld [vmem:[%s10 + $0x4] sm:$0xf]
  %v938 = vld [vmem:[%s10 + $0x8] sm:$0xf]
  %v939 = vld [vmem:[%s10 + $0xc] sm:$0xf]
  %v940 = vld [vmem:[%s11] sm:$0x1]
  %v942 = vlaneseq
  %v943 = vshrl.u32 %v942, 7
  %v944 = vsub.s32 0, %v943
  %v945 = vrot.slane %v940, %v944
  %v951 = vunpack.c.l.b16 %v936
  %v952 = vunpack.c.l.b16 %v937
  %v953 = vunpack.c.l.b16 %v938
  %v954 = vunpack.c.l.b16 %v939
  %v955 = vpack.c.b16 %v952, %v951
  %v956 = vpack.c.b16 %v954, %v953
  %v960 = vsel %vm222, %v934, 0
  %v963 = vsel %vm222, %v935, 0
  %965 = vmatprep.subr.bf16.mxu0 0
  %966 = vmatpush1.bf16.msra.mxu0 %v955
  %967 = vmatprep.subr.bf16.mxu0 0
  %968 = vmatpush1.bf16.msra.mxu0 %v956
  %969 = vmatprep.subr.bf16.mxu0 0
  %970 = vmatpush1.bf16.msra.mxu0 0
  %971 = vmatprep.subr.bf16.mxu0 0
  %972 = vmatpush1.bf16.msra.mxu0 0
  %973 = vmatprep.subr.bf16.mxu0 0
  %974 = vmatpush1.bf16.msra.mxu0 0
  %975 = vmatprep.subr.bf16.mxu0 0
  %976 = vmatpush1.bf16.msra.mxu0 0
  %977 = vmatprep.subr.bf16.mxu0 0
  %978 = vmatpush1.bf16.msra.mxu0 0
  %979 = vmatprep.subr.bf16.mxu0 0
  %980 = vmatpush1.bf16.msra.mxu0 0
  %981 = vmatprep.subr.bf16.mxu0 0
  %982 = vmatpush1.bf16.msra.mxu0 0
  %983 = vmatprep.subr.bf16.mxu0 0
  %984 = vmatpush1.bf16.msra.mxu0 0
  %985 = vmatprep.subr.bf16.mxu0 0
  %986 = vmatpush1.bf16.msra.mxu0 0
  %987 = vmatprep.subr.bf16.mxu0 0
  %988 = vmatpush1.bf16.msra.mxu0 0
  %989 = vmatprep.subr.bf16.mxu0 0
  %990 = vmatpush1.bf16.msra.mxu0 0
  %991 = vmatprep.subr.bf16.mxu0 0
  %992 = vmatpush1.bf16.msra.mxu0 0
  %993 = vmatprep.subr.bf16.mxu0 0
  %994 = vmatpush1.bf16.msra.mxu0 0
  %995 = vmatprep.subr.bf16.mxu0 0
  %996 = vmatpush1.bf16.msra.mxu0 0
  %997 = vmatprep.mubr.bf16.mxu0 0
  %998 = vmatmul.mubr.bf16.gmra.mrb[0].mxu0 %v960
  %v999 = vpop.f32.mrb[0].mxu0
  %v1000 = vadd.f32 %v945, %v999
  %v1001 = vpop.f32.mrb[0].mxu0
  %v1002 = vpop.f32.mrb[0].mxu0
  %v1003 = vadd.f32 %v945, %v1002
  %v1004 = vpop.f32.mrb[0].mxu0
  %1005 = vmatprep.mubr.bf16.mxu0 0
  %1006 = vmatmul.mubr.bf16.gmra.mrb[0].mxu0 %v963
  %v1007 = vpop.f32.mrb[0].mxu0
  %v1008 = vadd.f32 %v945, %v1007
  %v1009 = vpop.f32.mrb[0].mxu0
  %v1010 = vpop.f32.mrb[0].mxu0
  %v1011 = vadd.f32 %v945, %v1010
  %v1012 = vpop.f32.mrb[0].mxu0
  %1013 = vdwg.mxu0
  %v1014 = vmul.f32 %v1000, 0.5
  %v1015 = vmul.f32 %v1003, 0.5
  %v1016 = vmul.f32 %v1008, 0.5
  %v1017 = vmul.f32 %v1011, 0.5
  %v1018 = vmul.f32 %v1000, 0.70710677
  %v1019 = vmul.f32 %v1003, 0.70710677
  %v1020 = vmul.f32 %v1008, 0.70710677
  %v1021 = vmul.f32 %v1011, 0.70710677
  %v1022 = vand.u32 2147483647, %v1018
  %v1023 = vand.u32 2147483647, %v1019
  %v1024 = vand.u32 2147483647, %v1020
  %v1025 = vand.u32 2147483647, %v1021
  %v1026 = vmul.f32 %v1022, 0.3275911
  %v1027 = vmul.f32 %v1023, 0.3275911
  %v1028 = vmul.f32 %v1024, 0.3275911
  %v1029 = vmul.f32 %v1025, 0.3275911
  %v1030 = vadd.f32 %v1026, 1.0
  %v1031 = vadd.f32 %v1027, 1.0
  %v1032 = vadd.f32 %v1028, 1.0
  %v1033 = vadd.f32 %v1029, 1.0
  %v1034 = vrcp.pop %v1030
  %v1035 = vrcp.pop %v1031
  %v1036 = vrcp.pop %v1032
  %v1037 = vrcp.pop %v1033
  %v1038 = vmul.f32 %v1034, 1.0614054
  %v1039 = vmul.f32 %v1035, 1.0614054
  %v1040 = vmul.f32 %v1036, 1.0614054
  %v1041 = vmul.f32 %v1037, 1.0614054
  %v1042 = vadd.f32 %v1038, -1.4531521
  %v1043 = vadd.f32 %v1039, -1.4531521
  %v1044 = vadd.f32 %v1040, -1.4531521
  %v1045 = vadd.f32 %v1041, -1.4531521
  %v1046 = vmul.f32 %v1042, %v1034
  %v1047 = vmul.f32 %v1043, %v1035
  %v1048 = vmul.f32 %v1044, %v1036
  %v1049 = vmul.f32 %v1045, %v1037
  %v1050 = vadd.f32 %v1046, 1.4214138
  %v1051 = vadd.f32 %v1047, 1.4214138
  %v1052 = vadd.f32 %v1048, 1.4214138
  %v1053 = vadd.f32 %v1049, 1.4214138
  %v1054 = vmul.f32 %v1050, %v1034
  %v1055 = vmul.f32 %v1051, %v1035
  %v1056 = vmul.f32 %v1052, %v1036
  %v1057 = vmul.f32 %v1053, %v1037
  %v1058 = vadd.f32 %v1054, -0.28449672
  %v1059 = vadd.f32 %v1055, -0.28449672
  %v1060 = vadd.f32 %v1056, -0.28449672
  %v1061 = vadd.f32 %v1057, -0.28449672
  %v1062 = vmul.f32 %v1058, %v1034
  %v1063 = vmul.f32 %v1059, %v1035
  %v1064 = vmul.f32 %v1060, %v1036
  %v1065 = vmul.f32 %v1061, %v1037
  %v1066 = vadd.f32 %v1062, 0.2548296
  %v1067 = vadd.f32 %v1063, 0.2548296
  %v1068 = vadd.f32 %v1064, 0.2548296
  %v1069 = vadd.f32 %v1065, 0.2548296
  %v1070 = vmul.f32 %v1066, %v1034
  %v1071 = vmul.f32 %v1067, %v1035
  %v1072 = vmul.f32 %v1068, %v1036
  %v1073 = vmul.f32 %v1069, %v1037
  %v1074 = vsub.f32 0.0, %v1022
  %v1075 = vsub.f32 0.0, %v1023
  %v1076 = vsub.f32 0.0, %v1024
  %v1077 = vsub.f32 0.0, %v1025
  %v1078 = vmul.f32 %v1074, %v1022
  %v1079 = vmul.f32 %v1075, %v1023
  %v1080 = vmul.f32 %v1076, %v1024
  %v1081 = vmul.f32 %v1077, %v1025
  %v1082 = vmul.f32 %v1078, 1.442695
  %v1083 = vpow.pop %v1082
  %v1084 = vmul.f32 %v1079, 1.442695
  %v1085 = vpow.pop %v1084
  %v1086 = vmul.f32 %v1080, 1.442695
  %v1087 = vpow.pop %v1086
  %v1088 = vmul.f32 %v1081, 1.442695
  %v1089 = vpow.pop %v1088
  %v1090 = vmul.f32 %v1070, %v1083
  %v1091 = vmul.f32 %v1071, %v1085
  %v1092 = vmul.f32 %v1072, %v1087
  %v1093 = vmul.f32 %v1073, %v1089
  %v1094 = vsub.f32 1.0, %v1090
  %v1095 = vsub.f32 1.0, %v1091
  %v1096 = vsub.f32 1.0, %v1092
  %v1097 = vsub.f32 1.0, %v1093
  %vm1098 = vcmp.ge.f32.partialorder %v1018, 0.0
  %vm1099 = vcmp.ge.f32.partialorder %v1019, 0.0
  %vm1100 = vcmp.ge.f32.partialorder %v1020, 0.0
  %vm1101 = vcmp.ge.f32.partialorder %v1021, 0.0
  %v1102 = vsub.f32 0.0, %v1094
  %v1103 = vsub.f32 0.0, %v1095
  %v1104 = vsub.f32 0.0, %v1096
  %v1105 = vsub.f32 0.0, %v1097
  %v1106 = vsel %vm1098, %v1094, %v1102
  %v1107 = vsel %vm1099, %v1095, %v1103
  %v1108 = vsel %vm1100, %v1096, %v1104
  %v1109 = vsel %vm1101, %v1097, %v1105
  %v1110 = vadd.f32 %v1106, 1.0
  %v1111 = vadd.f32 %v1107, 1.0
  %v1112 = vadd.f32 %v1108, 1.0
  %v1113 = vadd.f32 %v1109, 1.0
  %v1114 = vmul.f32 %v1014, %v1110
  %v1115 = vmul.f32 %v1015, %v1111
  %v1116 = vmul.f32 %v1016, %v1112
  %v1117 = vmul.f32 %v1017, %v1113
  %v1118 = vpack.c.bf16 %v1115, %v1114
  %v1119 = vpack.c.bf16 %v1117, %v1116
  %v1120 = vld [vmem:[%s12] sm:$0xf]
  %v1121 = vld [vmem:[%s12 + $0x4] sm:$0xf]
  %v1122 = vld [vmem:[%s12 + $0x8] sm:$0xf]
  %v1123 = vld [vmem:[%s12 + $0xc] sm:$0xf]
  %v1124 = vld [vmem:[%s12 + $0x10] sm:$0xf]
  %v1125 = vld [vmem:[%s12 + $0x14] sm:$0xf]
  %v1126 = vld [vmem:[%s12 + $0x18] sm:$0xf]
  %v1127 = vld [vmem:[%s12 + $0x1c] sm:$0xf]
  %v1128 = vld [vmem:[%s12 + $0x20] sm:$0xf]
  %v1129 = vld [vmem:[%s12 + $0x24] sm:$0xf]
  %v1130 = vld [vmem:[%s12 + $0x28] sm:$0xf]
  %v1131 = vld [vmem:[%s12 + $0x2c] sm:$0xf]
  %v1132 = vld [vmem:[%s12 + $0x30] sm:$0xf]
  %v1133 = vld [vmem:[%s12 + $0x34] sm:$0xf]
  %v1134 = vld [vmem:[%s12 + $0x38] sm:$0xf]
  %v1135 = vld [vmem:[%s12 + $0x3c] sm:$0xf]
  %v1152 = vunpack.c.l.b16 %v1120
  %v1153 = vunpack.c.l.b16 %v1121
  %v1154 = vunpack.c.l.b16 %v1122
  %v1155 = vunpack.c.l.b16 %v1123
  %v1156 = vunpack.c.l.b16 %v1124
  %v1157 = vunpack.c.l.b16 %v1125
  %v1158 = vunpack.c.l.b16 %v1126
  %v1159 = vunpack.c.l.b16 %v1127
  %v1160 = vunpack.c.l.b16 %v1128
  %v1161 = vunpack.c.l.b16 %v1129
  %v1162 = vunpack.c.l.b16 %v1130
  %v1163 = vunpack.c.l.b16 %v1131
  %v1164 = vunpack.c.l.b16 %v1132
  %v1165 = vunpack.c.l.b16 %v1133
  %v1166 = vunpack.c.l.b16 %v1134
  %v1167 = vunpack.c.l.b16 %v1135
  %v1168 = vpack.c.b16 %v1153, %v1152
  %v1169 = vpack.c.b16 %v1155, %v1154
  %v1170 = vpack.c.b16 %v1157, %v1156
  %v1171 = vpack.c.b16 %v1159, %v1158
  %v1172 = vpack.c.b16 %v1161, %v1160
  %v1173 = vpack.c.b16 %v1163, %v1162
  %v1174 = vpack.c.b16 %v1165, %v1164
  %v1175 = vpack.c.b16 %v1167, %v1166
  %1184 = vmatprep.subr.bf16.mxu0 0
  %1185 = vmatpush1.bf16.msra.mxu0 %v1168
  %1186 = vmatprep.subr.bf16.mxu0 0
  %1187 = vmatpush1.bf16.msra.mxu0 %v1169
  %1188 = vmatprep.subr.bf16.mxu0 0
  %1189 = vmatpush1.bf16.msra.mxu0 %v1170
  %1190 = vmatprep.subr.bf16.mxu0 0
  %1191 = vmatpush1.bf16.msra.mxu0 %v1171
  %1192 = vmatprep.subr.bf16.mxu0 0
  %1193 = vmatpush1.bf16.msra.mxu0 %v1172
  %1194 = vmatprep.subr.bf16.mxu0 0
  %1195 = vmatpush1.bf16.msra.mxu0 %v1173
  %1196 = vmatprep.subr.bf16.mxu0 0
  %1197 = vmatpush1.bf16.msra.mxu0 %v1174
  %1198 = vmatprep.subr.bf16.mxu0 0
  %1199 = vmatpush1.bf16.msra.mxu0 %v1175
  %1200 = vmatprep.subr.bf16.mxu0 0
  %1201 = vmatpush1.bf16.msra.mxu0 0
  %1202 = vmatprep.subr.bf16.mxu0 0
  %1203 = vmatpush1.bf16.msra.mxu0 0
  %1204 = vmatprep.subr.bf16.mxu0 0
  %1205 = vmatpush1.bf16.msra.mxu0 0
  %1206 = vmatprep.subr.bf16.mxu0 0
  %1207 = vmatpush1.bf16.msra.mxu0 0
  %1208 = vmatprep.subr.bf16.mxu0 0
  %1209 = vmatpush1.bf16.msra.mxu0 0
  %1210 = vmatprep.subr.bf16.mxu0 0
  %1211 = vmatpush1.bf16.msra.mxu0 0
  %1212 = vmatprep.subr.bf16.mxu0 0
  %1213 = vmatpush1.bf16.msra.mxu0 0
  %1214 = vmatprep.subr.bf16.mxu0 0
  %1215 = vmatpush1.bf16.msra.mxu0 0
  %1216 = vmatprep.mubr.bf16.mxu0 0
  %1217 = vmatmul.mubr.bf16.gmra.mrb[0].mxu0 %v1118
  %v1218 = vpop.f32.mrb[0].mxu0
  %v1219 = vadd.f32 0.0, %v1218
  %v1220 = vpop.f32.mrb[0].mxu0
  %v1221 = vpop.f32.mrb[0].mxu0
  %v1222 = vadd.f32 0.0, %v1221
  %v1223 = vpop.f32.mrb[0].mxu0
  %1224 = vmatprep.mubr.bf16.mxu0 0
  %1225 = vmatmul.mubr.bf16.gmra.mrb[0].mxu0 %v1119
  %v1226 = vpop.f32.mrb[0].mxu0
  %v1227 = vadd.f32 0.0, %v1226
  %v1228 = vpop.f32.mrb[0].mxu0
  %v1229 = vpop.f32.mrb[0].mxu0
  %v1230 = vadd.f32 0.0, %v1229
  %v1231 = vpop.f32.mrb[0].mxu0
  %1232 = vdwg.mxu0
  %v1233 = vadd.f32 %v862, %v1219
  %v1234 = vadd.f32 %v863, %v1222
  %v1235 = vadd.f32 %v864, %v1227
  %v1236 = vadd.f32 %v865, %v1230
  %v1237 = vlaneseq
  %v1238 = vshrl.u32 %v1237, 7
  %v1239 = vsub.s32 5, %v1238
  %v1240 = vrot.slane %v221, %v1239
  %v1241 = vadd.f32 %v1233, %v1240
  %v1242 = vadd.f32 %v1234, %v1240
  %v1243 = vadd.f32 %v1235, %v1240
  %v1244 = vadd.f32 %v1236, %v1240
  %s1245 = scalar_lea.vmem %s13, 8
  %v1246 = vld [vmem:[%s1245] sm:$0x3f]
  %v1247 = vsel %vm222, %v1241, 0.0
  %1248 = vadd.xlane.f32.xlu0 %v1247
  %v1249 = vpop.xlane.xlu0 %1248
  %v1250 = vsel %vm222, %v1242, 0.0
  %1251 = vadd.xlane.f32.xlu0 %v1250
  %v1252 = vpop.xlane.xlu0 %1251
  %v1253 = vsel %vm222, %v1243, 0.0
  %1254 = vadd.xlane.f32.xlu0 %v1253
  %v1255 = vpop.xlane.xlu0 %1254
  %v1256 = vsel %vm222, %v1244, 0.0
  %1257 = vadd.xlane.f32.xlu0 %v1256
  %v1258 = vpop.xlane.xlu0 %1257
  %v1259 = vmul.f32 %v1249, %v235
  %v1260 = vmul.f32 %v1252, %v235
  %v1261 = vmul.f32 %v1255, %v235
  %v1262 = vmul.f32 %v1258, %v235
  %v1263 = vsub.f32 %v1241, %v1259
  %v1264 = vsub.f32 %v1242, %v1260
  %v1265 = vsub.f32 %v1243, %v1261
  %v1266 = vsub.f32 %v1244, %v1262
  %v1267 = vmul.f32 %v1263, %v1263
  %v1268 = vmul.f32 %v1264, %v1264
  %v1269 = vmul.f32 %v1265, %v1265
  %v1270 = vmul.f32 %v1266, %v1266
  %v1271 = vsel %vm222, %v1267, 0.0
  %1272 = vadd.xlane.f32.xlu0 %v1271
  %v1273 = vpop.xlane.xlu0 %1272
  %v1274 = vsel %vm222, %v1268, 0.0
  %1275 = vadd.xlane.f32.xlu0 %v1274
  %v1276 = vpop.xlane.xlu0 %1275
  %v1277 = vsel %vm222, %v1269, 0.0
  %1278 = vadd.xlane.f32.xlu0 %v1277
  %v1279 = vpop.xlane.xlu0 %1278
  %v1280 = vsel %vm222, %v1270, 0.0
  %1281 = vadd.xlane.f32.xlu0 %v1280
  %v1282 = vpop.xlane.xlu0 %1281
  %v1283 = vmul.f32 %v1273, %v235
  %v1284 = vmul.f32 %v1276, %v235
  %v1285 = vmul.f32 %v1279, %v235
  %v1286 = vmul.f32 %v1282, %v235
  %v1287 = vadd.f32 %v1283, 1e-05
  %v1288 = vadd.f32 %v1284, 1e-05
  %v1289 = vadd.f32 %v1285, 1e-05
  %v1290 = vadd.f32 %v1286, 1e-05
  %v1291 = vrsqrt.pop %v1287
  %v1292 = vrsqrt.pop %v1288
  %v1293 = vrsqrt.pop %v1289
  %v1294 = vrsqrt.pop %v1290
  %v1295 = vmul.f32 %v1263, %v1291
  %v1296 = vmul.f32 %v1264, %v1292
  %v1297 = vmul.f32 %v1265, %v1293
  %v1298 = vmul.f32 %v1266, %v1294
  %v1299 = vlaneseq
  %v1300 = vshrl.u32 %v1299, 7
  %v1301 = vsub.s32 0, %v1300
  %v1302 = vrot.slane %v1246, %v1301
  %v1303 = vmul.f32 %v1295, %v1302
  %v1304 = vmul.f32 %v1296, %v1302
  %v1305 = vmul.f32 %v1297, %v1302
  %v1306 = vmul.f32 %v1298, %v1302
  %v1307 = vlaneseq
  %v1308 = vshrl.u32 %v1307, 7
  %v1309 = vsub.s32 1, %v1308
  %v1310 = vrot.slane %v1246, %v1309
  %v1311 = vadd.f32 %v1303, %v1310
  %v1312 = vadd.f32 %v1304, %v1310
  %v1313 = vadd.f32 %v1305, %v1310
  %v1314 = vadd.f32 %v1306, %v1310
  %v1315 = vpack.c.bf16 %v1312, %v1311
  %v1316 = vpack.c.bf16 %v1314, %v1313
  %s1317 = scalar_lea.vmem %s7, 16
  %v1318 = vld [vmem:[%s1317] sm:$0xf]
  %v1319 = vld [vmem:[%s1317 + $0x4] sm:$0xf]
  %v1320 = vld [vmem:[%s1317 + $0x8] sm:$0xf]
  %v1321 = vld [vmem:[%s1317 + $0xc] sm:$0xf]
  %s1322 = scalar_lea.vmem %s8, 1
  %v1323 = vld [vmem:[%s1322] sm:$0x1]
  %v1325 = vlaneseq
  %v1326 = vshrl.u32 %v1325, 7
  %v1327 = vsub.s32 0, %v1326
  %v1328 = vrot.slane %v1323, %v1327
  %v1334 = vunpack.c.l.b16 %v1318
  %v1335 = vunpack.c.l.b16 %v1319
  %v1336 = vunpack.c.l.b16 %v1320
  %v1337 = vunpack.c.l.b16 %v1321
  %v1338 = vpack.c.b16 %v1335, %v1334
  %v1339 = vpack.c.b16 %v1337, %v1336
  %v1343 = vsel %vm222, %v1315, 0
  %v1346 = vsel %vm222, %v1316, 0
  %1348 = vmatprep.subr.bf16.mxu0 0
  %1349 = vmatpush1.bf16.msra.mxu0 %v1338
  %1350 = vmatprep.subr.bf16.mxu0 0
  %1351 = vmatpush1.bf16.msra.mxu0 %v1339
  %1352 = vmatprep.subr.bf16.mxu0 0
  %1353 = vmatpush1.bf16.msra.mxu0 0
  %1354 = vmatprep.subr.bf16.mxu0 0
  %1355 = vmatpush1.bf16.msra.mxu0 0
  %1356 = vmatprep.subr.bf16.mxu0 0
  %1357 = vmatpush1.bf16.msra.mxu0 0
  %1358 = vmatprep.subr.bf16.mxu0 0
  %1359 = vmatpush1.bf16.msra.mxu0 0
  %1360 = vmatprep.subr.bf16.mxu0 0
  %1361 = vmatpush1.bf16.msra.mxu0 0
  %1362 = vmatprep.subr.bf16.mxu0 0
  %1363 = vmatpush1.bf16.msra.mxu0 0
  %1364 = vmatprep.subr.bf16.mxu0 0
  %1365 = vmatpush1.bf16.msra.mxu0 0
  %1366 = vmatprep.subr.bf16.mxu0 0
  %1367 = vmatpush1.bf16.msra.mxu0 0
  %1368 = vmatprep.subr.bf16.mxu0 0
  %1369 = vmatpush1.bf16.msra.mxu0 0
  %1370 = vmatprep.subr.bf16.mxu0 0
  %1371 = vmatpush1.bf16.msra.mxu0 0
  %1372 = vmatprep.subr.bf16.mxu0 0
  %1373 = vmatpush1.bf16.msra.mxu0 0
  %1374 = vmatprep.subr.bf16.mxu0 0
  %1375 = vmatpush1.bf16.msra.mxu0 0
  %1376 = vmatprep.subr.bf16.mxu0 0
  %1377 = vmatpush1.bf16.msra.mxu0 0
  %1378 = vmatprep.subr.bf16.mxu0 0
  %1379 = vmatpush1.bf16.msra.mxu0 0
  %1380 = vmatprep.mubr.bf16.mxu0 0
  %1381 = vmatmul.mubr.bf16.gmra.mrb[0].mxu0 %v1343
  %v1382 = vpop.f32.mrb[0].mxu0
  %v1383 = vadd.f32 %v1328, %v1382
  %v1384 = vpop.f32.mrb[0].mxu0
  %v1385 = vpop.f32.mrb[0].mxu0
  %v1386 = vadd.f32 %v1328, %v1385
  %v1387 = vpop.f32.mrb[0].mxu0
  %1388 = vmatprep.mubr.bf16.mxu0 0
  %1389 = vmatmul.mubr.bf16.gmra.mrb[0].mxu0 %v1346
  %v1390 = vpop.f32.mrb[0].mxu0
  %v1391 = vadd.f32 %v1328, %v1390
  %v1392 = vpop.f32.mrb[0].mxu0
  %v1393 = vpop.f32.mrb[0].mxu0
  %v1394 = vadd.f32 %v1328, %v1393
  %v1395 = vpop.f32.mrb[0].mxu0
  %1396 = vdwg.mxu0
  %v1397 = vpack.c.bf16 %v1386, %v1383
  %v1398 = vpack.c.bf16 %v1394, %v1391
  %v1399 = vmul.bf16 %v1397, %v415
  %v1400 = vmul.bf16 %v1398, %v417
  %v1401 = vmul.bf16 %v1397, %v419
  %v1402 = vmul.bf16 %v1398, %v421
  %v1403 = vmul.bf16 %v1397, %v423
  %v1404 = vmul.bf16 %v1398, %v425
  %v1405 = vmul.bf16 %v1397, %v427
  %v1406 = vmul.bf16 %v1398, %v429
  %v1407 = vmul.bf16 %v1397, %v447
  %v1408 = vmul.bf16 %v1398, %v449
  %v1409 = vmul.bf16 %v1397, %v451
  %v1410 = vmul.bf16 %v1398, %v453
  %v1411 = vmul.bf16 %v1397, %v455
  %v1412 = vmul.bf16 %v1398, %v457
  %v1413 = vmul.bf16 %v1397, %v459
  %v1414 = vmul.bf16 %v1398, %v461
  %1423 = vrot.lane.b32.xlu0 %v1399, 96
  %v1424 = vpop.permute.xlu0 %1423
  %1425 = vrot.lane.b32.xlu0 %v1400, 96
  %v1426 = vpop.permute.xlu0 %1425
  %1427 = vrot.lane.b32.xlu0 %v1401, 96
  %v1428 = vpop.permute.xlu0 %1427
  %1429 = vrot.lane.b32.xlu0 %v1402, 96
  %v1430 = vpop.permute.xlu0 %1429
  %1431 = vrot.lane.b32.xlu0 %v1403, 96
  %v1432 = vpop.permute.xlu0 %1431
  %1433 = vrot.lane.b32.xlu0 %v1404, 96
  %v1434 = vpop.permute.xlu0 %1433
  %1435 = vrot.lane.b32.xlu0 %v1405, 96
  %v1436 = vpop.permute.xlu0 %1435
  %1437 = vrot.lane.b32.xlu0 %v1406, 96
  %v1438 = vpop.permute.xlu0 %1437
  %v1440 = vsel %vm222, %v1397, 0
  %v1443 = vsel %vm222, %v1398, 0
  %v1446 = vsel %vm222, %v1424, 0
  %v1449 = vsel %vm222, %v1426, 0
  %v1452 = vsel %vm222, %v1428, 0
  %v1455 = vsel %vm222, %v1430, 0
  %v1458 = vsel %vm222, %v1432, 0
  %v1461 = vsel %vm222, %v1434, 0
  %v1464 = vsel %vm222, %v1436, 0
  %v1467 = vsel %vm222, %v1438, 0
  %1469 = vmatprep.subr.bf16.mxu0 0
  %1470 = vmatpush1.bf16.xpose.msra.mxu0 %v1446
  %1471 = vmatprep.subr.bf16.mxu0 0
  %1472 = vmatpush1.bf16.xpose.msra.mxu0 %v1449
  %1473 = vmatprep.subr.bf16.mxu0 0
  %1474 = vmatpush1.bf16.xpose.msra.mxu0 %v1452
  %1475 = vmatprep.subr.bf16.mxu0 0
  %1476 = vmatpush1.bf16.xpose.msra.mxu0 %v1455
  %1477 = vmatprep.subr.bf16.mxu0 0
  %1478 = vmatpush1.bf16.xpose.msra.mxu0 %v1458
  %1479 = vmatprep.subr.bf16.mxu0 0
  %1480 = vmatpush1.bf16.xpose.msra.mxu0 %v1461
  %1481 = vmatprep.subr.bf16.mxu0 0
  %1482 = vmatpush1.bf16.xpose.msra.mxu0 %v1464
  %1483 = vmatprep.subr.bf16.mxu0 0
  %1484 = vmatpush1.bf16.xpose.msra.mxu0 %v1467
  %1485 = vmatprep.subr.bf16.mxu0 0
  %1486 = vmatpush1.bf16.xpose.msra.mxu0 0
  %1487 = vmatprep.subr.bf16.mxu0 0
  %1488 = vmatpush1.bf16.xpose.msra.mxu0 0
  %1489 = vmatprep.subr.bf16.mxu0 0
  %1490 = vmatpush1.bf16.xpose.msra.mxu0 0
  %1491 = vmatprep.subr.bf16.mxu0 0
  %1492 = vmatpush1.bf16.xpose.msra.mxu0 0
  %1493 = vmatprep.subr.bf16.mxu0 0
  %1494 = vmatpush1.bf16.xpose.msra.mxu0 0
  %1495 = vmatprep.subr.bf16.mxu0 0
  %1496 = vmatpush1.bf16.xpose.msra.mxu0 0
  %1497 = vmatprep.subr.bf16.mxu0 0
  %1498 = vmatpush1.bf16.xpose.msra.mxu0 0
  %1499 = vmatprep.subr.bf16.mxu0 0
  %1500 = vmatpush1.bf16.xpose.msra.mxu0 0
  %1501 = vmatprep.mubr.bf16.mxu0 0
  %1502 = vmatmul.mubr.bf16.gmra.mrb[0].mxu0 %v1440
  %v1503 = vpop.f32.mrb[0].mxu0
  %v1504 = vadd.f32 %v217, %v1503
  %v1505 = vpop.f32.mrb[0].mxu0
  %v1506 = vpop.f32.mrb[0].mxu0
  %v1507 = vadd.f32 %v218, %v1506
  %v1508 = vpop.f32.mrb[0].mxu0
  %1509 = vmatprep.mubr.bf16.mxu0 0
  %1510 = vmatmul.mubr.bf16.gmra.mrb[0].mxu0 %v1443
  %v1511 = vpop.f32.mrb[0].mxu0
  %v1512 = vadd.f32 %v219, %v1511
  %v1513 = vpop.f32.mrb[0].mxu0
  %v1514 = vpop.f32.mrb[0].mxu0
  %v1515 = vadd.f32 %v220, %v1514
  %v1516 = vpop.f32.mrb[0].mxu0
  %1517 = vdwg.mxu0
  %1518 = vmax.xlane.f32.xlu0 %v1504
  %v1519 = vpop.xlane.xlu0 %1518
  %1520 = vmax.xlane.f32.xlu0 %v1507
  %v1521 = vpop.xlane.xlu0 %1520
  %1522 = vmax.xlane.f32.xlu0 %v1512
  %v1523 = vpop.xlane.xlu0 %1522
  %1524 = vmax.xlane.f32.xlu0 %v1515
  %v1525 = vpop.xlane.xlu0 %1524
  %v1526 = vsub.f32 %v1504, %v1519
  %v1527 = vsub.f32 %v1507, %v1521
  %v1528 = vsub.f32 %v1512, %v1523
  %v1529 = vsub.f32 %v1515, %v1525
  %v1530 = vmul.f32 %v1526, 1.442695
  %v1531 = vpow.pop %v1530
  %v1532 = vmul.f32 %v1527, 1.442695
  %v1533 = vpow.pop %v1532
  %v1534 = vmul.f32 %v1528, 1.442695
  %v1535 = vpow.pop %v1534
  %v1536 = vmul.f32 %v1529, 1.442695
  %v1537 = vpow.pop %v1536
  %v1538 = vmul.f32 %v1531, %v193
  %v1539 = vmul.f32 %v1533, %v194
  %v1540 = vmul.f32 %v1535, %v195
  %v1541 = vmul.f32 %v1537, %v196
  %1542 = vmatprep.subr.mxu0 0.0
  %1543 = vmatpush1.msra.mxu0 %v197
  %1544 = vmatprep.subr.mxu0 0.0
  %1545 = vmatpush1.msra.mxu0 %v198
  %1546 = vmatprep.subr.mxu0 0.0
  %1547 = vmatpush1.msra.mxu0 %v199
  %1548 = vmatprep.subr.mxu0 0.0
  %1549 = vmatpush1.msra.mxu0 %v200
  %1550 = vmatprep.subr.mxu0 0.0
  %1551 = vmatpush1.msra.mxu0 %v201
  %1552 = vmatprep.subr.mxu0 0.0
  %1553 = vmatpush1.msra.mxu0 %v202
  %1554 = vmatprep.subr.mxu0 0.0
  %1555 = vmatpush1.msra.mxu0 %v203
  %1556 = vmatprep.subr.mxu0 0.0
  %1557 = vmatpush1.msra.mxu0 %v204
  %1558 = vmatprep.subr.mxu0 0.0
  %1559 = vmatpush1.msra.mxu0 %v205
  %1560 = vmatprep.subr.mxu0 0.0
  %1561 = vmatpush1.msra.mxu0 %v206
  %1562 = vmatprep.subr.mxu0 0.0
  %1563 = vmatpush1.msra.mxu0 %v207
  %1564 = vmatprep.subr.mxu0 0.0
  %1565 = vmatpush1.msra.mxu0 %v208
  %1566 = vmatprep.subr.mxu0 0.0
  %1567 = vmatpush1.msra.mxu0 %v209
  %1568 = vmatprep.subr.mxu0 0.0
  %1569 = vmatpush1.msra.mxu0 %v210
  %1570 = vmatprep.subr.mxu0 0.0
  %1571 = vmatpush1.msra.mxu0 %v211
  %1572 = vmatprep.subr.mxu0 0.0
  %1573 = vmatpush1.msra.mxu0 %v212
  %1574 = vmatprep.subr.mxu0 0.0
  %1575 = vmatpush1.msra.mxu0 0.0
  %1576 = vmatprep.subr.mxu0 0.0
  %1577 = vmatpush1.msra.mxu0 0.0
  %1578 = vmatprep.subr.mxu0 0.0
  %1579 = vmatpush1.msra.mxu0 0.0
  %1580 = vmatprep.subr.mxu0 0.0
  %1581 = vmatpush1.msra.mxu0 0.0
  %1582 = vmatprep.subr.mxu0 0.0
  %1583 = vmatpush1.msra.mxu0 0.0
  %1584 = vmatprep.subr.mxu0 0.0
  %1585 = vmatpush1.msra.mxu0 0.0
  %1586 = vmatprep.subr.mxu0 0.0
  %1587 = vmatpush1.msra.mxu0 0.0
  %1588 = vmatprep.subr.mxu0 0.0
  %1589 = vmatpush1.msra.mxu0 0.0
  %1590 = vmatprep.subr.mxu0 0.0
  %1591 = vmatpush1.msra.mxu0 0.0
  %1592 = vmatprep.subr.mxu0 0.0
  %1593 = vmatpush1.msra.mxu0 0.0
  %1594 = vmatprep.subr.mxu0 0.0
  %1595 = vmatpush1.msra.mxu0 0.0
  %1596 = vmatprep.subr.mxu0 0.0
  %1597 = vmatpush1.msra.mxu0 0.0
  %1598 = vmatprep.subr.mxu0 0.0
  %1599 = vmatpush1.msra.mxu0 0.0
  %1600 = vmatprep.subr.mxu0 0.0
  %1601 = vmatpush1.msra.mxu0 0.0
  %1602 = vmatprep.subr.mxu0 0.0
  %1603 = vmatpush1.msra.mxu0 0.0
  %1604 = vmatprep.subr.mxu0 0.0
  %1605 = vmatpush1.msra.mxu0 0.0
  %1606 = vmatprep.mubr.f32.mxu0 0.0
  %1607 = vmatmul.mubr.f32.gmra.mrb[0].mxu0 %v1531
  %v1608 = vpop.f32.mrb[0].mxu0
  %v1609 = vadd.f32 1e-30, %v1608
  %v1610 = vpop.f32.mrb[0].mxu0
  %1611 = vmatprep.mubr.f32.mxu0 0.0
  %1612 = vmatmul.mubr.f32.gmra.mrb[0].mxu0 %v1533
  %v1613 = vpop.f32.mrb[0].mxu0
  %v1614 = vadd.f32 1e-30, %v1613
  %v1615 = vpop.f32.mrb[0].mxu0
  %1616 = vmatprep.mubr.f32.mxu0 0.0
  %1617 = vmatmul.mubr.f32.gmra.mrb[0].mxu0 %v1535
  %v1618 = vpop.f32.mrb[0].mxu0
  %v1619 = vadd.f32 1e-30, %v1618
  %v1620 = vpop.f32.mrb[0].mxu0
  %1621 = vmatprep.mubr.f32.mxu0 0.0
  %1622 = vmatmul.mubr.f32.gmra.mrb[0].mxu0 %v1537
  %v1623 = vpop.f32.mrb[0].mxu0
  %v1624 = vadd.f32 1e-30, %v1623
  %v1625 = vpop.f32.mrb[0].mxu0
  %1626 = vdwg.mxu0
  %v1627 = vrcp.pop %v1609
  %v1628 = vrcp.pop %v1614
  %v1629 = vrcp.pop %v1619
  %v1630 = vrcp.pop %v1624
  %v1631 = vmul.f32 %v1538, %v1627
  %v1632 = vmul.f32 %v1539, %v1628
  %v1633 = vmul.f32 %v1540, %v1629
  %v1634 = vmul.f32 %v1541, %v1630
  %v1635 = vpack.c.bf16 %v1632, %v1631
  %v1636 = vpack.c.bf16 %v1634, %v1633
  %1645 = vrot.lane.b32.xlu0 %v1407, 64
  %v1646 = vpop.permute.xlu0 %1645
  %1647 = vrot.lane.b32.xlu0 %v1408, 64
  %v1648 = vpop.permute.xlu0 %1647
  %1649 = vrot.lane.b32.xlu0 %v1409, 64
  %v1650 = vpop.permute.xlu0 %1649
  %1651 = vrot.lane.b32.xlu0 %v1410, 64
  %v1652 = vpop.permute.xlu0 %1651
  %1653 = vrot.lane.b32.xlu0 %v1411, 64
  %v1654 = vpop.permute.xlu0 %1653
  %1655 = vrot.lane.b32.xlu0 %v1412, 64
  %v1656 = vpop.permute.xlu0 %1655
  %1657 = vrot.lane.b32.xlu0 %v1413, 64
  %v1658 = vpop.permute.xlu0 %1657
  %1659 = vrot.lane.b32.xlu0 %v1414, 64
  %v1660 = vpop.permute.xlu0 %1659
  %1669 = vmatprep.subr.bf16.mxu0 0
  %1670 = vmatpush1.bf16.msra.mxu0 %v1646
  %1671 = vmatprep.subr.bf16.mxu0 0
  %1672 = vmatpush1.bf16.msra.mxu0 %v1648
  %1673 = vmatprep.subr.bf16.mxu0 0
  %1674 = vmatpush1.bf16.msra.mxu0 %v1650
  %1675 = vmatprep.subr.bf16.mxu0 0
  %1676 = vmatpush1.bf16.msra.mxu0 %v1652
  %1677 = vmatprep.subr.bf16.mxu0 0
  %1678 = vmatpush1.bf16.msra.mxu0 %v1654
  %1679 = vmatprep.subr.bf16.mxu0 0
  %1680 = vmatpush1.bf16.msra.mxu0 %v1656
  %1681 = vmatprep.subr.bf16.mxu0 0
  %1682 = vmatpush1.bf16.msra.mxu0 %v1658
  %1683 = vmatprep.subr.bf16.mxu0 0
  %1684 = vmatpush1.bf16.msra.mxu0 %v1660
  %1685 = vmatprep.subr.bf16.mxu0 0
  %1686 = vmatpush1.bf16.msra.mxu0 0
  %1687 = vmatprep.subr.bf16.mxu0 0
  %1688 = vmatpush1.bf16.msra.mxu0 0
  %1689 = vmatprep.subr.bf16.mxu0 0
  %1690 = vmatpush1.bf16.msra.mxu0 0
  %1691 = vmatprep.subr.bf16.mxu0 0
  %1692 = vmatpush1.bf16.msra.mxu0 0
  %1693 = vmatprep.subr.bf16.mxu0 0
  %1694 = vmatpush1.bf16.msra.mxu0 0
  %1695 = vmatprep.subr.bf16.mxu0 0
  %1696 = vmatpush1.bf16.msra.mxu0 0
  %1697 = vmatprep.subr.bf16.mxu0 0
  %1698 = vmatpush1.bf16.msra.mxu0 0
  %1699 = vmatprep.subr.bf16.mxu0 0
  %1700 = vmatpush1.bf16.msra.mxu0 0
  %1701 = vmatprep.mubr.bf16.mxu0 0
  %1702 = vmatmul.mubr.bf16.gmra.mrb[0].mxu0 %v1635
  %v1703 = vpop.f32.mrb[0].mxu0
  %v1704 = vadd.f32 0.0, %v1703
  %v1705 = vpop.f32.mrb[0].mxu0
  %v1706 = vpop.f32.mrb[0].mxu0
  %v1707 = vadd.f32 0.0, %v1706
  %v1708 = vpop.f32.mrb[0].mxu0
  %1709 = vmatprep.mubr.bf16.mxu0 0
  %1710 = vmatmul.mubr.bf16.gmra.mrb[0].mxu0 %v1636
  %v1711 = vpop.f32.mrb[0].mxu0
  %v1712 = vadd.f32 0.0, %v1711
  %v1713 = vpop.f32.mrb[0].mxu0
  %v1714 = vpop.f32.mrb[0].mxu0
  %v1715 = vadd.f32 0.0, %v1714
  %v1716 = vpop.f32.mrb[0].mxu0
  %1717 = vdwg.mxu0
  %v1718 = vpack.c.bf16 %v1707, %v1704
  %v1719 = vpack.c.bf16 %v1715, %v1712
  %s1720 = scalar_lea.vmem %s9, 16
  %v1721 = vld [vmem:[%s1720] sm:$0xf]
  %v1722 = vld [vmem:[%s1720 + $0x4] sm:$0xf]
  %v1723 = vld [vmem:[%s1720 + $0x8] sm:$0xf]
  %v1724 = vld [vmem:[%s1720 + $0xc] sm:$0xf]
  %v1729 = vunpack.c.l.b16 %v1721
  %v1730 = vunpack.c.l.b16 %v1722
  %v1731 = vunpack.c.l.b16 %v1723
  %v1732 = vunpack.c.l.b16 %v1724
  %v1733 = vpack.c.b16 %v1730, %v1729
  %v1734 = vpack.c.b16 %v1732, %v1731
  %v1738 = vsel %vm222, %v1718, 0
  %v1741 = vsel %vm222, %v1719, 0
  %1743 = vmatprep.subr.bf16.mxu0 0
  %1744 = vmatpush1.bf16.msra.mxu0 %v1733
  %1745 = vmatprep.subr.bf16.mxu0 0
  %1746 = vmatpush1.bf16.msra.mxu0 %v1734
  %1747 = vmatprep.subr.bf16.mxu0 0
  %1748 = vmatpush1.bf16.msra.mxu0 0
  %1749 = vmatprep.subr.bf16.mxu0 0
  %1750 = vmatpush1.bf16.msra.mxu0 0
  %1751 = vmatprep.subr.bf16.mxu0 0
  %1752 = vmatpush1.bf16.msra.mxu0 0
  %1753 = vmatprep.subr.bf16.mxu0 0
  %1754 = vmatpush1.bf16.msra.mxu0 0
  %1755 = vmatprep.subr.bf16.mxu0 0
  %1756 = vmatpush1.bf16.msra.mxu0 0
  %1757 = vmatprep.subr.bf16.mxu0 0
  %1758 = vmatpush1.bf16.msra.mxu0 0
  %1759 = vmatprep.subr.bf16.mxu0 0
  %1760 = vmatpush1.bf16.msra.mxu0 0
  %1761 = vmatprep.subr.bf16.mxu0 0
  %1762 = vmatpush1.bf16.msra.mxu0 0
  %1763 = vmatprep.subr.bf16.mxu0 0
  %1764 = vmatpush1.bf16.msra.mxu0 0
  %1765 = vmatprep.subr.bf16.mxu0 0
  %1766 = vmatpush1.bf16.msra.mxu0 0
  %1767 = vmatprep.subr.bf16.mxu0 0
  %1768 = vmatpush1.bf16.msra.mxu0 0
  %1769 = vmatprep.subr.bf16.mxu0 0
  %1770 = vmatpush1.bf16.msra.mxu0 0
  %1771 = vmatprep.subr.bf16.mxu0 0
  %1772 = vmatpush1.bf16.msra.mxu0 0
  %1773 = vmatprep.subr.bf16.mxu0 0
  %1774 = vmatpush1.bf16.msra.mxu0 0
  %1775 = vmatprep.mubr.bf16.mxu0 0
  %1776 = vmatmul.mubr.bf16.gmra.mrb[0].mxu0 %v1738
  %v1777 = vpop.f32.mrb[0].mxu0
  %v1778 = vadd.f32 0.0, %v1777
  %v1779 = vpop.f32.mrb[0].mxu0
  %v1780 = vpop.f32.mrb[0].mxu0
  %v1781 = vadd.f32 0.0, %v1780
  %v1782 = vpop.f32.mrb[0].mxu0
  %1783 = vmatprep.mubr.bf16.mxu0 0
  %1784 = vmatmul.mubr.bf16.gmra.mrb[0].mxu0 %v1741
  %v1785 = vpop.f32.mrb[0].mxu0
  %v1786 = vadd.f32 0.0, %v1785
  %v1787 = vpop.f32.mrb[0].mxu0
  %v1788 = vpop.f32.mrb[0].mxu0
  %v1789 = vadd.f32 0.0, %v1788
  %v1790 = vpop.f32.mrb[0].mxu0
  %1791 = vdwg.mxu0
  %v1792 = vadd.f32 %v1241, %v1778
  %v1793 = vadd.f32 %v1242, %v1781
  %v1794 = vadd.f32 %v1243, %v1786
  %v1795 = vadd.f32 %v1244, %v1789
  %v1796 = vlaneseq
  %v1797 = vshrl.u32 %v1796, 7
  %v1798 = vsub.s32 2, %v1797
  %v1799 = vrot.slane %v1246, %v1798
  %v1800 = vadd.f32 %v1792, %v1799
  %v1801 = vadd.f32 %v1793, %v1799
  %v1802 = vadd.f32 %v1794, %v1799
  %v1803 = vadd.f32 %v1795, %v1799
  %v1804 = vsel %vm222, %v1800, 0.0
  %1805 = vadd.xlane.f32.xlu0 %v1804
  %v1806 = vpop.xlane.xlu0 %1805
  %v1807 = vsel %vm222, %v1801, 0.0
  %1808 = vadd.xlane.f32.xlu0 %v1807
  %v1809 = vpop.xlane.xlu0 %1808
  %v1810 = vsel %vm222, %v1802, 0.0
  %1811 = vadd.xlane.f32.xlu0 %v1810
  %v1812 = vpop.xlane.xlu0 %1811
  %v1813 = vsel %vm222, %v1803, 0.0
  %1814 = vadd.xlane.f32.xlu0 %v1813
  %v1815 = vpop.xlane.xlu0 %1814
  %v1816 = vmul.f32 %v1806, %v235
  %v1817 = vmul.f32 %v1809, %v235
  %v1818 = vmul.f32 %v1812, %v235
  %v1819 = vmul.f32 %v1815, %v235
  %v1820 = vsub.f32 %v1800, %v1816
  %v1821 = vsub.f32 %v1801, %v1817
  %v1822 = vsub.f32 %v1802, %v1818
  %v1823 = vsub.f32 %v1803, %v1819
  %v1824 = vmul.f32 %v1820, %v1820
  %v1825 = vmul.f32 %v1821, %v1821
  %v1826 = vmul.f32 %v1822, %v1822
  %v1827 = vmul.f32 %v1823, %v1823
  %v1828 = vsel %vm222, %v1824, 0.0
  %1829 = vadd.xlane.f32.xlu0 %v1828
  %v1830 = vpop.xlane.xlu0 %1829
  %v1831 = vsel %vm222, %v1825, 0.0
  %1832 = vadd.xlane.f32.xlu0 %v1831
  %v1833 = vpop.xlane.xlu0 %1832
  %v1834 = vsel %vm222, %v1826, 0.0
  %1835 = vadd.xlane.f32.xlu0 %v1834
  %v1836 = vpop.xlane.xlu0 %1835
  %v1837 = vsel %vm222, %v1827, 0.0
  %1838 = vadd.xlane.f32.xlu0 %v1837
  %v1839 = vpop.xlane.xlu0 %1838
  %v1840 = vmul.f32 %v1830, %v235
  %v1841 = vmul.f32 %v1833, %v235
  %v1842 = vmul.f32 %v1836, %v235
  %v1843 = vmul.f32 %v1839, %v235
  %v1844 = vadd.f32 %v1840, 1e-05
  %v1845 = vadd.f32 %v1841, 1e-05
  %v1846 = vadd.f32 %v1842, 1e-05
  %v1847 = vadd.f32 %v1843, 1e-05
  %v1848 = vrsqrt.pop %v1844
  %v1849 = vrsqrt.pop %v1845
  %v1850 = vrsqrt.pop %v1846
  %v1851 = vrsqrt.pop %v1847
  %v1852 = vmul.f32 %v1820, %v1848
  %v1853 = vmul.f32 %v1821, %v1849
  %v1854 = vmul.f32 %v1822, %v1850
  %v1855 = vmul.f32 %v1823, %v1851
  %v1856 = vlaneseq
  %v1857 = vshrl.u32 %v1856, 7
  %v1858 = vsub.s32 3, %v1857
  %v1859 = vrot.slane %v1246, %v1858
  %v1860 = vmul.f32 %v1852, %v1859
  %v1861 = vmul.f32 %v1853, %v1859
  %v1862 = vmul.f32 %v1854, %v1859
  %v1863 = vmul.f32 %v1855, %v1859
  %v1864 = vlaneseq
  %v1865 = vshrl.u32 %v1864, 7
  %v1866 = vsub.s32 4, %v1865
  %v1867 = vrot.slane %v1246, %v1866
  %v1868 = vadd.f32 %v1860, %v1867
  %v1869 = vadd.f32 %v1861, %v1867
  %v1870 = vadd.f32 %v1862, %v1867
  %v1871 = vadd.f32 %v1863, %v1867
  %v1872 = vpack.c.bf16 %v1869, %v1868
  %v1873 = vpack.c.bf16 %v1871, %v1870
  %s1874 = scalar_lea.vmem %s10, 16
  %v1875 = vld [vmem:[%s1874] sm:$0xf]
  %v1876 = vld [vmem:[%s1874 + $0x4] sm:$0xf]
  %v1877 = vld [vmem:[%s1874 + $0x8] sm:$0xf]
  %v1878 = vld [vmem:[%s1874 + $0xc] sm:$0xf]
  %s1879 = scalar_lea.vmem %s11, 1
  %v1880 = vld [vmem:[%s1879] sm:$0x1]
  %v1882 = vlaneseq
  %v1883 = vshrl.u32 %v1882, 7
  %v1884 = vsub.s32 0, %v1883
  %v1885 = vrot.slane %v1880, %v1884
  %v1891 = vunpack.c.l.b16 %v1875
  %v1892 = vunpack.c.l.b16 %v1876
  %v1893 = vunpack.c.l.b16 %v1877
  %v1894 = vunpack.c.l.b16 %v1878
  %v1895 = vpack.c.b16 %v1892, %v1891
  %v1896 = vpack.c.b16 %v1894, %v1893
  %v1900 = vsel %vm222, %v1872, 0
  %v1903 = vsel %vm222, %v1873, 0
  %1905 = vmatprep.subr.bf16.mxu0 0
  %1906 = vmatpush1.bf16.msra.mxu0 %v1895
  %1907 = vmatprep.subr.bf16.mxu0 0
  %1908 = vmatpush1.bf16.msra.mxu0 %v1896
  %1909 = vmatprep.subr.bf16.mxu0 0
  %1910 = vmatpush1.bf16.msra.mxu0 0
  %1911 = vmatprep.subr.bf16.mxu0 0
  %1912 = vmatpush1.bf16.msra.mxu0 0
  %1913 = vmatprep.subr.bf16.mxu0 0
  %1914 = vmatpush1.bf16.msra.mxu0 0
  %1915 = vmatprep.subr.bf16.mxu0 0
  %1916 = vmatpush1.bf16.msra.mxu0 0
  %1917 = vmatprep.subr.bf16.mxu0 0
  %1918 = vmatpush1.bf16.msra.mxu0 0
  %1919 = vmatprep.subr.bf16.mxu0 0
  %1920 = vmatpush1.bf16.msra.mxu0 0
  %1921 = vmatprep.subr.bf16.mxu0 0
  %1922 = vmatpush1.bf16.msra.mxu0 0
  %1923 = vmatprep.subr.bf16.mxu0 0
  %1924 = vmatpush1.bf16.msra.mxu0 0
  %1925 = vmatprep.subr.bf16.mxu0 0
  %1926 = vmatpush1.bf16.msra.mxu0 0
  %1927 = vmatprep.subr.bf16.mxu0 0
  %1928 = vmatpush1.bf16.msra.mxu0 0
  %1929 = vmatprep.subr.bf16.mxu0 0
  %1930 = vmatpush1.bf16.msra.mxu0 0
  %1931 = vmatprep.subr.bf16.mxu0 0
  %1932 = vmatpush1.bf16.msra.mxu0 0
  %1933 = vmatprep.subr.bf16.mxu0 0
  %1934 = vmatpush1.bf16.msra.mxu0 0
  %1935 = vmatprep.subr.bf16.mxu0 0
  %1936 = vmatpush1.bf16.msra.mxu0 0
  %1937 = vmatprep.mubr.bf16.mxu0 0
  %1938 = vmatmul.mubr.bf16.gmra.mrb[0].mxu0 %v1900
  %v1939 = vpop.f32.mrb[0].mxu0
  %v1940 = vadd.f32 %v1885, %v1939
  %v1941 = vpop.f32.mrb[0].mxu0
  %v1942 = vpop.f32.mrb[0].mxu0
  %v1943 = vadd.f32 %v1885, %v1942
  %v1944 = vpop.f32.mrb[0].mxu0
  %1945 = vmatprep.mubr.bf16.mxu0 0
  %1946 = vmatmul.mubr.bf16.gmra.mrb[0].mxu0 %v1903
  %v1947 = vpop.f32.mrb[0].mxu0
  %v1948 = vadd.f32 %v1885, %v1947
  %v1949 = vpop.f32.mrb[0].mxu0
  %v1950 = vpop.f32.mrb[0].mxu0
  %v1951 = vadd.f32 %v1885, %v1950
  %v1952 = vpop.f32.mrb[0].mxu0
  %1953 = vdwg.mxu0
  %v1954 = vmul.f32 %v1940, 0.5
  %v1955 = vmul.f32 %v1943, 0.5
  %v1956 = vmul.f32 %v1948, 0.5
  %v1957 = vmul.f32 %v1951, 0.5
  %v1958 = vmul.f32 %v1940, 0.70710677
  %v1959 = vmul.f32 %v1943, 0.70710677
  %v1960 = vmul.f32 %v1948, 0.70710677
  %v1961 = vmul.f32 %v1951, 0.70710677
  %v1962 = vand.u32 2147483647, %v1958
  %v1963 = vand.u32 2147483647, %v1959
  %v1964 = vand.u32 2147483647, %v1960
  %v1965 = vand.u32 2147483647, %v1961
  %v1966 = vmul.f32 %v1962, 0.3275911
  %v1967 = vmul.f32 %v1963, 0.3275911
  %v1968 = vmul.f32 %v1964, 0.3275911
  %v1969 = vmul.f32 %v1965, 0.3275911
  %v1970 = vadd.f32 %v1966, 1.0
  %v1971 = vadd.f32 %v1967, 1.0
  %v1972 = vadd.f32 %v1968, 1.0
  %v1973 = vadd.f32 %v1969, 1.0
  %v1974 = vrcp.pop %v1970
  %v1975 = vrcp.pop %v1971
  %v1976 = vrcp.pop %v1972
  %v1977 = vrcp.pop %v1973
  %v1978 = vmul.f32 %v1974, 1.0614054
  %v1979 = vmul.f32 %v1975, 1.0614054
  %v1980 = vmul.f32 %v1976, 1.0614054
  %v1981 = vmul.f32 %v1977, 1.0614054
  %v1982 = vadd.f32 %v1978, -1.4531521
  %v1983 = vadd.f32 %v1979, -1.4531521
  %v1984 = vadd.f32 %v1980, -1.4531521
  %v1985 = vadd.f32 %v1981, -1.4531521
  %v1986 = vmul.f32 %v1982, %v1974
  %v1987 = vmul.f32 %v1983, %v1975
  %v1988 = vmul.f32 %v1984, %v1976
  %v1989 = vmul.f32 %v1985, %v1977
  %v1990 = vadd.f32 %v1986, 1.4214138
  %v1991 = vadd.f32 %v1987, 1.4214138
  %v1992 = vadd.f32 %v1988, 1.4214138
  %v1993 = vadd.f32 %v1989, 1.4214138
  %v1994 = vmul.f32 %v1990, %v1974
  %v1995 = vmul.f32 %v1991, %v1975
  %v1996 = vmul.f32 %v1992, %v1976
  %v1997 = vmul.f32 %v1993, %v1977
  %v1998 = vadd.f32 %v1994, -0.28449672
  %v1999 = vadd.f32 %v1995, -0.28449672
  %v2000 = vadd.f32 %v1996, -0.28449672
  %v2001 = vadd.f32 %v1997, -0.28449672
  %v2002 = vmul.f32 %v1998, %v1974
  %v2003 = vmul.f32 %v1999, %v1975
  %v2004 = vmul.f32 %v2000, %v1976
  %v2005 = vmul.f32 %v2001, %v1977
  %v2006 = vadd.f32 %v2002, 0.2548296
  %v2007 = vadd.f32 %v2003, 0.2548296
  %v2008 = vadd.f32 %v2004, 0.2548296
  %v2009 = vadd.f32 %v2005, 0.2548296
  %v2010 = vmul.f32 %v2006, %v1974
  %v2011 = vmul.f32 %v2007, %v1975
  %v2012 = vmul.f32 %v2008, %v1976
  %v2013 = vmul.f32 %v2009, %v1977
  %v2014 = vsub.f32 0.0, %v1962
  %v2015 = vsub.f32 0.0, %v1963
  %v2016 = vsub.f32 0.0, %v1964
  %v2017 = vsub.f32 0.0, %v1965
  %v2018 = vmul.f32 %v2014, %v1962
  %v2019 = vmul.f32 %v2015, %v1963
  %v2020 = vmul.f32 %v2016, %v1964
  %v2021 = vmul.f32 %v2017, %v1965
  %v2022 = vmul.f32 %v2018, 1.442695
  %v2023 = vpow.pop %v2022
  %v2024 = vmul.f32 %v2019, 1.442695
  %v2025 = vpow.pop %v2024
  %v2026 = vmul.f32 %v2020, 1.442695
  %v2027 = vpow.pop %v2026
  %v2028 = vmul.f32 %v2021, 1.442695
  %v2029 = vpow.pop %v2028
  %v2030 = vmul.f32 %v2010, %v2023
  %v2031 = vmul.f32 %v2011, %v2025
  %v2032 = vmul.f32 %v2012, %v2027
  %v2033 = vmul.f32 %v2013, %v2029
  %v2034 = vsub.f32 1.0, %v2030
  %v2035 = vsub.f32 1.0, %v2031
  %v2036 = vsub.f32 1.0, %v2032
  %v2037 = vsub.f32 1.0, %v2033
  %vm2038 = vcmp.ge.f32.partialorder %v1958, 0.0
  %vm2039 = vcmp.ge.f32.partialorder %v1959, 0.0
  %vm2040 = vcmp.ge.f32.partialorder %v1960, 0.0
  %vm2041 = vcmp.ge.f32.partialorder %v1961, 0.0
  %v2042 = vsub.f32 0.0, %v2034
  %v2043 = vsub.f32 0.0, %v2035
  %v2044 = vsub.f32 0.0, %v2036
  %v2045 = vsub.f32 0.0, %v2037
  %v2046 = vsel %vm2038, %v2034, %v2042
  %v2047 = vsel %vm2039, %v2035, %v2043
  %v2048 = vsel %vm2040, %v2036, %v2044
  %v2049 = vsel %vm2041, %v2037, %v2045
  %v2050 = vadd.f32 %v2046, 1.0
  %v2051 = vadd.f32 %v2047, 1.0
  %v2052 = vadd.f32 %v2048, 1.0
  %v2053 = vadd.f32 %v2049, 1.0
  %v2054 = vmul.f32 %v1954, %v2050
  %v2055 = vmul.f32 %v1955, %v2051
  %v2056 = vmul.f32 %v1956, %v2052
  %v2057 = vmul.f32 %v1957, %v2053
  %v2058 = vpack.c.bf16 %v2055, %v2054
  %v2059 = vpack.c.bf16 %v2057, %v2056
  %s2060 = scalar_lea.vmem %s12, 64
  %v2061 = vld [vmem:[%s2060] sm:$0xf]
  %v2062 = vld [vmem:[%s2060 + $0x4] sm:$0xf]
  %v2063 = vld [vmem:[%s2060 + $0x8] sm:$0xf]
  %v2064 = vld [vmem:[%s2060 + $0xc] sm:$0xf]
  %v2065 = vld [vmem:[%s2060 + $0x10] sm:$0xf]
  %v2066 = vld [vmem:[%s2060 + $0x14] sm:$0xf]
  %v2067 = vld [vmem:[%s2060 + $0x18] sm:$0xf]
  %v2068 = vld [vmem:[%s2060 + $0x1c] sm:$0xf]
  %v2069 = vld [vmem:[%s2060 + $0x20] sm:$0xf]
  %v2070 = vld [vmem:[%s2060 + $0x24] sm:$0xf]
  %v2071 = vld [vmem:[%s2060 + $0x28] sm:$0xf]
  %v2072 = vld [vmem:[%s2060 + $0x2c] sm:$0xf]
  %v2073 = vld [vmem:[%s2060 + $0x30] sm:$0xf]
  %v2074 = vld [vmem:[%s2060 + $0x34] sm:$0xf]
  %v2075 = vld [vmem:[%s2060 + $0x38] sm:$0xf]
  %v2076 = vld [vmem:[%s2060 + $0x3c] sm:$0xf]
  %v2093 = vunpack.c.l.b16 %v2061
  %v2094 = vunpack.c.l.b16 %v2062
  %v2095 = vunpack.c.l.b16 %v2063
  %v2096 = vunpack.c.l.b16 %v2064
  %v2097 = vunpack.c.l.b16 %v2065
  %v2098 = vunpack.c.l.b16 %v2066
  %v2099 = vunpack.c.l.b16 %v2067
  %v2100 = vunpack.c.l.b16 %v2068
  %v2101 = vunpack.c.l.b16 %v2069
  %v2102 = vunpack.c.l.b16 %v2070
  %v2103 = vunpack.c.l.b16 %v2071
  %v2104 = vunpack.c.l.b16 %v2072
  %v2105 = vunpack.c.l.b16 %v2073
  %v2106 = vunpack.c.l.b16 %v2074
  %v2107 = vunpack.c.l.b16 %v2075
  %v2108 = vunpack.c.l.b16 %v2076
  %v2109 = vpack.c.b16 %v2094, %v2093
  %v2110 = vpack.c.b16 %v2096, %v2095
  %v2111 = vpack.c.b16 %v2098, %v2097
  %v2112 = vpack.c.b16 %v2100, %v2099
  %v2113 = vpack.c.b16 %v2102, %v2101
  %v2114 = vpack.c.b16 %v2104, %v2103
  %v2115 = vpack.c.b16 %v2106, %v2105
  %v2116 = vpack.c.b16 %v2108, %v2107
  %2125 = vmatprep.subr.bf16.mxu0 0
  %2126 = vmatpush1.bf16.msra.mxu0 %v2109
  %2127 = vmatprep.subr.bf16.mxu0 0
  %2128 = vmatpush1.bf16.msra.mxu0 %v2110
  %2129 = vmatprep.subr.bf16.mxu0 0
  %2130 = vmatpush1.bf16.msra.mxu0 %v2111
  %2131 = vmatprep.subr.bf16.mxu0 0
  %2132 = vmatpush1.bf16.msra.mxu0 %v2112
  %2133 = vmatprep.subr.bf16.mxu0 0
  %2134 = vmatpush1.bf16.msra.mxu0 %v2113
  %2135 = vmatprep.subr.bf16.mxu0 0
  %2136 = vmatpush1.bf16.msra.mxu0 %v2114
  %2137 = vmatprep.subr.bf16.mxu0 0
  %2138 = vmatpush1.bf16.msra.mxu0 %v2115
  %2139 = vmatprep.subr.bf16.mxu0 0
  %2140 = vmatpush1.bf16.msra.mxu0 %v2116
  %2141 = vmatprep.subr.bf16.mxu0 0
  %2142 = vmatpush1.bf16.msra.mxu0 0
  %2143 = vmatprep.subr.bf16.mxu0 0
  %2144 = vmatpush1.bf16.msra.mxu0 0
  %2145 = vmatprep.subr.bf16.mxu0 0
  %2146 = vmatpush1.bf16.msra.mxu0 0
  %2147 = vmatprep.subr.bf16.mxu0 0
  %2148 = vmatpush1.bf16.msra.mxu0 0
  %2149 = vmatprep.subr.bf16.mxu0 0
  %2150 = vmatpush1.bf16.msra.mxu0 0
  %2151 = vmatprep.subr.bf16.mxu0 0
  %2152 = vmatpush1.bf16.msra.mxu0 0
  %2153 = vmatprep.subr.bf16.mxu0 0
  %2154 = vmatpush1.bf16.msra.mxu0 0
  %2155 = vmatprep.subr.bf16.mxu0 0
  %2156 = vmatpush1.bf16.msra.mxu0 0
  %2157 = vmatprep.mubr.bf16.mxu0 0
  %2158 = vmatmul.mubr.bf16.gmra.mrb[0].mxu0 %v2058
  %v2159 = vpop.f32.mrb[0].mxu0
  %v2160 = vadd.f32 0.0, %v2159
  %v2161 = vpop.f32.mrb[0].mxu0
  %v2162 = vpop.f32.mrb[0].mxu0
  %v2163 = vadd.f32 0.0, %v2162
  %v2164 = vpop.f32.mrb[0].mxu0
  %2165 = vmatprep.mubr.bf16.mxu0 0
  %2166 = vmatmul.mubr.bf16.gmra.mrb[0].mxu0 %v2059
  %v2167 = vpop.f32.mrb[0].mxu0
  %v2168 = vadd.f32 0.0, %v2167
  %v2169 = vpop.f32.mrb[0].mxu0
  %v2170 = vpop.f32.mrb[0].mxu0
  %v2171 = vadd.f32 0.0, %v2170
  %v2172 = vpop.f32.mrb[0].mxu0
  %2173 = vdwg.mxu0
  %v2174 = vadd.f32 %v1800, %v2160
  %v2175 = vadd.f32 %v1801, %v2163
  %v2176 = vadd.f32 %v1802, %v2168
  %v2177 = vadd.f32 %v1803, %v2171
  %v2178 = vlaneseq
  %v2179 = vshrl.u32 %v2178, 7
  %v2180 = vsub.s32 5, %v2179
  %v2181 = vrot.slane %v1246, %v2180
  %v2182 = vadd.f32 %v2174, %v2181
  %v2183 = vadd.f32 %v2175, %v2181
  %v2184 = vadd.f32 %v2176, %v2181
  %v2185 = vadd.f32 %v2177, %v2181
  %v2186 = vsel %vm222, %v2182, 0.0
  %v2187 = vsel %vm222, %v2183, 0.0
  %v2188 = vadd.f32 %v2186, %v2187
  %v2189 = vrot.slane %v2188, 4
  %v2190 = vadd.f32 %v2188, %v2189
  %v2191 = vrot.slane %v2190, 2
  %v2192 = vadd.f32 %v2190, %v2191
  %v2193 = vrot.slane %v2192, 1
  %v2194 = vadd.f32 %v2192, %v2193
  %v2195 = vrcp.pop 16.0
  %v2196 = vmul.f32 %v2194, %v2195
  %v2197 = vsel %vm222, %v2184, 0.0
  %v2198 = vsel %vm222, %v2185, 0.0
  %v2199 = vadd.f32 %v2197, %v2198
  %v2200 = vrot.slane %v2199, 4
  %v2201 = vadd.f32 %v2199, %v2200
  %v2202 = vrot.slane %v2201, 2
  %v2203 = vadd.f32 %v2201, %v2202
  %v2204 = vrot.slane %v2203, 1
  %v2205 = vadd.f32 %v2203, %v2204
  %v2206 = vmul.f32 %v2205, %v2195
  %vm2207 = vcmask 1040384
  %v2208 = vsel %vm2207, %v2196, %v2206
  %v2209 = vpack.c.bf16 %v2208, %v2208
  %v2210 = vld [vmem:[%s14] sm:$0xf]
  %v2211 = vld [vmem:[%s14 + $0x4] sm:$0xf]
  %v2212 = vld [vmem:[%s14 + $0x8] sm:$0xf]
  %v2213 = vld [vmem:[%s14 + $0xc] sm:$0xf]
  %v2214 = vld [vmem:[%s15] sm:$0x1]
  %v2216 = vlaneseq
  %v2217 = vshrl.u32 %v2216, 7
  %v2218 = vsub.s32 0, %v2217
  %v2219 = vrot.slane %v2214, %v2218
  %v2225 = vunpack.c.l.b16 %v2210
  %v2226 = vunpack.c.l.b16 %v2211
  %v2227 = vunpack.c.l.b16 %v2212
  %v2228 = vunpack.c.l.b16 %v2213
  %v2229 = vpack.c.b16 %v2226, %v2225
  %v2230 = vpack.c.b16 %v2228, %v2227
  %v2234 = vsel %vm222, %v2209, 0
  %2236 = vmatprep.subr.bf16.mxu0 0
  %2237 = vmatpush1.bf16.msra.mxu0 %v2229
  %2238 = vmatprep.subr.bf16.mxu0 0
  %2239 = vmatpush1.bf16.msra.mxu0 %v2230
  %2240 = vmatprep.subr.bf16.mxu0 0
  %2241 = vmatpush1.bf16.msra.mxu0 0
  %2242 = vmatprep.subr.bf16.mxu0 0
  %2243 = vmatpush1.bf16.msra.mxu0 0
  %2244 = vmatprep.subr.bf16.mxu0 0
  %2245 = vmatpush1.bf16.msra.mxu0 0
  %2246 = vmatprep.subr.bf16.mxu0 0
  %2247 = vmatpush1.bf16.msra.mxu0 0
  %2248 = vmatprep.subr.bf16.mxu0 0
  %2249 = vmatpush1.bf16.msra.mxu0 0
  %2250 = vmatprep.subr.bf16.mxu0 0
  %2251 = vmatpush1.bf16.msra.mxu0 0
  %2252 = vmatprep.subr.bf16.mxu0 0
  %2253 = vmatpush1.bf16.msra.mxu0 0
  %2254 = vmatprep.subr.bf16.mxu0 0
  %2255 = vmatpush1.bf16.msra.mxu0 0
  %2256 = vmatprep.subr.bf16.mxu0 0
  %2257 = vmatpush1.bf16.msra.mxu0 0
  %2258 = vmatprep.subr.bf16.mxu0 0
  %2259 = vmatpush1.bf16.msra.mxu0 0
  %2260 = vmatprep.subr.bf16.mxu0 0
  %2261 = vmatpush1.bf16.msra.mxu0 0
  %2262 = vmatprep.subr.bf16.mxu0 0
  %2263 = vmatpush1.bf16.msra.mxu0 0
  %2264 = vmatprep.subr.bf16.mxu0 0
  %2265 = vmatpush1.bf16.msra.mxu0 0
  %2266 = vmatprep.subr.bf16.mxu0 0
  %2267 = vmatpush1.bf16.msra.mxu0 0
  %2268 = vmatprep.mubr.bf16.mxu0 0
  %2269 = vmatmul.mubr.bf16.gmra.mrb[0].mxu0 %v2234
  %v2270 = vpop.f32.mrb[0].mxu0
  %v2271 = vadd.f32 %v2219, %v2270
  %v2272 = vpop.f32.mrb[0].mxu0
  %v2273 = vpop.f32.mrb[0].mxu0
  %v2274 = vpop.f32.mrb[0].mxu0
  %2275 = vdwg.mxu0
  %v2276 = vmul.f32 %v2271, 0.5
  %v2277 = vmul.f32 %v2271, 0.70710677
  %v2278 = vand.u32 2147483647, %v2277
  %v2279 = vmul.f32 %v2278, 0.3275911
  %v2280 = vadd.f32 %v2279, 1.0
  %v2281 = vrcp.pop %v2280
  %v2282 = vmul.f32 %v2281, 1.0614054
  %v2283 = vadd.f32 %v2282, -1.4531521
  %v2284 = vmul.f32 %v2283, %v2281
  %v2285 = vadd.f32 %v2284, 1.4214138
  %v2286 = vmul.f32 %v2285, %v2281
  %v2287 = vadd.f32 %v2286, -0.28449672
  %v2288 = vmul.f32 %v2287, %v2281
  %v2289 = vadd.f32 %v2288, 0.2548296
  %v2290 = vmul.f32 %v2289, %v2281
  %v2291 = vsub.f32 0.0, %v2278
  %v2292 = vmul.f32 %v2291, %v2278
  %v2293 = vmul.f32 %v2292, 1.442695
  %v2294 = vpow.pop %v2293
  %v2295 = vmul.f32 %v2290, %v2294
  %v2296 = vsub.f32 1.0, %v2295
  %vm2297 = vcmp.ge.f32.partialorder %v2277, 0.0
  %v2298 = vsub.f32 0.0, %v2296
  %v2299 = vsel %vm2297, %v2296, %v2298
  %v2300 = vadd.f32 %v2299, 1.0
  %v2301 = vmul.f32 %v2276, %v2300
  %v2302 = vld [vmem:[%s16] sm:$0x1]
  %v2304 = vlaneseq
  %v2305 = vshrl.u32 %v2304, 7
  %v2306 = vsub.s32 0, %v2305
  %v2307 = vrot.slane %v2302, %v2306
  %v2309 = vmul.f32 %v2301, %v2307
  %vm2310 = vcmask 123904
  %v2311 = vsel %vm2310, %v2309, 0.0
  %2312 = vadd.xlane.f32.xlu0 %v2311
  %v2313 = vpop.xlane.xlu0 %2312
  %v2314 = vld [vmem:[#allocation2] sm:$0x1]
  %v2316 = vlaneseq
  %v2317 = vshrl.u32 %v2316, 7
  %v2318 = vsub.s32 0, %v2317
  %v2319 = vrot.slane %v2314, %v2318
  %v2321 = vadd.f32 %v2313, %v2319
  %vm2322 = vcmask 1024
  %2323 = vst.msk [vmem:[%s18] sm:$0x3] %vm2322, %v2321
  // Predicated region
  $region74: #{rr_transformer_forward.1} parent=0 // pred_check
    _
  $region75: #{rr_transformer_forward.1} parent=0 // pred_check_branch
    %2325 = sbr.rel (0) target = $region77
  $region76: #{rr_transformer_forward.1} parent=0 // pred_region
    _
  $region77: #{rr_transformer_forward.1} parent=0 // pred_fallthru
    _
  // Predicated region
  $region78: #{rr_transformer_forward.1} parent=0 // pred_check
    _
  $region79: #{rr_transformer_forward.1} parent=0 // pred_check_branch
    %2327 = sbr.rel (0) target = $region81
  $region80: #{rr_transformer_forward.1} parent=0 // pred_region
    _
  $region81: #{rr_transformer_forward.1} parent=0 // pred_fallthru
    _

</llo_original>
